<compile_context>
chip_gen: v7x
topology: tpu7x:2x2x1
jax: 0.10.0
libtpu: 0.0.40
codegen_flags: <defaults>
</compile_context>

<pallas_src>
import functools

import jax
import jax.numpy as jnp
from jax.experimental import pallas as pl
from jax.experimental.pallas import tpu as pltpu

LANE = 128


def _round_up(x, m):
    return (x + m - 1) // m * m


# ----------------------------------------------------------------------------
# Fused kernel
# ----------------------------------------------------------------------------
def _fused_gat_kernel(feat_ref, adj_ref,
                      w_in_ref, b_in_ref,
                      w_g1_ref, a1_ref, b_g1_ref,
                      w_g2_ref, a2_ref, b_g2_ref,
                      w_out_ref, b_out_ref,
                      o_ref, *, heads, f1, hid):
    # ---- linear_relu_input: Linear + LeakyReLU(0.01) ------------------------
    x = jnp.dot(feat_ref[...], w_in_ref[...], preferred_element_type=jnp.float32)
    x = x + b_in_ref[...]
    x = jnp.where(x > 0, x, 0.01 * x)

    adj = adj_ref[...]            # [Np, Np] edge multiplicities, diag == 1
    mask = adj > 0.0

    def gat_layer(x, w_ref, a_ref, b_ref, nheads, f):
        # node transform (MXU)
        h = jnp.dot(x, w_ref[...], preferred_element_type=jnp.float32)   # [Np, nheads*f]
        # attention logits via ONE MXU matmul: columns [0:nheads) of a_ref hold
        # a_src (block-diagonal), columns [nheads:2*nheads) hold a_dst.
        e = jnp.dot(h, a_ref[...], preferred_element_type=jnp.float32)   # [Np, 128]
        e_t = e.T                                                        # single XLU transpose
        outs = []
        for hd in range(nheads):
            # scores[i, j] = a_dst . h_i + a_src . h_j   (edge j -> i)
            scores = e[:, nheads + hd:nheads + hd + 1] + e_t[hd:hd + 1, :]
            scores = jnp.where(scores > 0, scores, 0.2 * scores)         # LeakyReLU(0.2)
            scores = jnp.where(mask, scores, jnp.float32(-1e30))
            m = jnp.max(scores, axis=-1, keepdims=True)
            # multiply by the multiplicity matrix: duplicate edges contribute
            # multiple softmax terms, exactly like PyG's per-edge softmax.
            p = jnp.exp(scores - m) * adj
            denom = jnp.sum(p, axis=-1, keepdims=True)
            alpha = p * pl.reciprocal(denom, approx=True)                # EUP rcp
            outs.append(jnp.dot(alpha, h[:, hd * f:(hd + 1) * f],
                                preferred_element_type=jnp.float32))
        out = outs[0] if nheads == 1 else jnp.concatenate(outs, axis=-1)
        return out + b_ref[...]

    # gat1: 4 heads, concat
    x = gat_layer(x, w_g1_ref, a1_ref, b_g1_ref, heads, f1)
    # TODO(synk): F.dropout implemented as identity (eval mode); stochastic
    # training-mode dropout omitted.
    # gat2: 1 head
    x = gat_layer(x, w_g2_ref, a2_ref, b_g2_ref, 1, hid)
    # linear_output2, written once as a lane-dense [Np, 128] slab
    y = jnp.dot(x, w_out_ref[...], preferred_element_type=jnp.float32) + b_out_ref[...]
    o_ref[...] = y.astype(o_ref.dtype)


# ----------------------------------------------------------------------------
# Wrapper
# ----------------------------------------------------------------------------
def _vmem():
    return pl.BlockSpec(memory_space=pltpu.MemorySpace.VMEM)


def _build_att_matrix(a_src, a_dst, pad_to=LANE):
    """Block-diagonal [heads*f, pad_to] matrix so that h @ A yields all per-head
    src logits in columns [0:heads) and dst logits in columns [heads:2*heads)."""
    heads, f = a_src.shape
    A = jnp.zeros((heads * f, pad_to), jnp.float32)
    for hd in range(heads):
        A = A.at[hd * f:(hd + 1) * f, hd].set(a_src[hd])
        A = A.at[hd * f:(hd + 1) * f, heads + hd].set(a_dst[hd])
    return A


def gat_forward(params, feature, edge_index, edge_type, heads=4):
    del edge_type  # accepted but unused by the reference forward pass
    n, emb = feature.shape
    hid = params["w_in"].shape[1]
    f1 = hid // heads
    out_dim = params["w_out"].shape[1]

    np_ = _round_up(n, LANE)
    embp = _round_up(emb, LANE)
    outp = _round_up(out_dim, LANE)

    # --- glue (plain JAX): dense adjacency with edge multiplicities ----------
    src, dst = edge_index[0], edge_index[1]
    adj = jnp.zeros((np_, np_), jnp.float32).at[dst, src].add(1.0)
    diag = jnp.arange(np_)
    # PyG GATConv: remove self-loops then add exactly one per node.
    # Padded rows also get a self-loop so their softmax stays defined; padded
    # columns remain 0 and never leak into real rows.
    adj = adj.at[diag, diag].set(1.0)

    feat = jnp.zeros((np_, embp), jnp.float32).at[:n, :emb].set(
        feature.astype(jnp.float32))

    w_in = jnp.zeros((embp, hid), jnp.float32).at[:emb, :].set(params["w_in"])
    w_out = jnp.zeros((hid, outp), jnp.float32).at[:, :out_dim].set(params["w_out"])
    b_out = jnp.zeros((1, outp), jnp.float32).at[0, :out_dim].set(params["b_out"])

    a1 = _build_att_matrix(params["as_g1"], params["ad_g1"])
    a2 = _build_att_matrix(params["as_g2"], params["ad_g2"])

    fused = pl.pallas_call(
        functools.partial(_fused_gat_kernel, heads=heads, f1=f1, hid=hid),
        out_shape=jax.ShapeDtypeStruct((np_, outp), jnp.float32),
        in_specs=[_vmem()] * 12,
        out_specs=_vmem(),
    )
    y = fused(feat, adj,
              w_in, params["b_in"].reshape(1, hid),
              params["w_g1"], a1, params["b_g1"].reshape(1, hid),
              params["w_g2"], a2, params["b_g2"].reshape(1, hid),
              w_out, b_out)
    return y[:n, :out_dim]


# ----------------------------------------------------------------------------
# Params
# ----------------------------------------------------------------------------
def init_params(key, emb_dim=16, hid=128, out_dim=3, heads=4):
    ks = jax.random.split(key, 10)

    def glorot(k, shape):
        fan_in, fan_out = shape[-2], shape[-1]
        s = jnp.sqrt(6.0 / (fan_in + fan_out))
        return jax.random.uniform(k, shape, jnp.float32, -s, s)

    f1 = hid // heads  # per-head out channels of gat1
    return {
        # linear_relu_input: Linear(emb_dim, hid) + LeakyReLU(0.01)
        "w_in": glorot(ks[0], (emb_dim, hid)),
        "b_in": jnp.zeros((hid,), jnp.float32),
        # gat1: GATConv(hid, hid/4, heads=4) -> concat => hid
        "w_g1": glorot(ks[1], (hid, heads * f1)),
        "as_g1": glorot(ks[2], (heads, f1)),
        "ad_g1": glorot(ks[3], (heads, f1)),
        "b_g1": jnp.zeros((heads * f1,), jnp.float32),
        # gat2: GATConv(hid, hid, heads=1)
        "w_g2": glorot(ks[4], (hid, hid)),
        "as_g2": glorot(ks[5], (1, hid)),
        "ad_g2": glorot(ks[6], (1, hid)),
        "b_g2": jnp.zeros((hid,), jnp.float32),
        # linear_output2: Linear(hid, out_dim)
        "w_out": glorot(ks[7], (hid, out_dim)),
        "b_out": jnp.zeros((out_dim,), jnp.float32),
    }


# ----------------------------------------------------------------------------
# Main
# ----------------------------------------------------------------------------
if __name__ == "__main__":
    key = jax.random.PRNGKey(0)
    k_feat, k_src, k_dst, k_type, k_param = jax.random.split(key, 5)

    N, E = 64, 128
    EMB, HID, OUT, HEADS = 16, 128, 3, 4

    feature = jax.random.normal(k_feat, (N, EMB), jnp.float32)
    src = jax.random.randint(k_src, (E,), 0, N)
    dst = jax.random.randint(k_dst, (E,), 0, N)
    edge_index = jnp.stack([src, dst], axis=0)          # [2, E]
    edge_type = jax.random.randint(k_type, (E,), 0, 2)  # [E] (unused)

    params = init_params(k_param, EMB, HID, OUT, HEADS)

    out = gat_forward(params, feature, edge_index, edge_type, heads=HEADS)
    out = jax.block_until_ready(out)
    assert out.shape == (N, OUT) and out.dtype == jnp.float32
    assert bool(jnp.all(jnp.isfinite(out)))
    print("KERNEL_OK")
</pallas_src>

<mosaic_0001>
module attributes {stable_mosaic.version = 11 : i64} {
  func.func @_fused_gat_kernel(%arg0: memref<128x128xf32, #tpu.memory_space<vmem>>, %arg1: memref<128x128xf32, #tpu.memory_space<vmem>>, %arg2: memref<128x128xf32, #tpu.memory_space<vmem>>, %arg3: memref<1x128xf32, #tpu.memory_space<vmem>>, %arg4: memref<128x128xf32, #tpu.memory_space<vmem>>, %arg5: memref<128x128xf32, #tpu.memory_space<vmem>>, %arg6: memref<1x128xf32, #tpu.memory_space<vmem>>, %arg7: memref<128x128xf32, #tpu.memory_space<vmem>>, %arg8: memref<128x128xf32, #tpu.memory_space<vmem>>, %arg9: memref<1x128xf32, #tpu.memory_space<vmem>>, %arg10: memref<128x128xf32, #tpu.memory_space<vmem>>, %arg11: memref<1x128xf32, #tpu.memory_space<vmem>>, %arg12: memref<128x128xf32, #tpu.memory_space<vmem>>) attributes {dimension_semantics = [], scalar_prefetch = 0 : i64, scratch_operands = 0 : i64, tpu.core_type = #tpu.core_type<tc>} {
    %c0 = arith.constant 0 : index
    %c0_0 = arith.constant 0 : index
    %0 = vector.load %arg0[%c0, %c0_0] : memref<128x128xf32, #tpu.memory_space<vmem>>, vector<128x128xf32>
    %c0_1 = arith.constant 0 : index
    %c0_2 = arith.constant 0 : index
    %1 = vector.load %arg2[%c0_1, %c0_2] : memref<128x128xf32, #tpu.memory_space<vmem>>, vector<128x128xf32>
    %cst = arith.constant dense<0.000000e+00> : vector<128x128xf32>
    %2 = tpu.matmul %0, %1, %cst {dimension_numbers = #tpu.dot_dimension_numbers<[1], [0], [0], [1], [0, 0, 1, 1], [], []>} : vector<128x128xf32>, vector<128x128xf32>, vector<128x128xf32> -> vector<128x128xf32>
    %c0_3 = arith.constant 0 : index
    %c0_4 = arith.constant 0 : index
    %3 = vector.load %arg3[%c0_3, %c0_4] : memref<1x128xf32, #tpu.memory_space<vmem>>, vector<1x128xf32>
    %4 = vector.broadcast %3 : vector<1x128xf32> to vector<128x128xf32>
    %5 = arith.addf %2, %4 : vector<128x128xf32>
    %cst_5 = arith.constant 0.000000e+00 : f32
    %6 = vector.broadcast %cst_5 : f32 to vector<128x128xf32>
    %7 = arith.cmpf ogt, %5, %6 : vector<128x128xf32>
    %cst_6 = arith.constant 0.00999999977 : f32
    %8 = vector.broadcast %cst_6 : f32 to vector<128x128xf32>
    %9 = arith.mulf %8, %5 : vector<128x128xf32>
    %10 = arith.select %7, %5, %9 : vector<128x128xi1>, vector<128x128xf32>
    %c0_7 = arith.constant 0 : index
    %c0_8 = arith.constant 0 : index
    %11 = vector.load %arg1[%c0_7, %c0_8] : memref<128x128xf32, #tpu.memory_space<vmem>>, vector<128x128xf32>
    %cst_9 = arith.constant 0.000000e+00 : f32
    %12 = vector.broadcast %cst_9 : f32 to vector<128x128xf32>
    %13 = arith.cmpf ogt, %11, %12 : vector<128x128xf32>
    %c0_10 = arith.constant 0 : index
    %c0_11 = arith.constant 0 : index
    %14 = vector.load %arg4[%c0_10, %c0_11] : memref<128x128xf32, #tpu.memory_space<vmem>>, vector<128x128xf32>
    %cst_12 = arith.constant dense<0.000000e+00> : vector<128x128xf32>
    %15 = tpu.matmul %10, %14, %cst_12 {dimension_numbers = #tpu.dot_dimension_numbers<[1], [0], [0], [1], [0, 0, 1, 1], [], []>} : vector<128x128xf32>, vector<128x128xf32>, vector<128x128xf32> -> vector<128x128xf32>
    %c0_13 = arith.constant 0 : index
    %c0_14 = arith.constant 0 : index
    %16 = vector.load %arg5[%c0_13, %c0_14] : memref<128x128xf32, #tpu.memory_space<vmem>>, vector<128x128xf32>
    %cst_15 = arith.constant dense<0.000000e+00> : vector<128x128xf32>
    %17 = tpu.matmul %15, %16, %cst_15 {dimension_numbers = #tpu.dot_dimension_numbers<[1], [0], [0], [1], [0, 0, 1, 1], [], []>} : vector<128x128xf32>, vector<128x128xf32>, vector<128x128xf32> -> vector<128x128xf32>
    %18 = tpu.transpose %17, [1, 0] : vector<128x128xf32> -> vector<128x128xf32>
    %19 = vector.extract_strided_slice %17 {offsets = [0, 4], sizes = [128, 1], strides = [1, 1]} : vector<128x128xf32> to vector<128x1xf32>
    %20 = vector.extract_strided_slice %18 {offsets = [0, 0], sizes = [1, 128], strides = [1, 1]} : vector<128x128xf32> to vector<1x128xf32>
    %21 = vector.broadcast %19 : vector<128x1xf32> to vector<128x128xf32>
    %22 = vector.broadcast %20 : vector<1x128xf32> to vector<128x128xf32>
    %23 = arith.addf %21, %22 : vector<128x128xf32>
    %cst_16 = arith.constant 0.000000e+00 : f32
    %24 = vector.broadcast %cst_16 : f32 to vector<128x128xf32>
    %25 = arith.cmpf ogt, %23, %24 : vector<128x128xf32>
    %cst_17 = arith.constant 2.000000e-01 : f32
    %26 = vector.broadcast %cst_17 : f32 to vector<128x128xf32>
    %27 = arith.mulf %26, %23 : vector<128x128xf32>
    %28 = arith.select %25, %23, %27 : vector<128x128xi1>, vector<128x128xf32>
    %cst_18 = arith.constant -1.000000e+30 : f32
    %29 = vector.broadcast %cst_18 : f32 to vector<128x128xf32>
    %30 = arith.select %13, %28, %29 : vector<128x128xi1>, vector<128x128xf32>
    %cst_19 = arith.constant dense<0xFF800000> : vector<128xf32>
    %31 = vector.multi_reduction <maximumf>, %30, %cst_19 [1] : vector<128x128xf32> to vector<128xf32>
    %32 = vector.shape_cast %31 : vector<128xf32> to vector<128x1xf32>
    %33 = vector.broadcast %32 : vector<128x1xf32> to vector<128x128xf32>
    %34 = arith.subf %30, %33 : vector<128x128xf32>
    %35 = math.exp %34 : vector<128x128xf32>
    %36 = arith.mulf %35, %11 : vector<128x128xf32>
    %cst_20 = arith.constant dense<0.000000e+00> : vector<128xf32>
    %37 = vector.multi_reduction <add>, %36, %cst_20 [1] : vector<128x128xf32> to vector<128xf32>
    %38 = vector.shape_cast %37 : vector<128xf32> to vector<128x1xf32>
    %39 = tpu.reciprocal %38 {approx = true} : vector<128x1xf32> -> vector<128x1xf32>
    %40 = vector.broadcast %39 : vector<128x1xf32> to vector<128x128xf32>
    %41 = arith.mulf %36, %40 : vector<128x128xf32>
    %42 = vector.extract_strided_slice %15 {offsets = [0, 0], sizes = [128, 32], strides = [1, 1]} : vector<128x128xf32> to vector<128x32xf32>
    %cst_21 = arith.constant dense<0.000000e+00> : vector<128x32xf32>
    %43 = tpu.matmul %41, %42, %cst_21 {dimension_numbers = #tpu.dot_dimension_numbers<[1], [0], [0], [1], [0, 0, 1, 1], [], []>} : vector<128x128xf32>, vector<128x32xf32>, vector<128x32xf32> -> vector<128x32xf32>
    %44 = vector.extract_strided_slice %17 {offsets = [0, 5], sizes = [128, 1], strides = [1, 1]} : vector<128x128xf32> to vector<128x1xf32>
    %45 = vector.extract_strided_slice %18 {offsets = [1, 0], sizes = [1, 128], strides = [1, 1]} : vector<128x128xf32> to vector<1x128xf32>
    %46 = vector.broadcast %44 : vector<128x1xf32> to vector<128x128xf32>
    %47 = vector.broadcast %45 : vector<1x128xf32> to vector<128x128xf32>
    %48 = arith.addf %46, %47 : vector<128x128xf32>
    %cst_22 = arith.constant 0.000000e+00 : f32
    %49 = vector.broadcast %cst_22 : f32 to vector<128x128xf32>
    %50 = arith.cmpf ogt, %48, %49 : vector<128x128xf32>
    %cst_23 = arith.constant 2.000000e-01 : f32
    %51 = vector.broadcast %cst_23 : f32 to vector<128x128xf32>
    %52 = arith.mulf %51, %48 : vector<128x128xf32>
    %53 = arith.select %50, %48, %52 : vector<128x128xi1>, vector<128x128xf32>
    %cst_24 = arith.constant -1.000000e+30 : f32
    %54 = vector.broadcast %cst_24 : f32 to vector<128x128xf32>
    %55 = arith.select %13, %53, %54 : vector<128x128xi1>, vector<128x128xf32>
    %cst_25 = arith.constant dense<0xFF800000> : vector<128xf32>
    %56 = vector.multi_reduction <maximumf>, %55, %cst_25 [1] : vector<128x128xf32> to vector<128xf32>
    %57 = vector.shape_cast %56 : vector<128xf32> to vector<128x1xf32>
    %58 = vector.broadcast %57 : vector<128x1xf32> to vector<128x128xf32>
    %59 = arith.subf %55, %58 : vector<128x128xf32>
    %60 = math.exp %59 : vector<128x128xf32>
    %61 = arith.mulf %60, %11 : vector<128x128xf32>
    %cst_26 = arith.constant dense<0.000000e+00> : vector<128xf32>
    %62 = vector.multi_reduction <add>, %61, %cst_26 [1] : vector<128x128xf32> to vector<128xf32>
    %63 = vector.shape_cast %62 : vector<128xf32> to vector<128x1xf32>
    %64 = tpu.reciprocal %63 {approx = true} : vector<128x1xf32> -> vector<128x1xf32>
    %65 = vector.broadcast %64 : vector<128x1xf32> to vector<128x128xf32>
    %66 = arith.mulf %61, %65 : vector<128x128xf32>
    %67 = vector.extract_strided_slice %15 {offsets = [0, 32], sizes = [128, 32], strides = [1, 1]} : vector<128x128xf32> to vector<128x32xf32>
    %cst_27 = arith.constant dense<0.000000e+00> : vector<128x32xf32>
    %68 = tpu.matmul %66, %67, %cst_27 {dimension_numbers = #tpu.dot_dimension_numbers<[1], [0], [0], [1], [0, 0, 1, 1], [], []>} : vector<128x128xf32>, vector<128x32xf32>, vector<128x32xf32> -> vector<128x32xf32>
    %69 = vector.extract_strided_slice %17 {offsets = [0, 6], sizes = [128, 1], strides = [1, 1]} : vector<128x128xf32> to vector<128x1xf32>
    %70 = vector.extract_strided_slice %18 {offsets = [2, 0], sizes = [1, 128], strides = [1, 1]} : vector<128x128xf32> to vector<1x128xf32>
    %71 = vector.broadcast %69 : vector<128x1xf32> to vector<128x128xf32>
    %72 = vector.broadcast %70 : vector<1x128xf32> to vector<128x128xf32>
    %73 = arith.addf %71, %72 : vector<128x128xf32>
    %cst_28 = arith.constant 0.000000e+00 : f32
    %74 = vector.broadcast %cst_28 : f32 to vector<128x128xf32>
    %75 = arith.cmpf ogt, %73, %74 : vector<128x128xf32>
    %cst_29 = arith.constant 2.000000e-01 : f32
    %76 = vector.broadcast %cst_29 : f32 to vector<128x128xf32>
    %77 = arith.mulf %76, %73 : vector<128x128xf32>
    %78 = arith.select %75, %73, %77 : vector<128x128xi1>, vector<128x128xf32>
    %cst_30 = arith.constant -1.000000e+30 : f32
    %79 = vector.broadcast %cst_30 : f32 to vector<128x128xf32>
    %80 = arith.select %13, %78, %79 : vector<128x128xi1>, vector<128x128xf32>
    %cst_31 = arith.constant dense<0xFF800000> : vector<128xf32>
    %81 = vector.multi_reduction <maximumf>, %80, %cst_31 [1] : vector<128x128xf32> to vector<128xf32>
    %82 = vector.shape_cast %81 : vector<128xf32> to vector<128x1xf32>
    %83 = vector.broadcast %82 : vector<128x1xf32> to vector<128x128xf32>
    %84 = arith.subf %80, %83 : vector<128x128xf32>
    %85 = math.exp %84 : vector<128x128xf32>
    %86 = arith.mulf %85, %11 : vector<128x128xf32>
    %cst_32 = arith.constant dense<0.000000e+00> : vector<128xf32>
    %87 = vector.multi_reduction <add>, %86, %cst_32 [1] : vector<128x128xf32> to vector<128xf32>
    %88 = vector.shape_cast %87 : vector<128xf32> to vector<128x1xf32>
    %89 = tpu.reciprocal %88 {approx = true} : vector<128x1xf32> -> vector<128x1xf32>
    %90 = vector.broadcast %89 : vector<128x1xf32> to vector<128x128xf32>
    %91 = arith.mulf %86, %90 : vector<128x128xf32>
    %92 = vector.extract_strided_slice %15 {offsets = [0, 64], sizes = [128, 32], strides = [1, 1]} : vector<128x128xf32> to vector<128x32xf32>
    %cst_33 = arith.constant dense<0.000000e+00> : vector<128x32xf32>
    %93 = tpu.matmul %91, %92, %cst_33 {dimension_numbers = #tpu.dot_dimension_numbers<[1], [0], [0], [1], [0, 0, 1, 1], [], []>} : vector<128x128xf32>, vector<128x32xf32>, vector<128x32xf32> -> vector<128x32xf32>
    %94 = vector.extract_strided_slice %17 {offsets = [0, 7], sizes = [128, 1], strides = [1, 1]} : vector<128x128xf32> to vector<128x1xf32>
    %95 = vector.extract_strided_slice %18 {offsets = [3, 0], sizes = [1, 128], strides = [1, 1]} : vector<128x128xf32> to vector<1x128xf32>
    %96 = vector.broadcast %94 : vector<128x1xf32> to vector<128x128xf32>
    %97 = vector.broadcast %95 : vector<1x128xf32> to vector<128x128xf32>
    %98 = arith.addf %96, %97 : vector<128x128xf32>
    %cst_34 = arith.constant 0.000000e+00 : f32
    %99 = vector.broadcast %cst_34 : f32 to vector<128x128xf32>
    %100 = arith.cmpf ogt, %98, %99 : vector<128x128xf32>
    %cst_35 = arith.constant 2.000000e-01 : f32
    %101 = vector.broadcast %cst_35 : f32 to vector<128x128xf32>
    %102 = arith.mulf %101, %98 : vector<128x128xf32>
    %103 = arith.select %100, %98, %102 : vector<128x128xi1>, vector<128x128xf32>
    %cst_36 = arith.constant -1.000000e+30 : f32
    %104 = vector.broadcast %cst_36 : f32 to vector<128x128xf32>
    %105 = arith.select %13, %103, %104 : vector<128x128xi1>, vector<128x128xf32>
    %cst_37 = arith.constant dense<0xFF800000> : vector<128xf32>
    %106 = vector.multi_reduction <maximumf>, %105, %cst_37 [1] : vector<128x128xf32> to vector<128xf32>
    %107 = vector.shape_cast %106 : vector<128xf32> to vector<128x1xf32>
    %108 = vector.broadcast %107 : vector<128x1xf32> to vector<128x128xf32>
    %109 = arith.subf %105, %108 : vector<128x128xf32>
    %110 = math.exp %109 : vector<128x128xf32>
    %111 = arith.mulf %110, %11 : vector<128x128xf32>
    %cst_38 = arith.constant dense<0.000000e+00> : vector<128xf32>
    %112 = vector.multi_reduction <add>, %111, %cst_38 [1] : vector<128x128xf32> to vector<128xf32>
    %113 = vector.shape_cast %112 : vector<128xf32> to vector<128x1xf32>
    %114 = tpu.reciprocal %113 {approx = true} : vector<128x1xf32> -> vector<128x1xf32>
    %115 = vector.broadcast %114 : vector<128x1xf32> to vector<128x128xf32>
    %116 = arith.mulf %111, %115 : vector<128x128xf32>
    %117 = vector.extract_strided_slice %15 {offsets = [0, 96], sizes = [128, 32], strides = [1, 1]} : vector<128x128xf32> to vector<128x32xf32>
    %cst_39 = arith.constant dense<0.000000e+00> : vector<128x32xf32>
    %118 = tpu.matmul %116, %117, %cst_39 {dimension_numbers = #tpu.dot_dimension_numbers<[1], [0], [0], [1], [0, 0, 1, 1], [], []>} : vector<128x128xf32>, vector<128x32xf32>, vector<128x32xf32> -> vector<128x32xf32>
    %119 = tpu.concatenate %43, %68, %93, %118 in 1 : vector<128x32xf32>, vector<128x32xf32>, vector<128x32xf32>, vector<128x32xf32> -> vector<128x128xf32>
    %c0_40 = arith.constant 0 : index
    %c0_41 = arith.constant 0 : index
    %120 = vector.load %arg6[%c0_40, %c0_41] : memref<1x128xf32, #tpu.memory_space<vmem>>, vector<1x128xf32>
    %121 = vector.broadcast %120 : vector<1x128xf32> to vector<128x128xf32>
    %122 = arith.addf %119, %121 : vector<128x128xf32>
    %c0_42 = arith.constant 0 : index
    %c0_43 = arith.constant 0 : index
    %123 = vector.load %arg7[%c0_42, %c0_43] : memref<128x128xf32, #tpu.memory_space<vmem>>, vector<128x128xf32>
    %cst_44 = arith.constant dense<0.000000e+00> : vector<128x128xf32>
    %124 = tpu.matmul %122, %123, %cst_44 {dimension_numbers = #tpu.dot_dimension_numbers<[1], [0], [0], [1], [0, 0, 1, 1], [], []>} : vector<128x128xf32>, vector<128x128xf32>, vector<128x128xf32> -> vector<128x128xf32>
    %c0_45 = arith.constant 0 : index
    %c0_46 = arith.constant 0 : index
    %125 = vector.load %arg8[%c0_45, %c0_46] : memref<128x128xf32, #tpu.memory_space<vmem>>, vector<128x128xf32>
    %cst_47 = arith.constant dense<0.000000e+00> : vector<128x128xf32>
    %126 = tpu.matmul %124, %125, %cst_47 {dimension_numbers = #tpu.dot_dimension_numbers<[1], [0], [0], [1], [0, 0, 1, 1], [], []>} : vector<128x128xf32>, vector<128x128xf32>, vector<128x128xf32> -> vector<128x128xf32>
    %127 = tpu.transpose %126, [1, 0] : vector<128x128xf32> -> vector<128x128xf32>
    %128 = vector.extract_strided_slice %126 {offsets = [0, 1], sizes = [128, 1], strides = [1, 1]} : vector<128x128xf32> to vector<128x1xf32>
    %129 = vector.extract_strided_slice %127 {offsets = [0, 0], sizes = [1, 128], strides = [1, 1]} : vector<128x128xf32> to vector<1x128xf32>
    %130 = vector.broadcast %128 : vector<128x1xf32> to vector<128x128xf32>
    %131 = vector.broadcast %129 : vector<1x128xf32> to vector<128x128xf32>
    %132 = arith.addf %130, %131 : vector<128x128xf32>
    %cst_48 = arith.constant 0.000000e+00 : f32
    %133 = vector.broadcast %cst_48 : f32 to vector<128x128xf32>
    %134 = arith.cmpf ogt, %132, %133 : vector<128x128xf32>
    %cst_49 = arith.constant 2.000000e-01 : f32
    %135 = vector.broadcast %cst_49 : f32 to vector<128x128xf32>
    %136 = arith.mulf %135, %132 : vector<128x128xf32>
    %137 = arith.select %134, %132, %136 : vector<128x128xi1>, vector<128x128xf32>
    %cst_50 = arith.constant -1.000000e+30 : f32
    %138 = vector.broadcast %cst_50 : f32 to vector<128x128xf32>
    %139 = arith.select %13, %137, %138 : vector<128x128xi1>, vector<128x128xf32>
    %cst_51 = arith.constant dense<0xFF800000> : vector<128xf32>
    %140 = vector.multi_reduction <maximumf>, %139, %cst_51 [1] : vector<128x128xf32> to vector<128xf32>
    %141 = vector.shape_cast %140 : vector<128xf32> to vector<128x1xf32>
    %142 = vector.broadcast %141 : vector<128x1xf32> to vector<128x128xf32>
    %143 = arith.subf %139, %142 : vector<128x128xf32>
    %144 = math.exp %143 : vector<128x128xf32>
    %145 = arith.mulf %144, %11 : vector<128x128xf32>
    %cst_52 = arith.constant dense<0.000000e+00> : vector<128xf32>
    %146 = vector.multi_reduction <add>, %145, %cst_52 [1] : vector<128x128xf32> to vector<128xf32>
    %147 = vector.shape_cast %146 : vector<128xf32> to vector<128x1xf32>
    %148 = tpu.reciprocal %147 {approx = true} : vector<128x1xf32> -> vector<128x1xf32>
    %149 = vector.broadcast %148 : vector<128x1xf32> to vector<128x128xf32>
    %150 = arith.mulf %145, %149 : vector<128x128xf32>
    %cst_53 = arith.constant dense<0.000000e+00> : vector<128x128xf32>
    %151 = tpu.matmul %150, %124, %cst_53 {dimension_numbers = #tpu.dot_dimension_numbers<[1], [0], [0], [1], [0, 0, 1, 1], [], []>} : vector<128x128xf32>, vector<128x128xf32>, vector<128x128xf32> -> vector<128x128xf32>
    %c0_54 = arith.constant 0 : index
    %c0_55 = arith.constant 0 : index
    %152 = vector.load %arg9[%c0_54, %c0_55] : memref<1x128xf32, #tpu.memory_space<vmem>>, vector<1x128xf32>
    %153 = vector.broadcast %152 : vector<1x128xf32> to vector<128x128xf32>
    %154 = arith.addf %151, %153 : vector<128x128xf32>
    %c0_56 = arith.constant 0 : index
    %c0_57 = arith.constant 0 : index
    %155 = vector.load %arg10[%c0_56, %c0_57] : memref<128x128xf32, #tpu.memory_space<vmem>>, vector<128x128xf32>
    %cst_58 = arith.constant dense<0.000000e+00> : vector<128x128xf32>
    %156 = tpu.matmul %154, %155, %cst_58 {dimension_numbers = #tpu.dot_dimension_numbers<[1], [0], [0], [1], [0, 0, 1, 1], [], []>} : vector<128x128xf32>, vector<128x128xf32>, vector<128x128xf32> -> vector<128x128xf32>
    %c0_59 = arith.constant 0 : index
    %c0_60 = arith.constant 0 : index
    %157 = vector.load %arg11[%c0_59, %c0_60] : memref<1x128xf32, #tpu.memory_space<vmem>>, vector<1x128xf32>
    %158 = vector.broadcast %157 : vector<1x128xf32> to vector<128x128xf32>
    %159 = arith.addf %156, %158 : vector<128x128xf32>
    %c0_61 = arith.constant 0 : index
    %c0_62 = arith.constant 0 : index
    %160 = vector.load %arg12[%c0_61, %c0_62] : memref<128x128xf32, #tpu.memory_space<vmem>>, vector<128x128xf32>
    tpu.vector_store %arg12[%c0_61, %c0_62], %159 {strides = array<i32>} : memref<128x128xf32, #tpu.memory_space<vmem>>, vector<128x128xf32>,
    return
  }
}

</mosaic_0001>

<llo_original>
// kernel: tpu_custom_call.1
$region0: #{tpu_custom_call.1}
  #allocation0 [shape = 'u32[]', space=smem, size = 0x4, offset = 0x4, fixed_abs, tag = 'smem constant byte address 0x4 - core index']
  #allocation1 [shape = 'u32[144,128]{1,0:T(1,128)}', space=vmem, size = 0x12000, scoped, tag = 'internal scratch']
  %s0 = inlined_call_operand.hbm [shape: f32[128,128], index: 0, kind: input, shape index: {}]
  %s1 = inlined_call_operand.hbm [shape: f32[128,128], index: 1, kind: input, shape index: {}]
  %s2 = inlined_call_operand.hbm [shape: f32[128,128], index: 2, kind: input, shape index: {}]
  %s3 = inlined_call_operand.vmem [shape: f32[1,128], index: 3, kind: input, shape index: {}]
  %s4 = inlined_call_operand.hbm [shape: f32[128,128], index: 4, kind: input, shape index: {}]
  %s5 = inlined_call_operand.hbm [shape: f32[128,128], index: 5, kind: input, shape index: {}]
  %s6 = inlined_call_operand.vmem [shape: f32[1,128], index: 6, kind: input, shape index: {}]
  %s7 = inlined_call_operand.hbm [shape: f32[128,128], index: 7, kind: input, shape index: {}]
  %s8 = inlined_call_operand.hbm [shape: f32[128,128], index: 8, kind: input, shape index: {}]
  %s9 = inlined_call_operand.vmem [shape: f32[1,128], index: 9, kind: input, shape index: {}]
  %s10 = inlined_call_operand.hbm [shape: f32[128,128], index: 10, kind: input, shape index: {}]
  %s11 = inlined_call_operand.vmem [shape: f32[1,128], index: 11, kind: input, shape index: {}]
  %s12 = inlined_call_operand.hbm [shape: f32[128,128], index: 12, kind: output, shape index: {}]
  %s13 = sld [smem:[#allocation0]]
  $region90: #{tpu_custom_call.1} parent=0
    _
  %s15 = ssub.s32 1, %s13
  %s16 = scalar_select 0, %s15, %s13
  $region1: #{tpu_custom_call.1} parent=0
    #allocation2 [shape = 'u8[65536]{0}', space=vmem, size = 0x10000, scoped, tag = 'input window, operand 0, single buffered']
    #allocation3 [shape = 's32[1]{0}', space=sflag, size = 0x4, scoped, tag = 'scoped memory for tpu_custom_call.1']
    #allocation4 [shape = 's32[1]{0}', space=sflag, size = 0x4, scoped, tag = 'scoped memory for tpu_custom_call.1']
    #allocation5 [shape = 'u8[65536]{0}', space=vmem, size = 0x10000, scoped, tag = 'input window, operand 1, single buffered']
    #allocation6 [shape = 's32[1]{0}', space=sflag, size = 0x4, scoped, tag = 'scoped memory for tpu_custom_call.1']
    #allocation7 [shape = 'u8[65536]{0}', space=vmem, size = 0x10000, scoped, tag = 'input window, operand 2, single buffered']
    #allocation8 [shape = 'u8[65536]{0}', space=vmem, size = 0x10000, scoped, tag = 'input window, operand 4, single buffered']
    #allocation9 [shape = 's32[1]{0}', space=sflag, size = 0x4, scoped, tag = 'scoped memory for tpu_custom_call.1']
    #allocation10 [shape = 'u8[65536]{0}', space=vmem, size = 0x10000, scoped, tag = 'input window, operand 5, single buffered']
    #allocation11 [shape = 'u8[65536]{0}', space=vmem, size = 0x10000, scoped, tag = 'input window, operand 7, single buffered']
    #allocation12 [shape = 's32[1]{0}', space=sflag, size = 0x4, scoped, tag = 'scoped memory for tpu_custom_call.1']
    #allocation13 [shape = 'u8[65536]{0}', space=vmem, size = 0x10000, scoped, tag = 'input window, operand 8, single buffered']
    #allocation14 [shape = 'u8[65536]{0}', space=vmem, size = 0x10000, scoped, tag = 'input window, operand 10, single buffered']
    #allocation15 [shape = 's32[1]{0}', space=sflag, size = 0x4, scoped, tag = 'scoped memory for tpu_custom_call.1']
    #allocation16 [shape = 'u8[65536]{0}', space=vmem, size = 0x10000, scoped, tag = 'output window, operand 0, single buffered']
    %17 = vsyncpa [#allocation3], 0
    %18 = vsyncpa [#allocation6], 0
    %19 = vsyncpa [#allocation9], 0
    %20 = vsyncpa [#allocation12], 0
    %21 = vsyncpa [#allocation15], 0
    %22 = vsyncpa [#allocation4], 0
    // Predicated region
    $region2: #{tpu_custom_call.1} parent=1 // pred_check
      _
    $region3: #{tpu_custom_call.1} parent=1 // pred_check_branch
      %24 = sbr.rel (0) target = $region5
    $region4: #{tpu_custom_call.1} parent=1 // pred_region
      %s26 = ssub.s32 2048, 2048
      %27 = vsyncadd [#allocation3], %s26
      %s28 = sshll.u32 [#allocation2], 4
      %s29 = int_to_ptr.vmem [resolvable:$true] %s28
      %34 = dma.hbm_to_vmem [thread:$0]  %s0, 2048, %s29, [#allocation3], 128, 128, 8
    $region5: #{tpu_custom_call.1} parent=1 // pred_fallthru
      _
    // Predicated region
    $region6: #{tpu_custom_call.1} parent=1 // pred_check
      _
    $region7: #{tpu_custom_call.1} parent=1 // pred_check_branch
      %36 = sbr.rel (0) target = $region9
    $region8: #{tpu_custom_call.1} parent=1 // pred_region
      %s38 = ssub.s32 2048, 2048
      %39 = vsyncadd [#allocation6], %s38
      %s40 = sshll.u32 [#allocation5], 4
      %s41 = int_to_ptr.vmem [resolvable:$true] %s40
      %46 = dma.hbm_to_vmem [thread:$0]  %s1, 2048, %s41, [#allocation6], 128, 128, 8
    $region9: #{tpu_custom_call.1} parent=1 // pred_fallthru
      _
    // Predicated region
    $region10: #{tpu_custom_call.1} parent=1 // pred_check
      _
    $region11: #{tpu_custom_call.1} parent=1 // pred_check_branch
      %48 = sbr.rel (0) target = $region13
    $region12: #{tpu_custom_call.1} parent=1 // pred_region
      %s50 = ssub.s32 2048, 2048
      %51 = vsyncadd [#allocation6], %s50
      %s52 = sshll.u32 [#allocation7], 4
      %s53 = int_to_ptr.vmem [resolvable:$true] %s52
      %58 = dma.hbm_to_vmem [thread:$0]  %s2, 2048, %s53, [#allocation6], 128, 128, 8
    $region13: #{tpu_custom_call.1} parent=1 // pred_fallthru
      _
    // Predicated region
    $region14: #{tpu_custom_call.1} parent=1 // pred_check
      _
    $region15: #{tpu_custom_call.1} parent=1 // pred_check_branch
      %60 = sbr.rel (0) target = $region17
    $region16: #{tpu_custom_call.1} parent=1 // pred_region
      _
    $region17: #{tpu_custom_call.1} parent=1 // pred_fallthru
      _
    // Predicated region
    $region18: #{tpu_custom_call.1} parent=1 // pred_check
      _
    $region19: #{tpu_custom_call.1} parent=1 // pred_check_branch
      %62 = sbr.rel (0) target = $region21
    $region20: #{tpu_custom_call.1} parent=1 // pred_region
      %s64 = ssub.s32 2048, 2048
      %65 = vsyncadd [#allocation9], %s64
      %s66 = sshll.u32 [#allocation8], 4
      %s67 = int_to_ptr.vmem [resolvable:$true] %s66
      %72 = dma.hbm_to_vmem [thread:$0]  %s4, 2048, %s67, [#allocation9], 128, 128, 8
    $region21: #{tpu_custom_call.1} parent=1 // pred_fallthru
      _
    // Predicated region
    $region22: #{tpu_custom_call.1} parent=1 // pred_check
      _
    $region23: #{tpu_custom_call.1} parent=1 // pred_check_branch
      %74 = sbr.rel (0) target = $region25
    $region24: #{tpu_custom_call.1} parent=1 // pred_region
      %s76 = ssub.s32 2048, 2048
      %77 = vsyncadd [#allocation9], %s76
      %s78 = sshll.u32 [#allocation10], 4
      %s79 = int_to_ptr.vmem [resolvable:$true] %s78
      %84 = dma.hbm_to_vmem [thread:$0]  %s5, 2048, %s79, [#allocation9], 128, 128, 8
    $region25: #{tpu_custom_call.1} parent=1 // pred_fallthru
      _
    // Predicated region
    $region26: #{tpu_custom_call.1} parent=1 // pred_check
      _
    $region27: #{tpu_custom_call.1} parent=1 // pred_check_branch
      %86 = sbr.rel (0) target = $region29
    $region28: #{tpu_custom_call.1} parent=1 // pred_region
      _
    $region29: #{tpu_custom_call.1} parent=1 // pred_fallthru
      _
    // Predicated region
    $region30: #{tpu_custom_call.1} parent=1 // pred_check
      _
    $region31: #{tpu_custom_call.1} parent=1 // pred_check_branch
      %88 = sbr.rel (0) target = $region33
    $region32: #{tpu_custom_call.1} parent=1 // pred_region
      %s90 = ssub.s32 2048, 2048
      %91 = vsyncadd [#allocation12], %s90
      %s92 = sshll.u32 [#allocation11], 4
      %s93 = int_to_ptr.vmem [resolvable:$true] %s92
      %98 = dma.hbm_to_vmem [thread:$0]  %s7, 2048, %s93, [#allocation12], 128, 128, 8
    $region33: #{tpu_custom_call.1} parent=1 // pred_fallthru
      _
    // Predicated region
    $region34: #{tpu_custom_call.1} parent=1 // pred_check
      _
    $region35: #{tpu_custom_call.1} parent=1 // pred_check_branch
      %100 = sbr.rel (0) target = $region37
    $region36: #{tpu_custom_call.1} parent=1 // pred_region
      %s102 = ssub.s32 2048, 2048
      %103 = vsyncadd [#allocation12], %s102
      %s104 = sshll.u32 [#allocation13], 4
      %s105 = int_to_ptr.vmem [resolvable:$true] %s104
      %110 = dma.hbm_to_vmem [thread:$0]  %s8, 2048, %s105, [#allocation12], 128, 128, 8
    $region37: #{tpu_custom_call.1} parent=1 // pred_fallthru
      _
    // Predicated region
    $region38: #{tpu_custom_call.1} parent=1 // pred_check
      _
    $region39: #{tpu_custom_call.1} parent=1 // pred_check_branch
      %112 = sbr.rel (0) target = $region41
    $region40: #{tpu_custom_call.1} parent=1 // pred_region
      _
    $region41: #{tpu_custom_call.1} parent=1 // pred_fallthru
      _
    // Predicated region
    $region42: #{tpu_custom_call.1} parent=1 // pred_check
      _
    $region43: #{tpu_custom_call.1} parent=1 // pred_check_branch
      %114 = sbr.rel (0) target = $region45
    $region44: #{tpu_custom_call.1} parent=1 // pred_region
      %s116 = ssub.s32 2048, 2048
      %117 = vsyncadd [#allocation15], %s116
      %s118 = sshll.u32 [#allocation14], 4
      %s119 = int_to_ptr.vmem [resolvable:$true] %s118
      %124 = dma.hbm_to_vmem [thread:$0]  %s10, 2048, %s119, [#allocation15], 128, 128, 8
    $region45: #{tpu_custom_call.1} parent=1 // pred_fallthru
      _
    // Predicated region
    $region46: #{tpu_custom_call.1} parent=1 // pred_check
      _
    $region47: #{tpu_custom_call.1} parent=1 // pred_check_branch
      %126 = sbr.rel (0) target = $region49
    $region48: #{tpu_custom_call.1} parent=1 // pred_region
      _
    $region49: #{tpu_custom_call.1} parent=1 // pred_fallthru
      _
    // Predicated region
    $region50: #{tpu_custom_call.1} parent=1 // pred_check
      _
    $region51: #{tpu_custom_call.1} parent=1 // pred_check_branch
      %128 = sbr.rel (0) target = $region53
    $region52: #{tpu_custom_call.1} parent=1 // pred_region
      %129 = dma.done [#allocation3], 2048
    $region53: #{tpu_custom_call.1} parent=1 // pred_fallthru
      _
    // Predicated region
    $region54: #{tpu_custom_call.1} parent=1 // pred_check
      _
    $region55: #{tpu_custom_call.1} parent=1 // pred_check_branch
      %131 = sbr.rel (0) target = $region57
    $region56: #{tpu_custom_call.1} parent=1 // pred_region
      %132 = dma.done [#allocation6], 2048
    $region57: #{tpu_custom_call.1} parent=1 // pred_fallthru
      _
    // Predicated region
    $region58: #{tpu_custom_call.1} parent=1 // pred_check
      _
    $region59: #{tpu_custom_call.1} parent=1 // pred_check_branch
      %134 = sbr.rel (0) target = $region61
    $region60: #{tpu_custom_call.1} parent=1 // pred_region
      %135 = dma.done [#allocation6], 2048
    $region61: #{tpu_custom_call.1} parent=1 // pred_fallthru
      _
    // Predicated region
    $region62: #{tpu_custom_call.1} parent=1 // pred_check
      _
    $region63: #{tpu_custom_call.1} parent=1 // pred_check_branch
      %137 = sbr.rel (0) target = $region65
    $region64: #{tpu_custom_call.1} parent=1 // pred_region
      %138 = dma.done [#allocation9], 2048
    $region65: #{tpu_custom_call.1} parent=1 // pred_fallthru
      _
    // Predicated region
    $region66: #{tpu_custom_call.1} parent=1 // pred_check
      _
    $region67: #{tpu_custom_call.1} parent=1 // pred_check_branch
      %140 = sbr.rel (0) target = $region69
    $region68: #{tpu_custom_call.1} parent=1 // pred_region
      %141 = dma.done [#allocation9], 2048
    $region69: #{tpu_custom_call.1} parent=1 // pred_fallthru
      _
    // Predicated region
    $region70: #{tpu_custom_call.1} parent=1 // pred_check
      _
    $region71: #{tpu_custom_call.1} parent=1 // pred_check_branch
      %143 = sbr.rel (0) target = $region73
    $region72: #{tpu_custom_call.1} parent=1 // pred_region
      %144 = dma.done [#allocation12], 2048
    $region73: #{tpu_custom_call.1} parent=1 // pred_fallthru
      _
    // Predicated region
    $region74: #{tpu_custom_call.1} parent=1 // pred_check
      _
    $region75: #{tpu_custom_call.1} parent=1 // pred_check_branch
      %146 = sbr.rel (0) target = $region77
    $region76: #{tpu_custom_call.1} parent=1 // pred_region
      %147 = dma.done [#allocation12], 2048
    $region77: #{tpu_custom_call.1} parent=1 // pred_fallthru
      _
    // Predicated region
    $region78: #{tpu_custom_call.1} parent=1 // pred_check
      _
    $region79: #{tpu_custom_call.1} parent=1 // pred_check_branch
      %149 = sbr.rel (0) target = $region81
    $region80: #{tpu_custom_call.1} parent=1 // pred_region
      %150 = dma.done [#allocation15], 2048
    $region81: #{tpu_custom_call.1} parent=1 // pred_fallthru
      _
    %v151 = vld [vmem:[#allocation2] sm:$0xff]
    %v152 = vld [vmem:[#allocation2 + $0x8] sm:$0xff]
    %v153 = vld [vmem:[#allocation2 + $0x10] sm:$0xff]
    %v154 = vld [vmem:[#allocation2 + $0x18] sm:$0xff]
    %v155 = vld [vmem:[#allocation2 + $0x20] sm:$0xff]
    %v156 = vld [vmem:[#allocation2 + $0x28] sm:$0xff]
    %v157 = vld [vmem:[#allocation2 + $0x30] sm:$0xff]
    %v158 = vld [vmem:[#allocation2 + $0x38] sm:$0xff]
    %v159 = vld [vmem:[#allocation2 + $0x40] sm:$0xff]
    %v160 = vld [vmem:[#allocation2 + $0x48] sm:$0xff]
    %v161 = vld [vmem:[#allocation2 + $0x50] sm:$0xff]
    %v162 = vld [vmem:[#allocation2 + $0x58] sm:$0xff]
    %v163 = vld [vmem:[#allocation2 + $0x60] sm:$0xff]
    %v164 = vld [vmem:[#allocation2 + $0x68] sm:$0xff]
    %v165 = vld [vmem:[#allocation2 + $0x70] sm:$0xff]
    %v166 = vld [vmem:[#allocation2 + $0x78] sm:$0xff]
    %v167 = vld [vmem:[#allocation7] sm:$0xff]
    %v168 = vld [vmem:[#allocation7 + $0x8] sm:$0xff]
    %v169 = vld [vmem:[#allocation7 + $0x10] sm:$0xff]
    %v170 = vld [vmem:[#allocation7 + $0x18] sm:$0xff]
    %v171 = vld [vmem:[#allocation7 + $0x20] sm:$0xff]
    %v172 = vld [vmem:[#allocation7 + $0x28] sm:$0xff]
    %v173 = vld [vmem:[#allocation7 + $0x30] sm:$0xff]
    %v174 = vld [vmem:[#allocation7 + $0x38] sm:$0xff]
    %v175 = vld [vmem:[#allocation7 + $0x40] sm:$0xff]
    %v176 = vld [vmem:[#allocation7 + $0x48] sm:$0xff]
    %v177 = vld [vmem:[#allocation7 + $0x50] sm:$0xff]
    %v178 = vld [vmem:[#allocation7 + $0x58] sm:$0xff]
    %v179 = vld [vmem:[#allocation7 + $0x60] sm:$0xff]
    %v180 = vld [vmem:[#allocation7 + $0x68] sm:$0xff]
    %v181 = vld [vmem:[#allocation7 + $0x70] sm:$0xff]
    %v182 = vld [vmem:[#allocation7 + $0x78] sm:$0xff]
    %v183 = vld [vmem:[%s3] sm:$0x1]
    %v185 = vlaneseq
    %v186 = vshrl.u32 %v185, 7
    %v187 = vsub.s32 0, %v186
    %v188 = vrot.slane %v183, %v187
    %190 = vmatprep.subr.mxu0 0.0
    %191 = vmatpush1.msra.mxu0 %v167
    %192 = vmatprep.subr.mxu0 0.0
    %193 = vmatpush1.msra.mxu0 %v168
    %194 = vmatprep.subr.mxu0 0.0
    %195 = vmatpush1.msra.mxu0 %v169
    %196 = vmatprep.subr.mxu0 0.0
    %197 = vmatpush1.msra.mxu0 %v170
    %198 = vmatprep.subr.mxu0 0.0
    %199 = vmatpush1.msra.mxu0 %v171
    %200 = vmatprep.subr.mxu0 0.0
    %201 = vmatpush1.msra.mxu0 %v172
    %202 = vmatprep.subr.mxu0 0.0
    %203 = vmatpush1.msra.mxu0 %v173
    %204 = vmatprep.subr.mxu0 0.0
    %205 = vmatpush1.msra.mxu0 %v174
    %206 = vmatprep.subr.mxu0 0.0
    %207 = vmatpush1.msra.mxu0 %v175
    %208 = vmatprep.subr.mxu0 0.0
    %209 = vmatpush1.msra.mxu0 %v176
    %210 = vmatprep.subr.mxu0 0.0
    %211 = vmatpush1.msra.mxu0 %v177
    %212 = vmatprep.subr.mxu0 0.0
    %213 = vmatpush1.msra.mxu0 %v178
    %214 = vmatprep.subr.mxu0 0.0
    %215 = vmatpush1.msra.mxu0 %v179
    %216 = vmatprep.subr.mxu0 0.0
    %217 = vmatpush1.msra.mxu0 %v180
    %218 = vmatprep.subr.mxu0 0.0
    %219 = vmatpush1.msra.mxu0 %v181
    %220 = vmatprep.subr.mxu0 0.0
    %221 = vmatpush1.msra.mxu0 %v182
    %222 = vmatprep.subr.mxu0 0.0
    %223 = vmatpush1.msra.mxu0 0.0
    %224 = vmatprep.subr.mxu0 0.0
    %225 = vmatpush1.msra.mxu0 0.0
    %226 = vmatprep.subr.mxu0 0.0
    %227 = vmatpush1.msra.mxu0 0.0
    %228 = vmatprep.subr.mxu0 0.0
    %229 = vmatpush1.msra.mxu0 0.0
    %230 = vmatprep.subr.mxu0 0.0
    %231 = vmatpush1.msra.mxu0 0.0
    %232 = vmatprep.subr.mxu0 0.0
    %233 = vmatpush1.msra.mxu0 0.0
    %234 = vmatprep.subr.mxu0 0.0
    %235 = vmatpush1.msra.mxu0 0.0
    %236 = vmatprep.subr.mxu0 0.0
    %237 = vmatpush1.msra.mxu0 0.0
    %238 = vmatprep.subr.mxu0 0.0
    %239 = vmatpush1.msra.mxu0 0.0
    %240 = vmatprep.subr.mxu0 0.0
    %241 = vmatpush1.msra.mxu0 0.0
    %242 = vmatprep.subr.mxu0 0.0
    %243 = vmatpush1.msra.mxu0 0.0
    %244 = vmatprep.subr.mxu0 0.0
    %245 = vmatpush1.msra.mxu0 0.0
    %246 = vmatprep.subr.mxu0 0.0
    %247 = vmatpush1.msra.mxu0 0.0
    %248 = vmatprep.subr.mxu0 0.0
    %249 = vmatpush1.msra.mxu0 0.0
    %250 = vmatprep.subr.mxu0 0.0
    %251 = vmatpush1.msra.mxu0 0.0
    %252 = vmatprep.subr.mxu0 0.0
    %253 = vmatpush1.msra.mxu0 0.0
    %254 = vmatprep.mubr.f32.mxu0 0.0
    %255 = vmatmul.mubr.f32.gmra.mrb[0].mxu0 %v151
    %v256 = vpop.f32.mrb[0].mxu0
    %v257 = vadd.f32 %v188, %v256
    %v258 = vpop.f32.mrb[0].mxu0
    %259 = vmatprep.mubr.f32.mxu0 0.0
    %260 = vmatmul.mubr.f32.gmra.mrb[0].mxu0 %v152
    %v261 = vpop.f32.mrb[0].mxu0
    %v262 = vadd.f32 %v188, %v261
    %v263 = vpop.f32.mrb[0].mxu0
    %264 = vmatprep.mubr.f32.mxu0 0.0
    %265 = vmatmul.mubr.f32.gmra.mrb[0].mxu0 %v153
    %v266 = vpop.f32.mrb[0].mxu0
    %v267 = vadd.f32 %v188, %v266
    %v268 = vpop.f32.mrb[0].mxu0
    %269 = vmatprep.mubr.f32.mxu0 0.0
    %270 = vmatmul.mubr.f32.gmra.mrb[0].mxu0 %v154
    %v271 = vpop.f32.mrb[0].mxu0
    %v272 = vadd.f32 %v188, %v271
    %v273 = vpop.f32.mrb[0].mxu0
    %274 = vmatprep.mubr.f32.mxu0 0.0
    %275 = vmatmul.mubr.f32.gmra.mrb[0].mxu0 %v155
    %v276 = vpop.f32.mrb[0].mxu0
    %v277 = vadd.f32 %v188, %v276
    %v278 = vpop.f32.mrb[0].mxu0
    %279 = vmatprep.mubr.f32.mxu0 0.0
    %280 = vmatmul.mubr.f32.gmra.mrb[0].mxu0 %v156
    %v281 = vpop.f32.mrb[0].mxu0
    %v282 = vadd.f32 %v188, %v281
    %v283 = vpop.f32.mrb[0].mxu0
    %284 = vmatprep.mubr.f32.mxu0 0.0
    %285 = vmatmul.mubr.f32.gmra.mrb[0].mxu0 %v157
    %v286 = vpop.f32.mrb[0].mxu0
    %v287 = vadd.f32 %v188, %v286
    %v288 = vpop.f32.mrb[0].mxu0
    %289 = vmatprep.mubr.f32.mxu0 0.0
    %290 = vmatmul.mubr.f32.gmra.mrb[0].mxu0 %v158
    %v291 = vpop.f32.mrb[0].mxu0
    %v292 = vadd.f32 %v188, %v291
    %v293 = vpop.f32.mrb[0].mxu0
    %294 = vmatprep.mubr.f32.mxu0 0.0
    %295 = vmatmul.mubr.f32.gmra.mrb[0].mxu0 %v159
    %v296 = vpop.f32.mrb[0].mxu0
    %v297 = vadd.f32 %v188, %v296
    %v298 = vpop.f32.mrb[0].mxu0
    %299 = vmatprep.mubr.f32.mxu0 0.0
    %300 = vmatmul.mubr.f32.gmra.mrb[0].mxu0 %v160
    %v301 = vpop.f32.mrb[0].mxu0
    %v302 = vadd.f32 %v188, %v301
    %v303 = vpop.f32.mrb[0].mxu0
    %304 = vmatprep.mubr.f32.mxu0 0.0
    %305 = vmatmul.mubr.f32.gmra.mrb[0].mxu0 %v161
    %v306 = vpop.f32.mrb[0].mxu0
    %v307 = vadd.f32 %v188, %v306
    %v308 = vpop.f32.mrb[0].mxu0
    %309 = vmatprep.mubr.f32.mxu0 0.0
    %310 = vmatmul.mubr.f32.gmra.mrb[0].mxu0 %v162
    %v311 = vpop.f32.mrb[0].mxu0
    %v312 = vadd.f32 %v188, %v311
    %v313 = vpop.f32.mrb[0].mxu0
    %314 = vmatprep.mubr.f32.mxu0 0.0
    %315 = vmatmul.mubr.f32.gmra.mrb[0].mxu0 %v163
    %v316 = vpop.f32.mrb[0].mxu0
    %v317 = vadd.f32 %v188, %v316
    %v318 = vpop.f32.mrb[0].mxu0
    %319 = vmatprep.mubr.f32.mxu0 0.0
    %320 = vmatmul.mubr.f32.gmra.mrb[0].mxu0 %v164
    %v321 = vpop.f32.mrb[0].mxu0
    %v322 = vadd.f32 %v188, %v321
    %v323 = vpop.f32.mrb[0].mxu0
    %324 = vmatprep.mubr.f32.mxu0 0.0
    %325 = vmatmul.mubr.f32.gmra.mrb[0].mxu0 %v165
    %v326 = vpop.f32.mrb[0].mxu0
    %v327 = vadd.f32 %v188, %v326
    %v328 = vpop.f32.mrb[0].mxu0
    %329 = vmatprep.mubr.f32.mxu0 0.0
    %330 = vmatmul.mubr.f32.gmra.mrb[0].mxu0 %v166
    %v331 = vpop.f32.mrb[0].mxu0
    %v332 = vadd.f32 %v188, %v331
    %v333 = vpop.f32.mrb[0].mxu0
    %334 = vdwg.mxu0
    %vm335 = vcmp.gt.f32.partialorder %v257, 0.0
    %vm336 = vcmp.gt.f32.partialorder %v262, 0.0
    %vm337 = vcmp.gt.f32.partialorder %v267, 0.0
    %vm338 = vcmp.gt.f32.partialorder %v272, 0.0
    %vm339 = vcmp.gt.f32.partialorder %v277, 0.0
    %vm340 = vcmp.gt.f32.partialorder %v282, 0.0
    %vm341 = vcmp.gt.f32.partialorder %v287, 0.0
    %vm342 = vcmp.gt.f32.partialorder %v292, 0.0
    %vm343 = vcmp.gt.f32.partialorder %v297, 0.0
    %vm344 = vcmp.gt.f32.partialorder %v302, 0.0
    %vm345 = vcmp.gt.f32.partialorder %v307, 0.0
    %vm346 = vcmp.gt.f32.partialorder %v312, 0.0
    %vm347 = vcmp.gt.f32.partialorder %v317, 0.0
    %vm348 = vcmp.gt.f32.partialorder %v322, 0.0
    %vm349 = vcmp.gt.f32.partialorder %v327, 0.0
    %vm350 = vcmp.gt.f32.partialorder %v332, 0.0
    %v351 = vmul.f32 %v257, 0.01
    %v352 = vmul.f32 %v262, 0.01
    %v353 = vmul.f32 %v267, 0.01
    %v354 = vmul.f32 %v272, 0.01
    %v355 = vmul.f32 %v277, 0.01
    %v356 = vmul.f32 %v282, 0.01
    %v357 = vmul.f32 %v287, 0.01
    %v358 = vmul.f32 %v292, 0.01
    %v359 = vmul.f32 %v297, 0.01
    %v360 = vmul.f32 %v302, 0.01
    %v361 = vmul.f32 %v307, 0.01
    %v362 = vmul.f32 %v312, 0.01
    %v363 = vmul.f32 %v317, 0.01
    %v364 = vmul.f32 %v322, 0.01
    %v365 = vmul.f32 %v327, 0.01
    %v366 = vmul.f32 %v332, 0.01
    %v367 = vsel %vm335, %v257, %v351
    %v368 = vsel %vm336, %v262, %v352
    %v369 = vsel %vm337, %v267, %v353
    %v370 = vsel %vm338, %v272, %v354
    %v371 = vsel %vm339, %v277, %v355
    %v372 = vsel %vm340, %v282, %v356
    %v373 = vsel %vm341, %v287, %v357
    %v374 = vsel %vm342, %v292, %v358
    %v375 = vsel %vm343, %v297, %v359
    %v376 = vsel %vm344, %v302, %v360
    %v377 = vsel %vm345, %v307, %v361
    %v378 = vsel %vm346, %v312, %v362
    %v379 = vsel %vm347, %v317, %v363
    %v380 = vsel %vm348, %v322, %v364
    %v381 = vsel %vm349, %v327, %v365
    %v382 = vsel %vm350, %v332, %v366
    %v383 = vld [vmem:[#allocation5] sm:$0xff]
    %v384 = vld [vmem:[#allocation5 + $0x8] sm:$0xff]
    %v385 = vld [vmem:[#allocation5 + $0x10] sm:$0xff]
    %v386 = vld [vmem:[#allocation5 + $0x18] sm:$0xff]
    %v387 = vld [vmem:[#allocation5 + $0x20] sm:$0xff]
    %v388 = vld [vmem:[#allocation5 + $0x28] sm:$0xff]
    %v389 = vld [vmem:[#allocation5 + $0x30] sm:$0xff]
    %v390 = vld [vmem:[#allocation5 + $0x38] sm:$0xff]
    %v391 = vld [vmem:[#allocation5 + $0x40] sm:$0xff]
    %v392 = vld [vmem:[#allocation5 + $0x48] sm:$0xff]
    %v393 = vld [vmem:[#allocation5 + $0x50] sm:$0xff]
    %v394 = vld [vmem:[#allocation5 + $0x58] sm:$0xff]
    %v395 = vld [vmem:[#allocation5 + $0x60] sm:$0xff]
    %v396 = vld [vmem:[#allocation5 + $0x68] sm:$0xff]
    %v397 = vld [vmem:[#allocation5 + $0x70] sm:$0xff]
    %v398 = vld [vmem:[#allocation5 + $0x78] sm:$0xff]
    %vm399 = vcmp.gt.f32.partialorder %v383, 0.0
    %vm400 = vcmp.gt.f32.partialorder %v384, 0.0
    %vm401 = vcmp.gt.f32.partialorder %v385, 0.0
    %vm402 = vcmp.gt.f32.partialorder %v386, 0.0
    %vm403 = vcmp.gt.f32.partialorder %v387, 0.0
    %vm404 = vcmp.gt.f32.partialorder %v388, 0.0
    %vm405 = vcmp.gt.f32.partialorder %v389, 0.0
    %vm406 = vcmp.gt.f32.partialorder %v390, 0.0
    %vm407 = vcmp.gt.f32.partialorder %v391, 0.0
    %vm408 = vcmp.gt.f32.partialorder %v392, 0.0
    %vm409 = vcmp.gt.f32.partialorder %v393, 0.0
    %vm410 = vcmp.gt.f32.partialorder %v394, 0.0
    %vm411 = vcmp.gt.f32.partialorder %v395, 0.0
    %vm412 = vcmp.gt.f32.partialorder %v396, 0.0
    %vm413 = vcmp.gt.f32.partialorder %v397, 0.0
    %vm414 = vcmp.gt.f32.partialorder %v398, 0.0
    %v415 = vld [vmem:[#allocation8] sm:$0xff]
    %v416 = vld [vmem:[#allocation8 + $0x8] sm:$0xff]
    %v417 = vld [vmem:[#allocation8 + $0x10] sm:$0xff]
    %v418 = vld [vmem:[#allocation8 + $0x18] sm:$0xff]
    %v419 = vld [vmem:[#allocation8 + $0x20] sm:$0xff]
    %v420 = vld [vmem:[#allocation8 + $0x28] sm:$0xff]
    %v421 = vld [vmem:[#allocation8 + $0x30] sm:$0xff]
    %v422 = vld [vmem:[#allocation8 + $0x38] sm:$0xff]
    %v423 = vld [vmem:[#allocation8 + $0x40] sm:$0xff]
    %v424 = vld [vmem:[#allocation8 + $0x48] sm:$0xff]
    %v425 = vld [vmem:[#allocation8 + $0x50] sm:$0xff]
    %v426 = vld [vmem:[#allocation8 + $0x58] sm:$0xff]
    %v427 = vld [vmem:[#allocation8 + $0x60] sm:$0xff]
    %v428 = vld [vmem:[#allocation8 + $0x68] sm:$0xff]
    %v429 = vld [vmem:[#allocation8 + $0x70] sm:$0xff]
    %v430 = vld [vmem:[#allocation8 + $0x78] sm:$0xff]
    %431 = vmatprep.subr.mxu0 0.0
    %432 = vmatpush1.msra.mxu0 %v415
    %433 = vmatprep.subr.mxu0 0.0
    %434 = vmatpush1.msra.mxu0 %v416
    %435 = vmatprep.subr.mxu0 0.0
    %436 = vmatpush1.msra.mxu0 %v417
    %437 = vmatprep.subr.mxu0 0.0
    %438 = vmatpush1.msra.mxu0 %v418
    %439 = vmatprep.subr.mxu0 0.0
    %440 = vmatpush1.msra.mxu0 %v419
    %441 = vmatprep.subr.mxu0 0.0
    %442 = vmatpush1.msra.mxu0 %v420
    %443 = vmatprep.subr.mxu0 0.0
    %444 = vmatpush1.msra.mxu0 %v421
    %445 = vmatprep.subr.mxu0 0.0
    %446 = vmatpush1.msra.mxu0 %v422
    %447 = vmatprep.subr.mxu0 0.0
    %448 = vmatpush1.msra.mxu0 %v423
    %449 = vmatprep.subr.mxu0 0.0
    %450 = vmatpush1.msra.mxu0 %v424
    %451 = vmatprep.subr.mxu0 0.0
    %452 = vmatpush1.msra.mxu0 %v425
    %453 = vmatprep.subr.mxu0 0.0
    %454 = vmatpush1.msra.mxu0 %v426
    %455 = vmatprep.subr.mxu0 0.0
    %456 = vmatpush1.msra.mxu0 %v427
    %457 = vmatprep.subr.mxu0 0.0
    %458 = vmatpush1.msra.mxu0 %v428
    %459 = vmatprep.subr.mxu0 0.0
    %460 = vmatpush1.msra.mxu0 %v429
    %461 = vmatprep.subr.mxu0 0.0
    %462 = vmatpush1.msra.mxu0 %v430
    %463 = vmatprep.subr.mxu0 0.0
    %464 = vmatpush1.msra.mxu0 0.0
    %465 = vmatprep.subr.mxu0 0.0
    %466 = vmatpush1.msra.mxu0 0.0
    %467 = vmatprep.subr.mxu0 0.0
    %468 = vmatpush1.msra.mxu0 0.0
    %469 = vmatprep.subr.mxu0 0.0
    %470 = vmatpush1.msra.mxu0 0.0
    %471 = vmatprep.subr.mxu0 0.0
    %472 = vmatpush1.msra.mxu0 0.0
    %473 = vmatprep.subr.mxu0 0.0
    %474 = vmatpush1.msra.mxu0 0.0
    %475 = vmatprep.subr.mxu0 0.0
    %476 = vmatpush1.msra.mxu0 0.0
    %477 = vmatprep.subr.mxu0 0.0
    %478 = vmatpush1.msra.mxu0 0.0
    %479 = vmatprep.subr.mxu0 0.0
    %480 = vmatpush1.msra.mxu0 0.0
    %481 = vmatprep.subr.mxu0 0.0
    %482 = vmatpush1.msra.mxu0 0.0
    %483 = vmatprep.subr.mxu0 0.0
    %484 = vmatpush1.msra.mxu0 0.0
    %485 = vmatprep.subr.mxu0 0.0
    %486 = vmatpush1.msra.mxu0 0.0
    %487 = vmatprep.subr.mxu0 0.0
    %488 = vmatpush1.msra.mxu0 0.0
    %489 = vmatprep.subr.mxu0 0.0
    %490 = vmatpush1.msra.mxu0 0.0
    %491 = vmatprep.subr.mxu0 0.0
    %492 = vmatpush1.msra.mxu0 0.0
    %493 = vmatprep.subr.mxu0 0.0
    %494 = vmatpush1.msra.mxu0 0.0
    %495 = vmatprep.mubr.f32.mxu0 0.0
    %496 = vmatmul.mubr.f32.gmra.mrb[0].mxu0 %v367
    %v497 = vpop.f32.mrb[0].mxu0
    %v498 = vadd.f32 0.0, %v497
    %v499 = vpop.f32.mrb[0].mxu0
    %500 = vmatprep.mubr.f32.mxu0 0.0
    %501 = vmatmul.mubr.f32.gmra.mrb[0].mxu0 %v368
    %v502 = vpop.f32.mrb[0].mxu0
    %v503 = vadd.f32 0.0, %v502
    %v504 = vpop.f32.mrb[0].mxu0
    %505 = vmatprep.mubr.f32.mxu0 0.0
    %506 = vmatmul.mubr.f32.gmra.mrb[0].mxu0 %v369
    %v507 = vpop.f32.mrb[0].mxu0
    %v508 = vadd.f32 0.0, %v507
    %v509 = vpop.f32.mrb[0].mxu0
    %510 = vmatprep.mubr.f32.mxu0 0.0
    %511 = vmatmul.mubr.f32.gmra.mrb[0].mxu0 %v370
    %v512 = vpop.f32.mrb[0].mxu0
    %v513 = vadd.f32 0.0, %v512
    %v514 = vpop.f32.mrb[0].mxu0
    %515 = vmatprep.mubr.f32.mxu0 0.0
    %516 = vmatmul.mubr.f32.gmra.mrb[0].mxu0 %v371
    %v517 = vpop.f32.mrb[0].mxu0
    %v518 = vadd.f32 0.0, %v517
    %v519 = vpop.f32.mrb[0].mxu0
    %520 = vmatprep.mubr.f32.mxu0 0.0
    %521 = vmatmul.mubr.f32.gmra.mrb[0].mxu0 %v372
    %v522 = vpop.f32.mrb[0].mxu0
    %v523 = vadd.f32 0.0, %v522
    %v524 = vpop.f32.mrb[0].mxu0
    %525 = vmatprep.mubr.f32.mxu0 0.0
    %526 = vmatmul.mubr.f32.gmra.mrb[0].mxu0 %v373
    %v527 = vpop.f32.mrb[0].mxu0
    %v528 = vadd.f32 0.0, %v527
    %v529 = vpop.f32.mrb[0].mxu0
    %530 = vmatprep.mubr.f32.mxu0 0.0
    %531 = vmatmul.mubr.f32.gmra.mrb[0].mxu0 %v374
    %v532 = vpop.f32.mrb[0].mxu0
    %v533 = vadd.f32 0.0, %v532
    %v534 = vpop.f32.mrb[0].mxu0
    %535 = vmatprep.mubr.f32.mxu0 0.0
    %536 = vmatmul.mubr.f32.gmra.mrb[0].mxu0 %v375
    %v537 = vpop.f32.mrb[0].mxu0
    %v538 = vadd.f32 0.0, %v537
    %v539 = vpop.f32.mrb[0].mxu0
    %540 = vmatprep.mubr.f32.mxu0 0.0
    %541 = vmatmul.mubr.f32.gmra.mrb[0].mxu0 %v376
    %v542 = vpop.f32.mrb[0].mxu0
    %v543 = vadd.f32 0.0, %v542
    %v544 = vpop.f32.mrb[0].mxu0
    %545 = vmatprep.mubr.f32.mxu0 0.0
    %546 = vmatmul.mubr.f32.gmra.mrb[0].mxu0 %v377
    %v547 = vpop.f32.mrb[0].mxu0
    %v548 = vadd.f32 0.0, %v547
    %v549 = vpop.f32.mrb[0].mxu0
    %550 = vmatprep.mubr.f32.mxu0 0.0
    %551 = vmatmul.mubr.f32.gmra.mrb[0].mxu0 %v378
    %v552 = vpop.f32.mrb[0].mxu0
    %v553 = vadd.f32 0.0, %v552
    %v554 = vpop.f32.mrb[0].mxu0
    %555 = vmatprep.mubr.f32.mxu0 0.0
    %556 = vmatmul.mubr.f32.gmra.mrb[0].mxu0 %v379
    %v557 = vpop.f32.mrb[0].mxu0
    %v558 = vadd.f32 0.0, %v557
    %v559 = vpop.f32.mrb[0].mxu0
    %560 = vmatprep.mubr.f32.mxu0 0.0
    %561 = vmatmul.mubr.f32.gmra.mrb[0].mxu0 %v380
    %v562 = vpop.f32.mrb[0].mxu0
    %v563 = vadd.f32 0.0, %v562
    %v564 = vpop.f32.mrb[0].mxu0
    %565 = vmatprep.mubr.f32.mxu0 0.0
    %566 = vmatmul.mubr.f32.gmra.mrb[0].mxu0 %v381
    %v567 = vpop.f32.mrb[0].mxu0
    %v568 = vadd.f32 0.0, %v567
    %v569 = vpop.f32.mrb[0].mxu0
    %570 = vmatprep.mubr.f32.mxu0 0.0
    %571 = vmatmul.mubr.f32.gmra.mrb[0].mxu0 %v382
    %v572 = vpop.f32.mrb[0].mxu0
    %v573 = vadd.f32 0.0, %v572
    %v574 = vpop.f32.mrb[0].mxu0
    %575 = vdwg.mxu0
    %v576 = vld [vmem:[#allocation10] sm:$0xff]
    %v577 = vld [vmem:[#allocation10 + $0x8] sm:$0xff]
    %v578 = vld [vmem:[#allocation10 + $0x10] sm:$0xff]
    %v579 = vld [vmem:[#allocation10 + $0x18] sm:$0xff]
    %v580 = vld [vmem:[#allocation10 + $0x20] sm:$0xff]
    %v581 = vld [vmem:[#allocation10 + $0x28] sm:$0xff]
    %v582 = vld [vmem:[#allocation10 + $0x30] sm:$0xff]
    %v583 = vld [vmem:[#allocation10 + $0x38] sm:$0xff]
    %v584 = vld [vmem:[#allocation10 + $0x40] sm:$0xff]
    %v585 = vld [vmem:[#allocation10 + $0x48] sm:$0xff]
    %v586 = vld [vmem:[#allocation10 + $0x50] sm:$0xff]
    %v587 = vld [vmem:[#allocation10 + $0x58] sm:$0xff]
    %v588 = vld [vmem:[#allocation10 + $0x60] sm:$0xff]
    %v589 = vld [vmem:[#allocation10 + $0x68] sm:$0xff]
    %v590 = vld [vmem:[#allocation10 + $0x70] sm:$0xff]
    %v591 = vld [vmem:[#allocation10 + $0x78] sm:$0xff]
    %592 = vmatprep.subr.mxu0 0.0
    %593 = vmatpush1.msra.mxu0 %v576
    %594 = vmatprep.subr.mxu0 0.0
    %595 = vmatpush1.msra.mxu0 %v577
    %596 = vmatprep.subr.mxu0 0.0
    %597 = vmatpush1.msra.mxu0 %v578
    %598 = vmatprep.subr.mxu0 0.0
    %599 = vmatpush1.msra.mxu0 %v579
    %600 = vmatprep.subr.mxu0 0.0
    %601 = vmatpush1.msra.mxu0 %v580
    %602 = vmatprep.subr.mxu0 0.0
    %603 = vmatpush1.msra.mxu0 %v581
    %604 = vmatprep.subr.mxu0 0.0
    %605 = vmatpush1.msra.mxu0 %v582
    %606 = vmatprep.subr.mxu0 0.0
    %607 = vmatpush1.msra.mxu0 %v583
    %608 = vmatprep.subr.mxu0 0.0
    %609 = vmatpush1.msra.mxu0 %v584
    %610 = vmatprep.subr.mxu0 0.0
    %611 = vmatpush1.msra.mxu0 %v585
    %612 = vmatprep.subr.mxu0 0.0
    %613 = vmatpush1.msra.mxu0 %v586
    %614 = vmatprep.subr.mxu0 0.0
    %615 = vmatpush1.msra.mxu0 %v587
    %616 = vmatprep.subr.mxu0 0.0
    %617 = vmatpush1.msra.mxu0 %v588
    %618 = vmatprep.subr.mxu0 0.0
    %619 = vmatpush1.msra.mxu0 %v589
    %620 = vmatprep.subr.mxu0 0.0
    %621 = vmatpush1.msra.mxu0 %v590
    %622 = vmatprep.subr.mxu0 0.0
    %623 = vmatpush1.msra.mxu0 %v591
    %624 = vmatprep.subr.mxu0 0.0
    %625 = vmatpush1.msra.mxu0 0.0
    %626 = vmatprep.subr.mxu0 0.0
    %627 = vmatpush1.msra.mxu0 0.0
    %628 = vmatprep.subr.mxu0 0.0
    %629 = vmatpush1.msra.mxu0 0.0
    %630 = vmatprep.subr.mxu0 0.0
    %631 = vmatpush1.msra.mxu0 0.0
    %632 = vmatprep.subr.mxu0 0.0
    %633 = vmatpush1.msra.mxu0 0.0
    %634 = vmatprep.subr.mxu0 0.0
    %635 = vmatpush1.msra.mxu0 0.0
    %636 = vmatprep.subr.mxu0 0.0
    %637 = vmatpush1.msra.mxu0 0.0
    %638 = vmatprep.subr.mxu0 0.0
    %639 = vmatpush1.msra.mxu0 0.0
    %640 = vmatprep.subr.mxu0 0.0
    %641 = vmatpush1.msra.mxu0 0.0
    %642 = vmatprep.subr.mxu0 0.0
    %643 = vmatpush1.msra.mxu0 0.0
    %644 = vmatprep.subr.mxu0 0.0
    %645 = vmatpush1.msra.mxu0 0.0
    %646 = vmatprep.subr.mxu0 0.0
    %647 = vmatpush1.msra.mxu0 0.0
    %648 = vmatprep.subr.mxu0 0.0
    %649 = vmatpush1.msra.mxu0 0.0
    %650 = vmatprep.subr.mxu0 0.0
    %651 = vmatpush1.msra.mxu0 0.0
    %652 = vmatprep.subr.mxu0 0.0
    %653 = vmatpush1.msra.mxu0 0.0
    %654 = vmatprep.subr.mxu0 0.0
    %655 = vmatpush1.msra.mxu0 0.0
    %656 = vmatprep.mubr.f32.mxu0 0.0
    %657 = vmatmul.mubr.f32.gmra.mrb[0].mxu0 %v498
    %v658 = vpop.f32.mrb[0].mxu0
    %v659 = vadd.f32 0.0, %v658
    %v660 = vpop.f32.mrb[0].mxu0
    %661 = vmatprep.mubr.f32.mxu0 0.0
    %662 = vmatmul.mubr.f32.gmra.mrb[0].mxu0 %v503
    %v663 = vpop.f32.mrb[0].mxu0
    %v664 = vadd.f32 0.0, %v663
    %v665 = vpop.f32.mrb[0].mxu0
    %666 = vmatprep.mubr.f32.mxu0 0.0
    %667 = vmatmul.mubr.f32.gmra.mrb[0].mxu0 %v508
    %v668 = vpop.f32.mrb[0].mxu0
    %v669 = vadd.f32 0.0, %v668
    %v670 = vpop.f32.mrb[0].mxu0
    %671 = vmatprep.mubr.f32.mxu0 0.0
    %672 = vmatmul.mubr.f32.gmra.mrb[0].mxu0 %v513
    %v673 = vpop.f32.mrb[0].mxu0
    %v674 = vadd.f32 0.0, %v673
    %v675 = vpop.f32.mrb[0].mxu0
    %676 = vmatprep.mubr.f32.mxu0 0.0
    %677 = vmatmul.mubr.f32.gmra.mrb[0].mxu0 %v518
    %v678 = vpop.f32.mrb[0].mxu0
    %v679 = vadd.f32 0.0, %v678
    %v680 = vpop.f32.mrb[0].mxu0
    %681 = vmatprep.mubr.f32.mxu0 0.0
    %682 = vmatmul.mubr.f32.gmra.mrb[0].mxu0 %v523
    %v683 = vpop.f32.mrb[0].mxu0
    %v684 = vadd.f32 0.0, %v683
    %v685 = vpop.f32.mrb[0].mxu0
    %686 = vmatprep.mubr.f32.mxu0 0.0
    %687 = vmatmul.mubr.f32.gmra.mrb[0].mxu0 %v528
    %v688 = vpop.f32.mrb[0].mxu0
    %v689 = vadd.f32 0.0, %v688
    %v690 = vpop.f32.mrb[0].mxu0
    %691 = vmatprep.mubr.f32.mxu0 0.0
    %692 = vmatmul.mubr.f32.gmra.mrb[0].mxu0 %v533
    %v693 = vpop.f32.mrb[0].mxu0
    %v694 = vadd.f32 0.0, %v693
    %v695 = vpop.f32.mrb[0].mxu0
    %696 = vmatprep.mubr.f32.mxu0 0.0
    %697 = vmatmul.mubr.f32.gmra.mrb[0].mxu0 %v538
    %v698 = vpop.f32.mrb[0].mxu0
    %v699 = vadd.f32 0.0, %v698
    %v700 = vpop.f32.mrb[0].mxu0
    %701 = vmatprep.mubr.f32.mxu0 0.0
    %702 = vmatmul.mubr.f32.gmra.mrb[0].mxu0 %v543
    %v703 = vpop.f32.mrb[0].mxu0
    %v704 = vadd.f32 0.0, %v703
    %v705 = vpop.f32.mrb[0].mxu0
    %706 = vmatprep.mubr.f32.mxu0 0.0
    %707 = vmatmul.mubr.f32.gmra.mrb[0].mxu0 %v548
    %v708 = vpop.f32.mrb[0].mxu0
    %v709 = vadd.f32 0.0, %v708
    %v710 = vpop.f32.mrb[0].mxu0
    %711 = vmatprep.mubr.f32.mxu0 0.0
    %712 = vmatmul.mubr.f32.gmra.mrb[0].mxu0 %v553
    %v713 = vpop.f32.mrb[0].mxu0
    %v714 = vadd.f32 0.0, %v713
    %v715 = vpop.f32.mrb[0].mxu0
    %716 = vmatprep.mubr.f32.mxu0 0.0
    %717 = vmatmul.mubr.f32.gmra.mrb[0].mxu0 %v558
    %v718 = vpop.f32.mrb[0].mxu0
    %v719 = vadd.f32 0.0, %v718
    %v720 = vpop.f32.mrb[0].mxu0
    %721 = vmatprep.mubr.f32.mxu0 0.0
    %722 = vmatmul.mubr.f32.gmra.mrb[0].mxu0 %v563
    %v723 = vpop.f32.mrb[0].mxu0
    %v724 = vadd.f32 0.0, %v723
    %v725 = vpop.f32.mrb[0].mxu0
    %726 = vmatprep.mubr.f32.mxu0 0.0
    %727 = vmatmul.mubr.f32.gmra.mrb[0].mxu0 %v568
    %v728 = vpop.f32.mrb[0].mxu0
    %v729 = vadd.f32 0.0, %v728
    %v730 = vpop.f32.mrb[0].mxu0
    %731 = vmatprep.mubr.f32.mxu0 0.0
    %732 = vmatmul.mubr.f32.gmra.mrb[0].mxu0 %v573
    %v733 = vpop.f32.mrb[0].mxu0
    %v734 = vadd.f32 0.0, %v733
    %v735 = vpop.f32.mrb[0].mxu0
    %736 = vdwg.mxu0
    %737 = vxpose.xlu0.b32.start [1/16] %v659, 128
    %738 = vxpose.xlu0.b32.cont [2/16] %v664, 128
    %739 = vxpose.xlu0.b32.cont [3/16] %v669, 128
    %740 = vxpose.xlu0.b32.cont [4/16] %v674, 128
    %741 = vxpose.xlu0.b32.cont [5/16] %v679, 128
    %742 = vxpose.xlu0.b32.cont [6/16] %v684, 128
    %743 = vxpose.xlu0.b32.cont [7/16] %v689, 128
    %744 = vxpose.xlu0.b32.cont [8/16] %v694, 128
    %745 = vxpose.xlu0.b32.cont [9/16] %v699, 128
    %746 = vxpose.xlu0.b32.cont [10/16] %v704, 128
    %747 = vxpose.xlu0.b32.cont [11/16] %v709, 128
    %748 = vxpose.xlu0.b32.cont [12/16] %v714, 128
    %749 = vxpose.xlu0.b32.cont [13/16] %v719, 128
    %750 = vxpose.xlu0.b32.cont [14/16] %v724, 128
    %751 = vxpose.xlu0.b32.cont [15/16] %v729, 128
    %752 = vxpose.xlu0.b32.end [16/16] %v734, 128
    %v753 = vpop.trf.xlu0
    %v754 = vpop.trf.xlu0
    %v755 = vpop.trf.xlu0
    %v756 = vpop.trf.xlu0
    %v757 = vpop.trf.xlu0
    %v758 = vpop.trf.xlu0
    %v759 = vpop.trf.xlu0
    %v760 = vpop.trf.xlu0
    %v761 = vpop.trf.xlu0
    %v762 = vpop.trf.xlu0
    %v763 = vpop.trf.xlu0
    %v764 = vpop.trf.xlu0
    %v765 = vpop.trf.xlu0
    %v766 = vpop.trf.xlu0
    %v767 = vpop.trf.xlu0
    %v768 = vpop.trf.xlu0
    %770 = vset.pattern.permute.xlu0 4
    %771 = vperm.xlu0 %770, %v659
    %v772 = vpop.permute.xlu0 %771
    %775 = vset.pattern.permute.xlu0 4
    %776 = vperm.xlu0 %775, %v664
    %v777 = vpop.permute.xlu0 %776
    %780 = vset.pattern.permute.xlu0 4
    %781 = vperm.xlu0 %780, %v669
    %v782 = vpop.permute.xlu0 %781
    %785 = vset.pattern.permute.xlu0 4
    %786 = vperm.xlu0 %785, %v674
    %v787 = vpop.permute.xlu0 %786
    %790 = vset.pattern.permute.xlu0 4
    %791 = vperm.xlu0 %790, %v679
    %v792 = vpop.permute.xlu0 %791
    %795 = vset.pattern.permute.xlu0 4
    %796 = vperm.xlu0 %795, %v684
    %v797 = vpop.permute.xlu0 %796
    %800 = vset.pattern.permute.xlu0 4
    %801 = vperm.xlu0 %800, %v689
    %v802 = vpop.permute.xlu0 %801
    %805 = vset.pattern.permute.xlu0 4
    %806 = vperm.xlu0 %805, %v694
    %v807 = vpop.permute.xlu0 %806
    %810 = vset.pattern.permute.xlu0 4
    %811 = vperm.xlu0 %810, %v699
    %v812 = vpop.permute.xlu0 %811
    %815 = vset.pattern.permute.xlu0 4
    %816 = vperm.xlu0 %815, %v704
    %v817 = vpop.permute.xlu0 %816
    %820 = vset.pattern.permute.xlu0 4
    %821 = vperm.xlu0 %820, %v709
    %v822 = vpop.permute.xlu0 %821
    %825 = vset.pattern.permute.xlu0 4
    %826 = vperm.xlu0 %825, %v714
    %v827 = vpop.permute.xlu0 %826
    %830 = vset.pattern.permute.xlu0 4
    %831 = vperm.xlu0 %830, %v719
    %v832 = vpop.permute.xlu0 %831
    %835 = vset.pattern.permute.xlu0 4
    %836 = vperm.xlu0 %835, %v724
    %v837 = vpop.permute.xlu0 %836
    %840 = vset.pattern.permute.xlu0 4
    %841 = vperm.xlu0 %840, %v729
    %v842 = vpop.permute.xlu0 %841
    %845 = vset.pattern.permute.xlu0 4
    %846 = vperm.xlu0 %845, %v734
    %v847 = vpop.permute.xlu0 %846
    %v849 = vlaneseq
    %v850 = vshrl.u32 %v849, 7
    %v851 = vsub.s32 0, %v850
    %v852 = vrot.slane %v753, %v851
    %v853 = vadd.f32 %v772, %v852
    %v854 = vadd.f32 %v777, %v852
    %v855 = vadd.f32 %v782, %v852
    %v856 = vadd.f32 %v787, %v852
    %v857 = vadd.f32 %v792, %v852
    %v858 = vadd.f32 %v797, %v852
    %v859 = vadd.f32 %v802, %v852
    %v860 = vadd.f32 %v807, %v852
    %v861 = vadd.f32 %v812, %v852
    %v862 = vadd.f32 %v817, %v852
    %v863 = vadd.f32 %v822, %v852
    %v864 = vadd.f32 %v827, %v852
    %v865 = vadd.f32 %v832, %v852
    %v866 = vadd.f32 %v837, %v852
    %v867 = vadd.f32 %v842, %v852
    %v868 = vadd.f32 %v847, %v852
    %vm869 = vcmp.gt.f32.partialorder %v853, 0.0
    %vm870 = vcmp.gt.f32.partialorder %v854, 0.0
    %vm871 = vcmp.gt.f32.partialorder %v855, 0.0
    %vm872 = vcmp.gt.f32.partialorder %v856, 0.0
    %vm873 = vcmp.gt.f32.partialorder %v857, 0.0
    %vm874 = vcmp.gt.f32.partialorder %v858, 0.0
    %vm875 = vcmp.gt.f32.partialorder %v859, 0.0
    %vm876 = vcmp.gt.f32.partialorder %v860, 0.0
    %vm877 = vcmp.gt.f32.partialorder %v861, 0.0
    %vm878 = vcmp.gt.f32.partialorder %v862, 0.0
    %vm879 = vcmp.gt.f32.partialorder %v863, 0.0
    %vm880 = vcmp.gt.f32.partialorder %v864, 0.0
    %vm881 = vcmp.gt.f32.partialorder %v865, 0.0
    %vm882 = vcmp.gt.f32.partialorder %v866, 0.0
    %vm883 = vcmp.gt.f32.partialorder %v867, 0.0
    %vm884 = vcmp.gt.f32.partialorder %v868, 0.0
    %v885 = vmul.f32 %v853, 0.2
    %v886 = vmul.f32 %v854, 0.2
    %v887 = vmul.f32 %v855, 0.2
    %v888 = vmul.f32 %v856, 0.2
    %v889 = vmul.f32 %v857, 0.2
    %v890 = vmul.f32 %v858, 0.2
    %v891 = vmul.f32 %v859, 0.2
    %v892 = vmul.f32 %v860, 0.2
    %v893 = vmul.f32 %v861, 0.2
    %v894 = vmul.f32 %v862, 0.2
    %v895 = vmul.f32 %v863, 0.2
    %v896 = vmul.f32 %v864, 0.2
    %v897 = vmul.f32 %v865, 0.2
    %v898 = vmul.f32 %v866, 0.2
    %v899 = vmul.f32 %v867, 0.2
    %v900 = vmul.f32 %v868, 0.2
    %v901 = vsel %vm869, %v853, %v885
    %v902 = vsel %vm870, %v854, %v886
    %v903 = vsel %vm871, %v855, %v887
    %v904 = vsel %vm872, %v856, %v888
    %v905 = vsel %vm873, %v857, %v889
    %v906 = vsel %vm874, %v858, %v890
    %v907 = vsel %vm875, %v859, %v891
    %v908 = vsel %vm876, %v860, %v892
    %v909 = vsel %vm877, %v861, %v893
    %v910 = vsel %vm878, %v862, %v894
    %v911 = vsel %vm879, %v863, %v895
    %v912 = vsel %vm880, %v864, %v896
    %v913 = vsel %vm881, %v865, %v897
    %v914 = vsel %vm882, %v866, %v898
    %v915 = vsel %vm883, %v867, %v899
    %v916 = vsel %vm884, %v868, %v900
    %v917 = vsel %vm399, %v901, -1e+30
    %v918 = vsel %vm400, %v902, -1e+30
    %v919 = vsel %vm401, %v903, -1e+30
    %v920 = vsel %vm402, %v904, -1e+30
    %v921 = vsel %vm403, %v905, -1e+30
    %v922 = vsel %vm404, %v906, -1e+30
    %v923 = vsel %vm405, %v907, -1e+30
    %v924 = vsel %vm406, %v908, -1e+30
    %v925 = vsel %vm407, %v909, -1e+30
    %v926 = vsel %vm408, %v910, -1e+30
    %v927 = vsel %vm409, %v911, -1e+30
    %v928 = vsel %vm410, %v912, -1e+30
    %v929 = vsel %vm411, %v913, -1e+30
    %v930 = vsel %vm412, %v914, -1e+30
    %v931 = vsel %vm413, %v915, -1e+30
    %v932 = vsel %vm414, %v916, -1e+30
    %933 = vmax.xlane.f32.xlu0 %v917
    %v934 = vpop.xlane.xlu0 %933
    %935 = vmax.xlane.f32.xlu0 %v918
    %v936 = vpop.xlane.xlu0 %935
    %937 = vmax.xlane.f32.xlu0 %v919
    %v938 = vpop.xlane.xlu0 %937
    %939 = vmax.xlane.f32.xlu0 %v920
    %v940 = vpop.xlane.xlu0 %939
    %941 = vmax.xlane.f32.xlu0 %v921
    %v942 = vpop.xlane.xlu0 %941
    %943 = vmax.xlane.f32.xlu0 %v922
    %v944 = vpop.xlane.xlu0 %943
    %945 = vmax.xlane.f32.xlu0 %v923
    %v946 = vpop.xlane.xlu0 %945
    %947 = vmax.xlane.f32.xlu0 %v924
    %v948 = vpop.xlane.xlu0 %947
    %949 = vmax.xlane.f32.xlu0 %v925
    %v950 = vpop.xlane.xlu0 %949
    %951 = vmax.xlane.f32.xlu0 %v926
    %v952 = vpop.xlane.xlu0 %951
    %953 = vmax.xlane.f32.xlu0 %v927
    %v954 = vpop.xlane.xlu0 %953
    %955 = vmax.xlane.f32.xlu0 %v928
    %v956 = vpop.xlane.xlu0 %955
    %957 = vmax.xlane.f32.xlu0 %v929
    %v958 = vpop.xlane.xlu0 %957
    %959 = vmax.xlane.f32.xlu0 %v930
    %v960 = vpop.xlane.xlu0 %959
    %961 = vmax.xlane.f32.xlu0 %v931
    %v962 = vpop.xlane.xlu0 %961
    %963 = vmax.xlane.f32.xlu0 %v932
    %v964 = vpop.xlane.xlu0 %963
    %v965 = vsub.f32 %v917, %v934
    %v966 = vsub.f32 %v918, %v936
    %v967 = vsub.f32 %v919, %v938
    %v968 = vsub.f32 %v920, %v940
    %v969 = vsub.f32 %v921, %v942
    %v970 = vsub.f32 %v922, %v944
    %v971 = vsub.f32 %v923, %v946
    %v972 = vsub.f32 %v924, %v948
    %v973 = vsub.f32 %v925, %v950
    %v974 = vsub.f32 %v926, %v952
    %v975 = vsub.f32 %v927, %v954
    %v976 = vsub.f32 %v928, %v956
    %v977 = vsub.f32 %v929, %v958
    %v978 = vsub.f32 %v930, %v960
    %v979 = vsub.f32 %v931, %v962
    %v980 = vsub.f32 %v932, %v964
    %v981 = vmul.f32 %v965, 1.442695
    %v982 = vpow.pop %v981
    %v983 = vmul.f32 %v966, 1.442695
    %v984 = vpow.pop %v983
    %v985 = vmul.f32 %v967, 1.442695
    %v986 = vpow.pop %v985
    %v987 = vmul.f32 %v968, 1.442695
    %v988 = vpow.pop %v987
    %v989 = vmul.f32 %v969, 1.442695
    %v990 = vpow.pop %v989
    %v991 = vmul.f32 %v970, 1.442695
    %v992 = vpow.pop %v991
    %v993 = vmul.f32 %v971, 1.442695
    %v994 = vpow.pop %v993
    %v995 = vmul.f32 %v972, 1.442695
    %v996 = vpow.pop %v995
    %v997 = vmul.f32 %v973, 1.442695
    %v998 = vpow.pop %v997
    %v999 = vmul.f32 %v974, 1.442695
    %v1000 = vpow.pop %v999
    %v1001 = vmul.f32 %v975, 1.442695
    %v1002 = vpow.pop %v1001
    %v1003 = vmul.f32 %v976, 1.442695
    %v1004 = vpow.pop %v1003
    %v1005 = vmul.f32 %v977, 1.442695
    %v1006 = vpow.pop %v1005
    %v1007 = vmul.f32 %v978, 1.442695
    %v1008 = vpow.pop %v1007
    %v1009 = vmul.f32 %v979, 1.442695
    %v1010 = vpow.pop %v1009
    %v1011 = vmul.f32 %v980, 1.442695
    %v1012 = vpow.pop %v1011
    %v1013 = vmul.f32 %v982, %v383
    %v1014 = vmul.f32 %v984, %v384
    %v1015 = vmul.f32 %v986, %v385
    %v1016 = vmul.f32 %v988, %v386
    %v1017 = vmul.f32 %v990, %v387
    %v1018 = vmul.f32 %v992, %v388
    %v1019 = vmul.f32 %v994, %v389
    %v1020 = vmul.f32 %v996, %v390
    %v1021 = vmul.f32 %v998, %v391
    %v1022 = vmul.f32 %v1000, %v392
    %v1023 = vmul.f32 %v1002, %v393
    %v1024 = vmul.f32 %v1004, %v394
    %v1025 = vmul.f32 %v1006, %v395
    %v1026 = vmul.f32 %v1008, %v396
    %v1027 = vmul.f32 %v1010, %v397
    %v1028 = vmul.f32 %v1012, %v398
    %1029 = vadd.xlane.f32.xlu0 %v1013
    %v1030 = vpop.xlane.xlu0 %1029
    %1031 = vadd.xlane.f32.xlu0 %v1014
    %v1032 = vpop.xlane.xlu0 %1031
    %1033 = vadd.xlane.f32.xlu0 %v1015
    %v1034 = vpop.xlane.xlu0 %1033
    %1035 = vadd.xlane.f32.xlu0 %v1016
    %v1036 = vpop.xlane.xlu0 %1035
    %1037 = vadd.xlane.f32.xlu0 %v1017
    %v1038 = vpop.xlane.xlu0 %1037
    %1039 = vadd.xlane.f32.xlu0 %v1018
    %v1040 = vpop.xlane.xlu0 %1039
    %1041 = vadd.xlane.f32.xlu0 %v1019
    %v1042 = vpop.xlane.xlu0 %1041
    %1043 = vadd.xlane.f32.xlu0 %v1020
    %v1044 = vpop.xlane.xlu0 %1043
    %1045 = vadd.xlane.f32.xlu0 %v1021
    %v1046 = vpop.xlane.xlu0 %1045
    %1047 = vadd.xlane.f32.xlu0 %v1022
    %v1048 = vpop.xlane.xlu0 %1047
    %1049 = vadd.xlane.f32.xlu0 %v1023
    %v1050 = vpop.xlane.xlu0 %1049
    %1051 = vadd.xlane.f32.xlu0 %v1024
    %v1052 = vpop.xlane.xlu0 %1051
    %1053 = vadd.xlane.f32.xlu0 %v1025
    %v1054 = vpop.xlane.xlu0 %1053
    %1055 = vadd.xlane.f32.xlu0 %v1026
    %v1056 = vpop.xlane.xlu0 %1055
    %1057 = vadd.xlane.f32.xlu0 %v1027
    %v1058 = vpop.xlane.xlu0 %1057
    %1059 = vadd.xlane.f32.xlu0 %v1028
    %v1060 = vpop.xlane.xlu0 %1059
    %v1061 = vrcp.pop %v1030
    %v1062 = vrcp.pop %v1032
    %v1063 = vrcp.pop %v1034
    %v1064 = vrcp.pop %v1036
    %v1065 = vrcp.pop %v1038
    %v1066 = vrcp.pop %v1040
    %v1067 = vrcp.pop %v1042
    %v1068 = vrcp.pop %v1044
    %v1069 = vrcp.pop %v1046
    %v1070 = vrcp.pop %v1048
    %v1071 = vrcp.pop %v1050
    %v1072 = vrcp.pop %v1052
    %v1073 = vrcp.pop %v1054
    %v1074 = vrcp.pop %v1056
    %v1075 = vrcp.pop %v1058
    %v1076 = vrcp.pop %v1060
    %v1077 = vmul.f32 %v1013, %v1061
    %v1078 = vmul.f32 %v1014, %v1062
    %v1079 = vmul.f32 %v1015, %v1063
    %v1080 = vmul.f32 %v1016, %v1064
    %v1081 = vmul.f32 %v1017, %v1065
    %v1082 = vmul.f32 %v1018, %v1066
    %v1083 = vmul.f32 %v1019, %v1067
    %v1084 = vmul.f32 %v1020, %v1068
    %v1085 = vmul.f32 %v1021, %v1069
    %v1086 = vmul.f32 %v1022, %v1070
    %v1087 = vmul.f32 %v1023, %v1071
    %v1088 = vmul.f32 %v1024, %v1072
    %v1089 = vmul.f32 %v1025, %v1073
    %v1090 = vmul.f32 %v1026, %v1074
    %v1091 = vmul.f32 %v1027, %v1075
    %v1092 = vmul.f32 %v1028, %v1076
    %1093 = vmatprep.subr.mxu0 0.0
    %1094 = vmatpush1.msra.mxu0 %v498
    %1095 = vmatprep.subr.mxu0 0.0
    %1096 = vmatpush1.msra.mxu0 %v503
    %1097 = vmatprep.subr.mxu0 0.0
    %1098 = vmatpush1.msra.mxu0 %v508
    %1099 = vmatprep.subr.mxu0 0.0
    %1100 = vmatpush1.msra.mxu0 %v513
    %1101 = vmatprep.subr.mxu0 0.0
    %1102 = vmatpush1.msra.mxu0 %v518
    %1103 = vmatprep.subr.mxu0 0.0
    %1104 = vmatpush1.msra.mxu0 %v523
    %1105 = vmatprep.subr.mxu0 0.0
    %1106 = vmatpush1.msra.mxu0 %v528
    %1107 = vmatprep.subr.mxu0 0.0
    %1108 = vmatpush1.msra.mxu0 %v533
    %1109 = vmatprep.subr.mxu0 0.0
    %1110 = vmatpush1.msra.mxu0 %v538
    %1111 = vmatprep.subr.mxu0 0.0
    %1112 = vmatpush1.msra.mxu0 %v543
    %1113 = vmatprep.subr.mxu0 0.0
    %1114 = vmatpush1.msra.mxu0 %v548
    %1115 = vmatprep.subr.mxu0 0.0
    %1116 = vmatpush1.msra.mxu0 %v553
    %1117 = vmatprep.subr.mxu0 0.0
    %1118 = vmatpush1.msra.mxu0 %v558
    %1119 = vmatprep.subr.mxu0 0.0
    %1120 = vmatpush1.msra.mxu0 %v563
    %1121 = vmatprep.subr.mxu0 0.0
    %1122 = vmatpush1.msra.mxu0 %v568
    %1123 = vmatprep.subr.mxu0 0.0
    %1124 = vmatpush1.msra.mxu0 %v573
    %1125 = vmatprep.subr.mxu0 0.0
    %1126 = vmatpush1.msra.mxu0 0.0
    %1127 = vmatprep.subr.mxu0 0.0
    %1128 = vmatpush1.msra.mxu0 0.0
    %1129 = vmatprep.subr.mxu0 0.0
    %1130 = vmatpush1.msra.mxu0 0.0
    %1131 = vmatprep.subr.mxu0 0.0
    %1132 = vmatpush1.msra.mxu0 0.0
    %1133 = vmatprep.subr.mxu0 0.0
    %1134 = vmatpush1.msra.mxu0 0.0
    %1135 = vmatprep.subr.mxu0 0.0
    %1136 = vmatpush1.msra.mxu0 0.0
    %1137 = vmatprep.subr.mxu0 0.0
    %1138 = vmatpush1.msra.mxu0 0.0
    %1139 = vmatprep.subr.mxu0 0.0
    %1140 = vmatpush1.msra.mxu0 0.0
    %1141 = vmatprep.subr.mxu0 0.0
    %1142 = vmatpush1.msra.mxu0 0.0
    %1143 = vmatprep.subr.mxu0 0.0
    %1144 = vmatpush1.msra.mxu0 0.0
    %1145 = vmatprep.subr.mxu0 0.0
    %1146 = vmatpush1.msra.mxu0 0.0
    %1147 = vmatprep.subr.mxu0 0.0
    %1148 = vmatpush1.msra.mxu0 0.0
    %1149 = vmatprep.subr.mxu0 0.0
    %1150 = vmatpush1.msra.mxu0 0.0
    %1151 = vmatprep.subr.mxu0 0.0
    %1152 = vmatpush1.msra.mxu0 0.0
    %1153 = vmatprep.subr.mxu0 0.0
    %1154 = vmatpush1.msra.mxu0 0.0
    %1155 = vmatprep.subr.mxu0 0.0
    %1156 = vmatpush1.msra.mxu0 0.0
    %1157 = vmatprep.mubr.f32.mxu0 0.0
    %1158 = vmatmul.mubr.f32.gmra.mrb[0].mxu0 %v1077
    %v1159 = vpop.f32.mrb[0].mxu0
    %v1160 = vadd.f32 0.0, %v1159
    %v1161 = vpop.f32.mrb[0].mxu0
    %1162 = vmatprep.mubr.f32.mxu0 0.0
    %1163 = vmatmul.mubr.f32.gmra.mrb[0].mxu0 %v1078
    %v1164 = vpop.f32.mrb[0].mxu0
    %v1165 = vadd.f32 0.0, %v1164
    %v1166 = vpop.f32.mrb[0].mxu0
    %1167 = vmatprep.mubr.f32.mxu0 0.0
    %1168 = vmatmul.mubr.f32.gmra.mrb[0].mxu0 %v1079
    %v1169 = vpop.f32.mrb[0].mxu0
    %v1170 = vadd.f32 0.0, %v1169
    %v1171 = vpop.f32.mrb[0].mxu0
    %1172 = vmatprep.mubr.f32.mxu0 0.0
    %1173 = vmatmul.mubr.f32.gmra.mrb[0].mxu0 %v1080
    %v1174 = vpop.f32.mrb[0].mxu0
    %v1175 = vadd.f32 0.0, %v1174
    %v1176 = vpop.f32.mrb[0].mxu0
    %1177 = vmatprep.mubr.f32.mxu0 0.0
    %1178 = vmatmul.mubr.f32.gmra.mrb[0].mxu0 %v1081
    %v1179 = vpop.f32.mrb[0].mxu0
    %v1180 = vadd.f32 0.0, %v1179
    %v1181 = vpop.f32.mrb[0].mxu0
    %1182 = vmatprep.mubr.f32.mxu0 0.0
    %1183 = vmatmul.mubr.f32.gmra.mrb[0].mxu0 %v1082
    %v1184 = vpop.f32.mrb[0].mxu0
    %v1185 = vadd.f32 0.0, %v1184
    %v1186 = vpop.f32.mrb[0].mxu0
    %1187 = vmatprep.mubr.f32.mxu0 0.0
    %1188 = vmatmul.mubr.f32.gmra.mrb[0].mxu0 %v1083
    %v1189 = vpop.f32.mrb[0].mxu0
    %v1190 = vadd.f32 0.0, %v1189
    %v1191 = vpop.f32.mrb[0].mxu0
    %1192 = vmatprep.mubr.f32.mxu0 0.0
    %1193 = vmatmul.mubr.f32.gmra.mrb[0].mxu0 %v1084
    %v1194 = vpop.f32.mrb[0].mxu0
    %v1195 = vadd.f32 0.0, %v1194
    %v1196 = vpop.f32.mrb[0].mxu0
    %1197 = vmatprep.mubr.f32.mxu0 0.0
    %1198 = vmatmul.mubr.f32.gmra.mrb[0].mxu0 %v1085
    %v1199 = vpop.f32.mrb[0].mxu0
    %v1200 = vadd.f32 0.0, %v1199
    %v1201 = vpop.f32.mrb[0].mxu0
    %1202 = vmatprep.mubr.f32.mxu0 0.0
    %1203 = vmatmul.mubr.f32.gmra.mrb[0].mxu0 %v1086
    %v1204 = vpop.f32.mrb[0].mxu0
    %v1205 = vadd.f32 0.0, %v1204
    %v1206 = vpop.f32.mrb[0].mxu0
    %1207 = vmatprep.mubr.f32.mxu0 0.0
    %1208 = vmatmul.mubr.f32.gmra.mrb[0].mxu0 %v1087
    %v1209 = vpop.f32.mrb[0].mxu0
    %v1210 = vadd.f32 0.0, %v1209
    %v1211 = vpop.f32.mrb[0].mxu0
    %1212 = vmatprep.mubr.f32.mxu0 0.0
    %1213 = vmatmul.mubr.f32.gmra.mrb[0].mxu0 %v1088
    %v1214 = vpop.f32.mrb[0].mxu0
    %v1215 = vadd.f32 0.0, %v1214
    %v1216 = vpop.f32.mrb[0].mxu0
    %1217 = vmatprep.mubr.f32.mxu0 0.0
    %1218 = vmatmul.mubr.f32.gmra.mrb[0].mxu0 %v1089
    %v1219 = vpop.f32.mrb[0].mxu0
    %v1220 = vadd.f32 0.0, %v1219
    %v1221 = vpop.f32.mrb[0].mxu0
    %1222 = vmatprep.mubr.f32.mxu0 0.0
    %1223 = vmatmul.mubr.f32.gmra.mrb[0].mxu0 %v1090
    %v1224 = vpop.f32.mrb[0].mxu0
    %v1225 = vadd.f32 0.0, %v1224
    %v1226 = vpop.f32.mrb[0].mxu0
    %1227 = vmatprep.mubr.f32.mxu0 0.0
    %1228 = vmatmul.mubr.f32.gmra.mrb[0].mxu0 %v1091
    %v1229 = vpop.f32.mrb[0].mxu0
    %v1230 = vadd.f32 0.0, %v1229
    %v1231 = vpop.f32.mrb[0].mxu0
    %1232 = vmatprep.mubr.f32.mxu0 0.0
    %1233 = vmatmul.mubr.f32.gmra.mrb[0].mxu0 %v1092
    %v1234 = vpop.f32.mrb[0].mxu0
    %v1235 = vadd.f32 0.0, %v1234
    %v1236 = vpop.f32.mrb[0].mxu0
    %1237 = vdwg.mxu0
    %1238 = vset.pattern.permute.xlu0 5
    %1239 = vperm.xlu0 %1238, %v659
    %v1240 = vpop.permute.xlu0 %1239
    %1242 = vset.pattern.permute.xlu0 5
    %1243 = vperm.xlu0 %1242, %v664
    %v1244 = vpop.permute.xlu0 %1243
    %1246 = vset.pattern.permute.xlu0 5
    %1247 = vperm.xlu0 %1246, %v669
    %v1248 = vpop.permute.xlu0 %1247
    %1250 = vset.pattern.permute.xlu0 5
    %1251 = vperm.xlu0 %1250, %v674
    %v1252 = vpop.permute.xlu0 %1251
    %1254 = vset.pattern.permute.xlu0 5
    %1255 = vperm.xlu0 %1254, %v679
    %v1256 = vpop.permute.xlu0 %1255
    %1258 = vset.pattern.permute.xlu0 5
    %1259 = vperm.xlu0 %1258, %v684
    %v1260 = vpop.permute.xlu0 %1259
    %1262 = vset.pattern.permute.xlu0 5
    %1263 = vperm.xlu0 %1262, %v689
    %v1264 = vpop.permute.xlu0 %1263
    %1266 = vset.pattern.permute.xlu0 5
    %1267 = vperm.xlu0 %1266, %v694
    %v1268 = vpop.permute.xlu0 %1267
    %1270 = vset.pattern.permute.xlu0 5
    %1271 = vperm.xlu0 %1270, %v699
    %v1272 = vpop.permute.xlu0 %1271
    %1274 = vset.pattern.permute.xlu0 5
    %1275 = vperm.xlu0 %1274, %v704
    %v1276 = vpop.permute.xlu0 %1275
    %1278 = vset.pattern.permute.xlu0 5
    %1279 = vperm.xlu0 %1278, %v709
    %v1280 = vpop.permute.xlu0 %1279
    %1282 = vset.pattern.permute.xlu0 5
    %1283 = vperm.xlu0 %1282, %v714
    %v1284 = vpop.permute.xlu0 %1283
    %1286 = vset.pattern.permute.xlu0 5
    %1287 = vperm.xlu0 %1286, %v719
    %v1288 = vpop.permute.xlu0 %1287
    %1290 = vset.pattern.permute.xlu0 5
    %1291 = vperm.xlu0 %1290, %v724
    %v1292 = vpop.permute.xlu0 %1291
    %1294 = vset.pattern.permute.xlu0 5
    %1295 = vperm.xlu0 %1294, %v729
    %v1296 = vpop.permute.xlu0 %1295
    %1298 = vset.pattern.permute.xlu0 5
    %1299 = vperm.xlu0 %1298, %v734
    %v1300 = vpop.permute.xlu0 %1299
    %v1302 = vlaneseq
    %v1303 = vshrl.u32 %v1302, 7
    %v1304 = vsub.s32 1, %v1303
    %v1305 = vrot.slane %v753, %v1304
    %v1306 = vadd.f32 %v1240, %v1305
    %v1307 = vadd.f32 %v1244, %v1305
    %v1308 = vadd.f32 %v1248, %v1305
    %v1309 = vadd.f32 %v1252, %v1305
    %v1310 = vadd.f32 %v1256, %v1305
    %v1311 = vadd.f32 %v1260, %v1305
    %v1312 = vadd.f32 %v1264, %v1305
    %v1313 = vadd.f32 %v1268, %v1305
    %v1314 = vadd.f32 %v1272, %v1305
    %v1315 = vadd.f32 %v1276, %v1305
    %v1316 = vadd.f32 %v1280, %v1305
    %v1317 = vadd.f32 %v1284, %v1305
    %v1318 = vadd.f32 %v1288, %v1305
    %v1319 = vadd.f32 %v1292, %v1305
    %v1320 = vadd.f32 %v1296, %v1305
    %v1321 = vadd.f32 %v1300, %v1305
    %vm1322 = vcmp.gt.f32.partialorder %v1306, 0.0
    %vm1323 = vcmp.gt.f32.partialorder %v1307, 0.0
    %vm1324 = vcmp.gt.f32.partialorder %v1308, 0.0
    %vm1325 = vcmp.gt.f32.partialorder %v1309, 0.0
    %vm1326 = vcmp.gt.f32.partialorder %v1310, 0.0
    %vm1327 = vcmp.gt.f32.partialorder %v1311, 0.0
    %vm1328 = vcmp.gt.f32.partialorder %v1312, 0.0
    %vm1329 = vcmp.gt.f32.partialorder %v1313, 0.0
    %vm1330 = vcmp.gt.f32.partialorder %v1314, 0.0
    %vm1331 = vcmp.gt.f32.partialorder %v1315, 0.0
    %vm1332 = vcmp.gt.f32.partialorder %v1316, 0.0
    %vm1333 = vcmp.gt.f32.partialorder %v1317, 0.0
    %vm1334 = vcmp.gt.f32.partialorder %v1318, 0.0
    %vm1335 = vcmp.gt.f32.partialorder %v1319, 0.0
    %vm1336 = vcmp.gt.f32.partialorder %v1320, 0.0
    %vm1337 = vcmp.gt.f32.partialorder %v1321, 0.0
    %v1338 = vmul.f32 %v1306, 0.2
    %v1339 = vmul.f32 %v1307, 0.2
    %v1340 = vmul.f32 %v1308, 0.2
    %v1341 = vmul.f32 %v1309, 0.2
    %v1342 = vmul.f32 %v1310, 0.2
    %v1343 = vmul.f32 %v1311, 0.2
    %v1344 = vmul.f32 %v1312, 0.2
    %v1345 = vmul.f32 %v1313, 0.2
    %v1346 = vmul.f32 %v1314, 0.2
    %v1347 = vmul.f32 %v1315, 0.2
    %v1348 = vmul.f32 %v1316, 0.2
    %v1349 = vmul.f32 %v1317, 0.2
    %v1350 = vmul.f32 %v1318, 0.2
    %v1351 = vmul.f32 %v1319, 0.2
    %v1352 = vmul.f32 %v1320, 0.2
    %v1353 = vmul.f32 %v1321, 0.2
    %v1354 = vsel %vm1322, %v1306, %v1338
    %v1355 = vsel %vm1323, %v1307, %v1339
    %v1356 = vsel %vm1324, %v1308, %v1340
    %v1357 = vsel %vm1325, %v1309, %v1341
    %v1358 = vsel %vm1326, %v1310, %v1342
    %v1359 = vsel %vm1327, %v1311, %v1343
    %v1360 = vsel %vm1328, %v1312, %v1344
    %v1361 = vsel %vm1329, %v1313, %v1345
    %v1362 = vsel %vm1330, %v1314, %v1346
    %v1363 = vsel %vm1331, %v1315, %v1347
    %v1364 = vsel %vm1332, %v1316, %v1348
    %v1365 = vsel %vm1333, %v1317, %v1349
    %v1366 = vsel %vm1334, %v1318, %v1350
    %v1367 = vsel %vm1335, %v1319, %v1351
    %v1368 = vsel %vm1336, %v1320, %v1352
    %v1369 = vsel %vm1337, %v1321, %v1353
    %v1370 = vsel %vm399, %v1354, -1e+30
    %v1371 = vsel %vm400, %v1355, -1e+30
    %v1372 = vsel %vm401, %v1356, -1e+30
    %v1373 = vsel %vm402, %v1357, -1e+30
    %v1374 = vsel %vm403, %v1358, -1e+30
    %v1375 = vsel %vm404, %v1359, -1e+30
    %v1376 = vsel %vm405, %v1360, -1e+30
    %v1377 = vsel %vm406, %v1361, -1e+30
    %v1378 = vsel %vm407, %v1362, -1e+30
    %v1379 = vsel %vm408, %v1363, -1e+30
    %v1380 = vsel %vm409, %v1364, -1e+30
    %v1381 = vsel %vm410, %v1365, -1e+30
    %v1382 = vsel %vm411, %v1366, -1e+30
    %v1383 = vsel %vm412, %v1367, -1e+30
    %v1384 = vsel %vm413, %v1368, -1e+30
    %v1385 = vsel %vm414, %v1369, -1e+30
    %1386 = vmax.xlane.f32.xlu0 %v1370
    %v1387 = vpop.xlane.xlu0 %1386
    %1388 = vmax.xlane.f32.xlu0 %v1371
    %v1389 = vpop.xlane.xlu0 %1388
    %1390 = vmax.xlane.f32.xlu0 %v1372
    %v1391 = vpop.xlane.xlu0 %1390
    %1392 = vmax.xlane.f32.xlu0 %v1373
    %v1393 = vpop.xlane.xlu0 %1392
    %1394 = vmax.xlane.f32.xlu0 %v1374
    %v1395 = vpop.xlane.xlu0 %1394
    %1396 = vmax.xlane.f32.xlu0 %v1375
    %v1397 = vpop.xlane.xlu0 %1396
    %1398 = vmax.xlane.f32.xlu0 %v1376
    %v1399 = vpop.xlane.xlu0 %1398
    %1400 = vmax.xlane.f32.xlu0 %v1377
    %v1401 = vpop.xlane.xlu0 %1400
    %1402 = vmax.xlane.f32.xlu0 %v1378
    %v1403 = vpop.xlane.xlu0 %1402
    %1404 = vmax.xlane.f32.xlu0 %v1379
    %v1405 = vpop.xlane.xlu0 %1404
    %1406 = vmax.xlane.f32.xlu0 %v1380
    %v1407 = vpop.xlane.xlu0 %1406
    %1408 = vmax.xlane.f32.xlu0 %v1381
    %v1409 = vpop.xlane.xlu0 %1408
    %1410 = vmax.xlane.f32.xlu0 %v1382
    %v1411 = vpop.xlane.xlu0 %1410
    %1412 = vmax.xlane.f32.xlu0 %v1383
    %v1413 = vpop.xlane.xlu0 %1412
    %1414 = vmax.xlane.f32.xlu0 %v1384
    %v1415 = vpop.xlane.xlu0 %1414
    %1416 = vmax.xlane.f32.xlu0 %v1385
    %v1417 = vpop.xlane.xlu0 %1416
    %v1418 = vsub.f32 %v1370, %v1387
    %v1419 = vsub.f32 %v1371, %v1389
    %v1420 = vsub.f32 %v1372, %v1391
    %v1421 = vsub.f32 %v1373, %v1393
    %v1422 = vsub.f32 %v1374, %v1395
    %v1423 = vsub.f32 %v1375, %v1397
    %v1424 = vsub.f32 %v1376, %v1399
    %v1425 = vsub.f32 %v1377, %v1401
    %v1426 = vsub.f32 %v1378, %v1403
    %v1427 = vsub.f32 %v1379, %v1405
    %v1428 = vsub.f32 %v1380, %v1407
    %v1429 = vsub.f32 %v1381, %v1409
    %v1430 = vsub.f32 %v1382, %v1411
    %v1431 = vsub.f32 %v1383, %v1413
    %v1432 = vsub.f32 %v1384, %v1415
    %v1433 = vsub.f32 %v1385, %v1417
    %v1434 = vmul.f32 %v1418, 1.442695
    %v1435 = vpow.pop %v1434
    %v1436 = vmul.f32 %v1419, 1.442695
    %v1437 = vpow.pop %v1436
    %v1438 = vmul.f32 %v1420, 1.442695
    %v1439 = vpow.pop %v1438
    %v1440 = vmul.f32 %v1421, 1.442695
    %v1441 = vpow.pop %v1440
    %v1442 = vmul.f32 %v1422, 1.442695
    %v1443 = vpow.pop %v1442
    %v1444 = vmul.f32 %v1423, 1.442695
    %v1445 = vpow.pop %v1444
    %v1446 = vmul.f32 %v1424, 1.442695
    %v1447 = vpow.pop %v1446
    %v1448 = vmul.f32 %v1425, 1.442695
    %v1449 = vpow.pop %v1448
    %v1450 = vmul.f32 %v1426, 1.442695
    %v1451 = vpow.pop %v1450
    %v1452 = vmul.f32 %v1427, 1.442695
    %v1453 = vpow.pop %v1452
    %v1454 = vmul.f32 %v1428, 1.442695
    %v1455 = vpow.pop %v1454
    %v1456 = vmul.f32 %v1429, 1.442695
    %v1457 = vpow.pop %v1456
    %v1458 = vmul.f32 %v1430, 1.442695
    %v1459 = vpow.pop %v1458
    %v1460 = vmul.f32 %v1431, 1.442695
    %v1461 = vpow.pop %v1460
    %v1462 = vmul.f32 %v1432, 1.442695
    %v1463 = vpow.pop %v1462
    %v1464 = vmul.f32 %v1433, 1.442695
    %v1465 = vpow.pop %v1464
    %v1466 = vmul.f32 %v1435, %v383
    %v1467 = vmul.f32 %v1437, %v384
    %v1468 = vmul.f32 %v1439, %v385
    %v1469 = vmul.f32 %v1441, %v386
    %v1470 = vmul.f32 %v1443, %v387
    %v1471 = vmul.f32 %v1445, %v388
    %v1472 = vmul.f32 %v1447, %v389
    %v1473 = vmul.f32 %v1449, %v390
    %v1474 = vmul.f32 %v1451, %v391
    %v1475 = vmul.f32 %v1453, %v392
    %v1476 = vmul.f32 %v1455, %v393
    %v1477 = vmul.f32 %v1457, %v394
    %v1478 = vmul.f32 %v1459, %v395
    %v1479 = vmul.f32 %v1461, %v396
    %v1480 = vmul.f32 %v1463, %v397
    %v1481 = vmul.f32 %v1465, %v398
    %1482 = vadd.xlane.f32.xlu0 %v1466
    %v1483 = vpop.xlane.xlu0 %1482
    %1484 = vadd.xlane.f32.xlu0 %v1467
    %v1485 = vpop.xlane.xlu0 %1484
    %1486 = vadd.xlane.f32.xlu0 %v1468
    %v1487 = vpop.xlane.xlu0 %1486
    %1488 = vadd.xlane.f32.xlu0 %v1469
    %v1489 = vpop.xlane.xlu0 %1488
    %1490 = vadd.xlane.f32.xlu0 %v1470
    %v1491 = vpop.xlane.xlu0 %1490
    %1492 = vadd.xlane.f32.xlu0 %v1471
    %v1493 = vpop.xlane.xlu0 %1492
    %1494 = vadd.xlane.f32.xlu0 %v1472
    %v1495 = vpop.xlane.xlu0 %1494
    %1496 = vadd.xlane.f32.xlu0 %v1473
    %v1497 = vpop.xlane.xlu0 %1496
    %1498 = vadd.xlane.f32.xlu0 %v1474
    %v1499 = vpop.xlane.xlu0 %1498
    %1500 = vadd.xlane.f32.xlu0 %v1475
    %v1501 = vpop.xlane.xlu0 %1500
    %1502 = vadd.xlane.f32.xlu0 %v1476
    %v1503 = vpop.xlane.xlu0 %1502
    %1504 = vadd.xlane.f32.xlu0 %v1477
    %v1505 = vpop.xlane.xlu0 %1504
    %1506 = vadd.xlane.f32.xlu0 %v1478
    %v1507 = vpop.xlane.xlu0 %1506
    %1508 = vadd.xlane.f32.xlu0 %v1479
    %v1509 = vpop.xlane.xlu0 %1508
    %1510 = vadd.xlane.f32.xlu0 %v1480
    %v1511 = vpop.xlane.xlu0 %1510
    %1512 = vadd.xlane.f32.xlu0 %v1481
    %v1513 = vpop.xlane.xlu0 %1512
    %v1514 = vrcp.pop %v1483
    %v1515 = vrcp.pop %v1485
    %v1516 = vrcp.pop %v1487
    %v1517 = vrcp.pop %v1489
    %v1518 = vrcp.pop %v1491
    %v1519 = vrcp.pop %v1493
    %v1520 = vrcp.pop %v1495
    %v1521 = vrcp.pop %v1497
    %v1522 = vrcp.pop %v1499
    %v1523 = vrcp.pop %v1501
    %v1524 = vrcp.pop %v1503
    %v1525 = vrcp.pop %v1505
    %v1526 = vrcp.pop %v1507
    %v1527 = vrcp.pop %v1509
    %v1528 = vrcp.pop %v1511
    %v1529 = vrcp.pop %v1513
    %v1530 = vmul.f32 %v1466, %v1514
    %v1531 = vmul.f32 %v1467, %v1515
    %v1532 = vmul.f32 %v1468, %v1516
    %v1533 = vmul.f32 %v1469, %v1517
    %v1534 = vmul.f32 %v1470, %v1518
    %v1535 = vmul.f32 %v1471, %v1519
    %v1536 = vmul.f32 %v1472, %v1520
    %v1537 = vmul.f32 %v1473, %v1521
    %v1538 = vmul.f32 %v1474, %v1522
    %v1539 = vmul.f32 %v1475, %v1523
    %v1540 = vmul.f32 %v1476, %v1524
    %v1541 = vmul.f32 %v1477, %v1525
    %v1542 = vmul.f32 %v1478, %v1526
    %v1543 = vmul.f32 %v1479, %v1527
    %v1544 = vmul.f32 %v1480, %v1528
    %v1545 = vmul.f32 %v1481, %v1529
    %1562 = vrot.lane.b32.xlu0 %v498, 96
    %v1563 = vpop.permute.xlu0 %1562
    %1564 = vrot.lane.b32.xlu0 %v503, 96
    %v1565 = vpop.permute.xlu0 %1564
    %1566 = vrot.lane.b32.xlu0 %v508, 96
    %v1567 = vpop.permute.xlu0 %1566
    %1568 = vrot.lane.b32.xlu0 %v513, 96
    %v1569 = vpop.permute.xlu0 %1568
    %1570 = vrot.lane.b32.xlu0 %v518, 96
    %v1571 = vpop.permute.xlu0 %1570
    %1572 = vrot.lane.b32.xlu0 %v523, 96
    %v1573 = vpop.permute.xlu0 %1572
    %1574 = vrot.lane.b32.xlu0 %v528, 96
    %v1575 = vpop.permute.xlu0 %1574
    %1576 = vrot.lane.b32.xlu0 %v533, 96
    %v1577 = vpop.permute.xlu0 %1576
    %1578 = vrot.lane.b32.xlu0 %v538, 96
    %v1579 = vpop.permute.xlu0 %1578
    %1580 = vrot.lane.b32.xlu0 %v543, 96
    %v1581 = vpop.permute.xlu0 %1580
    %1582 = vrot.lane.b32.xlu0 %v548, 96
    %v1583 = vpop.permute.xlu0 %1582
    %1584 = vrot.lane.b32.xlu0 %v553, 96
    %v1585 = vpop.permute.xlu0 %1584
    %1586 = vrot.lane.b32.xlu0 %v558, 96
    %v1587 = vpop.permute.xlu0 %1586
    %1588 = vrot.lane.b32.xlu0 %v563, 96
    %v1589 = vpop.permute.xlu0 %1588
    %1590 = vrot.lane.b32.xlu0 %v568, 96
    %v1591 = vpop.permute.xlu0 %1590
    %1592 = vrot.lane.b32.xlu0 %v573, 96
    %v1593 = vpop.permute.xlu0 %1592
    %1610 = vmatprep.subr.mxu0 0.0
    %1611 = vmatpush1.msra.mxu0 %v1563
    %1612 = vmatprep.subr.mxu0 0.0
    %1613 = vmatpush1.msra.mxu0 %v1565
    %1614 = vmatprep.subr.mxu0 0.0
    %1615 = vmatpush1.msra.mxu0 %v1567
    %1616 = vmatprep.subr.mxu0 0.0
    %1617 = vmatpush1.msra.mxu0 %v1569
    %1618 = vmatprep.subr.mxu0 0.0
    %1619 = vmatpush1.msra.mxu0 %v1571
    %1620 = vmatprep.subr.mxu0 0.0
    %1621 = vmatpush1.msra.mxu0 %v1573
    %1622 = vmatprep.subr.mxu0 0.0
    %1623 = vmatpush1.msra.mxu0 %v1575
    %1624 = vmatprep.subr.mxu0 0.0
    %1625 = vmatpush1.msra.mxu0 %v1577
    %1626 = vmatprep.subr.mxu0 0.0
    %1627 = vmatpush1.msra.mxu0 %v1579
    %1628 = vmatprep.subr.mxu0 0.0
    %1629 = vmatpush1.msra.mxu0 %v1581
    %1630 = vmatprep.subr.mxu0 0.0
    %1631 = vmatpush1.msra.mxu0 %v1583
    %1632 = vmatprep.subr.mxu0 0.0
    %1633 = vmatpush1.msra.mxu0 %v1585
    %1634 = vmatprep.subr.mxu0 0.0
    %1635 = vmatpush1.msra.mxu0 %v1587
    %1636 = vmatprep.subr.mxu0 0.0
    %1637 = vmatpush1.msra.mxu0 %v1589
    %1638 = vmatprep.subr.mxu0 0.0
    %1639 = vmatpush1.msra.mxu0 %v1591
    %1640 = vmatprep.subr.mxu0 0.0
    %1641 = vmatpush1.msra.mxu0 %v1593
    %1642 = vmatprep.subr.mxu0 0.0
    %1643 = vmatpush1.msra.mxu0 0.0
    %1644 = vmatprep.subr.mxu0 0.0
    %1645 = vmatpush1.msra.mxu0 0.0
    %1646 = vmatprep.subr.mxu0 0.0
    %1647 = vmatpush1.msra.mxu0 0.0
    %1648 = vmatprep.subr.mxu0 0.0
    %1649 = vmatpush1.msra.mxu0 0.0
    %1650 = vmatprep.subr.mxu0 0.0
    %1651 = vmatpush1.msra.mxu0 0.0
    %1652 = vmatprep.subr.mxu0 0.0
    %1653 = vmatpush1.msra.mxu0 0.0
    %1654 = vmatprep.subr.mxu0 0.0
    %1655 = vmatpush1.msra.mxu0 0.0
    %1656 = vmatprep.subr.mxu0 0.0
    %1657 = vmatpush1.msra.mxu0 0.0
    %1658 = vmatprep.subr.mxu0 0.0
    %1659 = vmatpush1.msra.mxu0 0.0
    %1660 = vmatprep.subr.mxu0 0.0
    %1661 = vmatpush1.msra.mxu0 0.0
    %1662 = vmatprep.subr.mxu0 0.0
    %1663 = vmatpush1.msra.mxu0 0.0
    %1664 = vmatprep.subr.mxu0 0.0
    %1665 = vmatpush1.msra.mxu0 0.0
    %1666 = vmatprep.subr.mxu0 0.0
    %1667 = vmatpush1.msra.mxu0 0.0
    %1668 = vmatprep.subr.mxu0 0.0
    %1669 = vmatpush1.msra.mxu0 0.0
    %1670 = vmatprep.subr.mxu0 0.0
    %1671 = vmatpush1.msra.mxu0 0.0
    %1672 = vmatprep.subr.mxu0 0.0
    %1673 = vmatpush1.msra.mxu0 0.0
    %1674 = vmatprep.mubr.f32.mxu0 0.0
    %1675 = vmatmul.mubr.f32.gmra.mrb[0].mxu0 %v1530
    %v1676 = vpop.f32.mrb[0].mxu0
    %v1677 = vadd.f32 0.0, %v1676
    %v1678 = vpop.f32.mrb[0].mxu0
    %1679 = vmatprep.mubr.f32.mxu0 0.0
    %1680 = vmatmul.mubr.f32.gmra.mrb[0].mxu0 %v1531
    %v1681 = vpop.f32.mrb[0].mxu0
    %v1682 = vadd.f32 0.0, %v1681
    %v1683 = vpop.f32.mrb[0].mxu0
    %1684 = vmatprep.mubr.f32.mxu0 0.0
    %1685 = vmatmul.mubr.f32.gmra.mrb[0].mxu0 %v1532
    %v1686 = vpop.f32.mrb[0].mxu0
    %v1687 = vadd.f32 0.0, %v1686
    %v1688 = vpop.f32.mrb[0].mxu0
    %1689 = vmatprep.mubr.f32.mxu0 0.0
    %1690 = vmatmul.mubr.f32.gmra.mrb[0].mxu0 %v1533
    %v1691 = vpop.f32.mrb[0].mxu0
    %v1692 = vadd.f32 0.0, %v1691
    %v1693 = vpop.f32.mrb[0].mxu0
    %1694 = vmatprep.mubr.f32.mxu0 0.0
    %1695 = vmatmul.mubr.f32.gmra.mrb[0].mxu0 %v1534
    %v1696 = vpop.f32.mrb[0].mxu0
    %v1697 = vadd.f32 0.0, %v1696
    %v1698 = vpop.f32.mrb[0].mxu0
    %1699 = vmatprep.mubr.f32.mxu0 0.0
    %1700 = vmatmul.mubr.f32.gmra.mrb[0].mxu0 %v1535
    %v1701 = vpop.f32.mrb[0].mxu0
    %v1702 = vadd.f32 0.0, %v1701
    %v1703 = vpop.f32.mrb[0].mxu0
    %1704 = vmatprep.mubr.f32.mxu0 0.0
    %1705 = vmatmul.mubr.f32.gmra.mrb[0].mxu0 %v1536
    %v1706 = vpop.f32.mrb[0].mxu0
    %v1707 = vadd.f32 0.0, %v1706
    %v1708 = vpop.f32.mrb[0].mxu0
    %1709 = vmatprep.mubr.f32.mxu0 0.0
    %1710 = vmatmul.mubr.f32.gmra.mrb[0].mxu0 %v1537
    %v1711 = vpop.f32.mrb[0].mxu0
    %v1712 = vadd.f32 0.0, %v1711
    %v1713 = vpop.f32.mrb[0].mxu0
    %1714 = vmatprep.mubr.f32.mxu0 0.0
    %1715 = vmatmul.mubr.f32.gmra.mrb[0].mxu0 %v1538
    %v1716 = vpop.f32.mrb[0].mxu0
    %v1717 = vadd.f32 0.0, %v1716
    %v1718 = vpop.f32.mrb[0].mxu0
    %1719 = vmatprep.mubr.f32.mxu0 0.0
    %1720 = vmatmul.mubr.f32.gmra.mrb[0].mxu0 %v1539
    %v1721 = vpop.f32.mrb[0].mxu0
    %v1722 = vadd.f32 0.0, %v1721
    %v1723 = vpop.f32.mrb[0].mxu0
    %1724 = vmatprep.mubr.f32.mxu0 0.0
    %1725 = vmatmul.mubr.f32.gmra.mrb[0].mxu0 %v1540
    %v1726 = vpop.f32.mrb[0].mxu0
    %v1727 = vadd.f32 0.0, %v1726
    %v1728 = vpop.f32.mrb[0].mxu0
    %1729 = vmatprep.mubr.f32.mxu0 0.0
    %1730 = vmatmul.mubr.f32.gmra.mrb[0].mxu0 %v1541
    %v1731 = vpop.f32.mrb[0].mxu0
    %v1732 = vadd.f32 0.0, %v1731
    %v1733 = vpop.f32.mrb[0].mxu0
    %1734 = vmatprep.mubr.f32.mxu0 0.0
    %1735 = vmatmul.mubr.f32.gmra.mrb[0].mxu0 %v1542
    %v1736 = vpop.f32.mrb[0].mxu0
    %v1737 = vadd.f32 0.0, %v1736
    %v1738 = vpop.f32.mrb[0].mxu0
    %1739 = vmatprep.mubr.f32.mxu0 0.0
    %1740 = vmatmul.mubr.f32.gmra.mrb[0].mxu0 %v1543
    %v1741 = vpop.f32.mrb[0].mxu0
    %v1742 = vadd.f32 0.0, %v1741
    %v1743 = vpop.f32.mrb[0].mxu0
    %1744 = vmatprep.mubr.f32.mxu0 0.0
    %1745 = vmatmul.mubr.f32.gmra.mrb[0].mxu0 %v1544
    %v1746 = vpop.f32.mrb[0].mxu0
    %v1747 = vadd.f32 0.0, %v1746
    %v1748 = vpop.f32.mrb[0].mxu0
    %1749 = vmatprep.mubr.f32.mxu0 0.0
    %1750 = vmatmul.mubr.f32.gmra.mrb[0].mxu0 %v1545
    %v1751 = vpop.f32.mrb[0].mxu0
    %v1752 = vadd.f32 0.0, %v1751
    %v1753 = vpop.f32.mrb[0].mxu0
    %1754 = vdwg.mxu0
    %1755 = vset.pattern.permute.xlu0 6
    %1756 = vperm.xlu0 %1755, %v659
    %v1757 = vpop.permute.xlu0 %1756
    %1759 = vset.pattern.permute.xlu0 6
    %1760 = vperm.xlu0 %1759, %v664
    %v1761 = vpop.permute.xlu0 %1760
    %1763 = vset.pattern.permute.xlu0 6
    %1764 = vperm.xlu0 %1763, %v669
    %v1765 = vpop.permute.xlu0 %1764
    %1767 = vset.pattern.permute.xlu0 6
    %1768 = vperm.xlu0 %1767, %v674
    %v1769 = vpop.permute.xlu0 %1768
    %1771 = vset.pattern.permute.xlu0 6
    %1772 = vperm.xlu0 %1771, %v679
    %v1773 = vpop.permute.xlu0 %1772
    %1775 = vset.pattern.permute.xlu0 6
    %1776 = vperm.xlu0 %1775, %v684
    %v1777 = vpop.permute.xlu0 %1776
    %1779 = vset.pattern.permute.xlu0 6
    %1780 = vperm.xlu0 %1779, %v689
    %v1781 = vpop.permute.xlu0 %1780
    %1783 = vset.pattern.permute.xlu0 6
    %1784 = vperm.xlu0 %1783, %v694
    %v1785 = vpop.permute.xlu0 %1784
    %1787 = vset.pattern.permute.xlu0 6
    %1788 = vperm.xlu0 %1787, %v699
    %v1789 = vpop.permute.xlu0 %1788
    %1791 = vset.pattern.permute.xlu0 6
    %1792 = vperm.xlu0 %1791, %v704
    %v1793 = vpop.permute.xlu0 %1792
    %1795 = vset.pattern.permute.xlu0 6
    %1796 = vperm.xlu0 %1795, %v709
    %v1797 = vpop.permute.xlu0 %1796
    %1799 = vset.pattern.permute.xlu0 6
    %1800 = vperm.xlu0 %1799, %v714
    %v1801 = vpop.permute.xlu0 %1800
    %1803 = vset.pattern.permute.xlu0 6
    %1804 = vperm.xlu0 %1803, %v719
    %v1805 = vpop.permute.xlu0 %1804
    %1807 = vset.pattern.permute.xlu0 6
    %1808 = vperm.xlu0 %1807, %v724
    %v1809 = vpop.permute.xlu0 %1808
    %1811 = vset.pattern.permute.xlu0 6
    %1812 = vperm.xlu0 %1811, %v729
    %v1813 = vpop.permute.xlu0 %1812
    %1815 = vset.pattern.permute.xlu0 6
    %1816 = vperm.xlu0 %1815, %v734
    %v1817 = vpop.permute.xlu0 %1816
    %v1819 = vlaneseq
    %v1820 = vshrl.u32 %v1819, 7
    %v1821 = vsub.s32 2, %v1820
    %v1822 = vrot.slane %v753, %v1821
    %v1823 = vadd.f32 %v1757, %v1822
    %v1824 = vadd.f32 %v1761, %v1822
    %v1825 = vadd.f32 %v1765, %v1822
    %v1826 = vadd.f32 %v1769, %v1822
    %v1827 = vadd.f32 %v1773, %v1822
    %v1828 = vadd.f32 %v1777, %v1822
    %v1829 = vadd.f32 %v1781, %v1822
    %v1830 = vadd.f32 %v1785, %v1822
    %v1831 = vadd.f32 %v1789, %v1822
    %v1832 = vadd.f32 %v1793, %v1822
    %v1833 = vadd.f32 %v1797, %v1822
    %v1834 = vadd.f32 %v1801, %v1822
    %v1835 = vadd.f32 %v1805, %v1822
    %v1836 = vadd.f32 %v1809, %v1822
    %v1837 = vadd.f32 %v1813, %v1822
    %v1838 = vadd.f32 %v1817, %v1822
    %vm1839 = vcmp.gt.f32.partialorder %v1823, 0.0
    %vm1840 = vcmp.gt.f32.partialorder %v1824, 0.0
    %vm1841 = vcmp.gt.f32.partialorder %v1825, 0.0
    %vm1842 = vcmp.gt.f32.partialorder %v1826, 0.0
    %vm1843 = vcmp.gt.f32.partialorder %v1827, 0.0
    %vm1844 = vcmp.gt.f32.partialorder %v1828, 0.0
    %vm1845 = vcmp.gt.f32.partialorder %v1829, 0.0
    %vm1846 = vcmp.gt.f32.partialorder %v1830, 0.0
    %vm1847 = vcmp.gt.f32.partialorder %v1831, 0.0
    %vm1848 = vcmp.gt.f32.partialorder %v1832, 0.0
    %vm1849 = vcmp.gt.f32.partialorder %v1833, 0.0
    %vm1850 = vcmp.gt.f32.partialorder %v1834, 0.0
    %vm1851 = vcmp.gt.f32.partialorder %v1835, 0.0
    %vm1852 = vcmp.gt.f32.partialorder %v1836, 0.0
    %vm1853 = vcmp.gt.f32.partialorder %v1837, 0.0
    %vm1854 = vcmp.gt.f32.partialorder %v1838, 0.0
    %v1855 = vmul.f32 %v1823, 0.2
    %v1856 = vmul.f32 %v1824, 0.2
    %v1857 = vmul.f32 %v1825, 0.2
    %v1858 = vmul.f32 %v1826, 0.2
    %v1859 = vmul.f32 %v1827, 0.2
    %v1860 = vmul.f32 %v1828, 0.2
    %v1861 = vmul.f32 %v1829, 0.2
    %v1862 = vmul.f32 %v1830, 0.2
    %v1863 = vmul.f32 %v1831, 0.2
    %v1864 = vmul.f32 %v1832, 0.2
    %v1865 = vmul.f32 %v1833, 0.2
    %v1866 = vmul.f32 %v1834, 0.2
    %v1867 = vmul.f32 %v1835, 0.2
    %v1868 = vmul.f32 %v1836, 0.2
    %v1869 = vmul.f32 %v1837, 0.2
    %v1870 = vmul.f32 %v1838, 0.2
    %v1871 = vsel %vm1839, %v1823, %v1855
    %v1872 = vsel %vm1840, %v1824, %v1856
    %v1873 = vsel %vm1841, %v1825, %v1857
    %v1874 = vsel %vm1842, %v1826, %v1858
    %v1875 = vsel %vm1843, %v1827, %v1859
    %v1876 = vsel %vm1844, %v1828, %v1860
    %v1877 = vsel %vm1845, %v1829, %v1861
    %v1878 = vsel %vm1846, %v1830, %v1862
    %v1879 = vsel %vm1847, %v1831, %v1863
    %v1880 = vsel %vm1848, %v1832, %v1864
    %v1881 = vsel %vm1849, %v1833, %v1865
    %v1882 = vsel %vm1850, %v1834, %v1866
    %v1883 = vsel %vm1851, %v1835, %v1867
    %v1884 = vsel %vm1852, %v1836, %v1868
    %v1885 = vsel %vm1853, %v1837, %v1869
    %v1886 = vsel %vm1854, %v1838, %v1870
    %v1887 = vsel %vm399, %v1871, -1e+30
    %v1888 = vsel %vm400, %v1872, -1e+30
    %v1889 = vsel %vm401, %v1873, -1e+30
    %v1890 = vsel %vm402, %v1874, -1e+30
    %v1891 = vsel %vm403, %v1875, -1e+30
    %v1892 = vsel %vm404, %v1876, -1e+30
    %v1893 = vsel %vm405, %v1877, -1e+30
    %v1894 = vsel %vm406, %v1878, -1e+30
    %v1895 = vsel %vm407, %v1879, -1e+30
    %v1896 = vsel %vm408, %v1880, -1e+30
    %v1897 = vsel %vm409, %v1881, -1e+30
    %v1898 = vsel %vm410, %v1882, -1e+30
    %v1899 = vsel %vm411, %v1883, -1e+30
    %v1900 = vsel %vm412, %v1884, -1e+30
    %v1901 = vsel %vm413, %v1885, -1e+30
    %v1902 = vsel %vm414, %v1886, -1e+30
    %1903 = vmax.xlane.f32.xlu0 %v1887
    %v1904 = vpop.xlane.xlu0 %1903
    %1905 = vmax.xlane.f32.xlu0 %v1888
    %v1906 = vpop.xlane.xlu0 %1905
    %1907 = vmax.xlane.f32.xlu0 %v1889
    %v1908 = vpop.xlane.xlu0 %1907
    %1909 = vmax.xlane.f32.xlu0 %v1890
    %v1910 = vpop.xlane.xlu0 %1909
    %1911 = vmax.xlane.f32.xlu0 %v1891
    %v1912 = vpop.xlane.xlu0 %1911
    %1913 = vmax.xlane.f32.xlu0 %v1892
    %v1914 = vpop.xlane.xlu0 %1913
    %1915 = vmax.xlane.f32.xlu0 %v1893
    %v1916 = vpop.xlane.xlu0 %1915
    %1917 = vmax.xlane.f32.xlu0 %v1894
    %v1918 = vpop.xlane.xlu0 %1917
    %1919 = vmax.xlane.f32.xlu0 %v1895
    %v1920 = vpop.xlane.xlu0 %1919
    %1921 = vmax.xlane.f32.xlu0 %v1896
    %v1922 = vpop.xlane.xlu0 %1921
    %1923 = vmax.xlane.f32.xlu0 %v1897
    %v1924 = vpop.xlane.xlu0 %1923
    %1925 = vmax.xlane.f32.xlu0 %v1898
    %v1926 = vpop.xlane.xlu0 %1925
    %1927 = vmax.xlane.f32.xlu0 %v1899
    %v1928 = vpop.xlane.xlu0 %1927
    %1929 = vmax.xlane.f32.xlu0 %v1900
    %v1930 = vpop.xlane.xlu0 %1929
    %1931 = vmax.xlane.f32.xlu0 %v1901
    %v1932 = vpop.xlane.xlu0 %1931
    %1933 = vmax.xlane.f32.xlu0 %v1902
    %v1934 = vpop.xlane.xlu0 %1933
    %v1935 = vsub.f32 %v1887, %v1904
    %v1936 = vsub.f32 %v1888, %v1906
    %v1937 = vsub.f32 %v1889, %v1908
    %v1938 = vsub.f32 %v1890, %v1910
    %v1939 = vsub.f32 %v1891, %v1912
    %v1940 = vsub.f32 %v1892, %v1914
    %v1941 = vsub.f32 %v1893, %v1916
    %v1942 = vsub.f32 %v1894, %v1918
    %v1943 = vsub.f32 %v1895, %v1920
    %v1944 = vsub.f32 %v1896, %v1922
    %v1945 = vsub.f32 %v1897, %v1924
    %v1946 = vsub.f32 %v1898, %v1926
    %v1947 = vsub.f32 %v1899, %v1928
    %v1948 = vsub.f32 %v1900, %v1930
    %v1949 = vsub.f32 %v1901, %v1932
    %v1950 = vsub.f32 %v1902, %v1934
    %v1951 = vmul.f32 %v1935, 1.442695
    %v1952 = vpow.pop %v1951
    %v1953 = vmul.f32 %v1936, 1.442695
    %v1954 = vpow.pop %v1953
    %v1955 = vmul.f32 %v1937, 1.442695
    %v1956 = vpow.pop %v1955
    %v1957 = vmul.f32 %v1938, 1.442695
    %v1958 = vpow.pop %v1957
    %v1959 = vmul.f32 %v1939, 1.442695
    %v1960 = vpow.pop %v1959
    %v1961 = vmul.f32 %v1940, 1.442695
    %v1962 = vpow.pop %v1961
    %v1963 = vmul.f32 %v1941, 1.442695
    %v1964 = vpow.pop %v1963
    %v1965 = vmul.f32 %v1942, 1.442695
    %v1966 = vpow.pop %v1965
    %v1967 = vmul.f32 %v1943, 1.442695
    %v1968 = vpow.pop %v1967
    %v1969 = vmul.f32 %v1944, 1.442695
    %v1970 = vpow.pop %v1969
    %v1971 = vmul.f32 %v1945, 1.442695
    %v1972 = vpow.pop %v1971
    %v1973 = vmul.f32 %v1946, 1.442695
    %v1974 = vpow.pop %v1973
    %v1975 = vmul.f32 %v1947, 1.442695
    %v1976 = vpow.pop %v1975
    %v1977 = vmul.f32 %v1948, 1.442695
    %v1978 = vpow.pop %v1977
    %v1979 = vmul.f32 %v1949, 1.442695
    %v1980 = vpow.pop %v1979
    %v1981 = vmul.f32 %v1950, 1.442695
    %v1982 = vpow.pop %v1981
    %v1983 = vmul.f32 %v1952, %v383
    %v1984 = vmul.f32 %v1954, %v384
    %v1985 = vmul.f32 %v1956, %v385
    %v1986 = vmul.f32 %v1958, %v386
    %v1987 = vmul.f32 %v1960, %v387
    %v1988 = vmul.f32 %v1962, %v388
    %v1989 = vmul.f32 %v1964, %v389
    %v1990 = vmul.f32 %v1966, %v390
    %v1991 = vmul.f32 %v1968, %v391
    %v1992 = vmul.f32 %v1970, %v392
    %v1993 = vmul.f32 %v1972, %v393
    %v1994 = vmul.f32 %v1974, %v394
    %v1995 = vmul.f32 %v1976, %v395
    %v1996 = vmul.f32 %v1978, %v396
    %v1997 = vmul.f32 %v1980, %v397
    %v1998 = vmul.f32 %v1982, %v398
    %1999 = vadd.xlane.f32.xlu0 %v1983
    %v2000 = vpop.xlane.xlu0 %1999
    %2001 = vadd.xlane.f32.xlu0 %v1984
    %v2002 = vpop.xlane.xlu0 %2001
    %2003 = vadd.xlane.f32.xlu0 %v1985
    %v2004 = vpop.xlane.xlu0 %2003
    %2005 = vadd.xlane.f32.xlu0 %v1986
    %v2006 = vpop.xlane.xlu0 %2005
    %2007 = vadd.xlane.f32.xlu0 %v1987
    %v2008 = vpop.xlane.xlu0 %2007
    %2009 = vadd.xlane.f32.xlu0 %v1988
    %v2010 = vpop.xlane.xlu0 %2009
    %2011 = vadd.xlane.f32.xlu0 %v1989
    %v2012 = vpop.xlane.xlu0 %2011
    %2013 = vadd.xlane.f32.xlu0 %v1990
    %v2014 = vpop.xlane.xlu0 %2013
    %2015 = vadd.xlane.f32.xlu0 %v1991
    %v2016 = vpop.xlane.xlu0 %2015
    %2017 = vadd.xlane.f32.xlu0 %v1992
    %v2018 = vpop.xlane.xlu0 %2017
    %2019 = vadd.xlane.f32.xlu0 %v1993
    %v2020 = vpop.xlane.xlu0 %2019
    %2021 = vadd.xlane.f32.xlu0 %v1994
    %v2022 = vpop.xlane.xlu0 %2021
    %2023 = vadd.xlane.f32.xlu0 %v1995
    %v2024 = vpop.xlane.xlu0 %2023
    %2025 = vadd.xlane.f32.xlu0 %v1996
    %v2026 = vpop.xlane.xlu0 %2025
    %2027 = vadd.xlane.f32.xlu0 %v1997
    %v2028 = vpop.xlane.xlu0 %2027
    %2029 = vadd.xlane.f32.xlu0 %v1998
    %v2030 = vpop.xlane.xlu0 %2029
    %v2031 = vrcp.pop %v2000
    %v2032 = vrcp.pop %v2002
    %v2033 = vrcp.pop %v2004
    %v2034 = vrcp.pop %v2006
    %v2035 = vrcp.pop %v2008
    %v2036 = vrcp.pop %v2010
    %v2037 = vrcp.pop %v2012
    %v2038 = vrcp.pop %v2014
    %v2039 = vrcp.pop %v2016
    %v2040 = vrcp.pop %v2018
    %v2041 = vrcp.pop %v2020
    %v2042 = vrcp.pop %v2022
    %v2043 = vrcp.pop %v2024
    %v2044 = vrcp.pop %v2026
    %v2045 = vrcp.pop %v2028
    %v2046 = vrcp.pop %v2030
    %v2047 = vmul.f32 %v1983, %v2031
    %v2048 = vmul.f32 %v1984, %v2032
    %v2049 = vmul.f32 %v1985, %v2033
    %v2050 = vmul.f32 %v1986, %v2034
    %v2051 = vmul.f32 %v1987, %v2035
    %v2052 = vmul.f32 %v1988, %v2036
    %v2053 = vmul.f32 %v1989, %v2037
    %v2054 = vmul.f32 %v1990, %v2038
    %v2055 = vmul.f32 %v1991, %v2039
    %v2056 = vmul.f32 %v1992, %v2040
    %v2057 = vmul.f32 %v1993, %v2041
    %v2058 = vmul.f32 %v1994, %v2042
    %v2059 = vmul.f32 %v1995, %v2043
    %v2060 = vmul.f32 %v1996, %v2044
    %v2061 = vmul.f32 %v1997, %v2045
    %v2062 = vmul.f32 %v1998, %v2046
    %2063 = vrot.lane.b32.xlu0 %v498, 64
    %v2064 = vpop.permute.xlu0 %2063
    %2065 = vrot.lane.b32.xlu0 %v503, 64
    %v2066 = vpop.permute.xlu0 %2065
    %2067 = vrot.lane.b32.xlu0 %v508, 64
    %v2068 = vpop.permute.xlu0 %2067
    %2069 = vrot.lane.b32.xlu0 %v513, 64
    %v2070 = vpop.permute.xlu0 %2069
    %2071 = vrot.lane.b32.xlu0 %v518, 64
    %v2072 = vpop.permute.xlu0 %2071
    %2073 = vrot.lane.b32.xlu0 %v523, 64
    %v2074 = vpop.permute.xlu0 %2073
    %2075 = vrot.lane.b32.xlu0 %v528, 64
    %v2076 = vpop.permute.xlu0 %2075
    %2077 = vrot.lane.b32.xlu0 %v533, 64
    %v2078 = vpop.permute.xlu0 %2077
    %2079 = vrot.lane.b32.xlu0 %v538, 64
    %v2080 = vpop.permute.xlu0 %2079
    %2081 = vrot.lane.b32.xlu0 %v543, 64
    %v2082 = vpop.permute.xlu0 %2081
    %2083 = vrot.lane.b32.xlu0 %v548, 64
    %v2084 = vpop.permute.xlu0 %2083
    %2085 = vrot.lane.b32.xlu0 %v553, 64
    %v2086 = vpop.permute.xlu0 %2085
    %2087 = vrot.lane.b32.xlu0 %v558, 64
    %v2088 = vpop.permute.xlu0 %2087
    %2089 = vrot.lane.b32.xlu0 %v563, 64
    %v2090 = vpop.permute.xlu0 %2089
    %2091 = vrot.lane.b32.xlu0 %v568, 64
    %v2092 = vpop.permute.xlu0 %2091
    %2093 = vrot.lane.b32.xlu0 %v573, 64
    %v2094 = vpop.permute.xlu0 %2093
    %2111 = vmatprep.subr.mxu0 0.0
    %2112 = vmatpush1.msra.mxu0 %v2064
    %2113 = vmatprep.subr.mxu0 0.0
    %2114 = vmatpush1.msra.mxu0 %v2066
    %2115 = vmatprep.subr.mxu0 0.0
    %2116 = vmatpush1.msra.mxu0 %v2068
    %2117 = vmatprep.subr.mxu0 0.0
    %2118 = vmatpush1.msra.mxu0 %v2070
    %2119 = vmatprep.subr.mxu0 0.0
    %2120 = vmatpush1.msra.mxu0 %v2072
    %2121 = vmatprep.subr.mxu0 0.0
    %2122 = vmatpush1.msra.mxu0 %v2074
    %2123 = vmatprep.subr.mxu0 0.0
    %2124 = vmatpush1.msra.mxu0 %v2076
    %2125 = vmatprep.subr.mxu0 0.0
    %2126 = vmatpush1.msra.mxu0 %v2078
    %2127 = vmatprep.subr.mxu0 0.0
    %2128 = vmatpush1.msra.mxu0 %v2080
    %2129 = vmatprep.subr.mxu0 0.0
    %2130 = vmatpush1.msra.mxu0 %v2082
    %2131 = vmatprep.subr.mxu0 0.0
    %2132 = vmatpush1.msra.mxu0 %v2084
    %2133 = vmatprep.subr.mxu0 0.0
    %2134 = vmatpush1.msra.mxu0 %v2086
    %2135 = vmatprep.subr.mxu0 0.0
    %2136 = vmatpush1.msra.mxu0 %v2088
    %2137 = vmatprep.subr.mxu0 0.0
    %2138 = vmatpush1.msra.mxu0 %v2090
    %2139 = vmatprep.subr.mxu0 0.0
    %2140 = vmatpush1.msra.mxu0 %v2092
    %2141 = vmatprep.subr.mxu0 0.0
    %2142 = vmatpush1.msra.mxu0 %v2094
    %2143 = vmatprep.subr.mxu0 0.0
    %2144 = vmatpush1.msra.mxu0 0.0
    %2145 = vmatprep.subr.mxu0 0.0
    %2146 = vmatpush1.msra.mxu0 0.0
    %2147 = vmatprep.subr.mxu0 0.0
    %2148 = vmatpush1.msra.mxu0 0.0
    %2149 = vmatprep.subr.mxu0 0.0
    %2150 = vmatpush1.msra.mxu0 0.0
    %2151 = vmatprep.subr.mxu0 0.0
    %2152 = vmatpush1.msra.mxu0 0.0
    %2153 = vmatprep.subr.mxu0 0.0
    %2154 = vmatpush1.msra.mxu0 0.0
    %2155 = vmatprep.subr.mxu0 0.0
    %2156 = vmatpush1.msra.mxu0 0.0
    %2157 = vmatprep.subr.mxu0 0.0
    %2158 = vmatpush1.msra.mxu0 0.0
    %2159 = vmatprep.subr.mxu0 0.0
    %2160 = vmatpush1.msra.mxu0 0.0
    %2161 = vmatprep.subr.mxu0 0.0
    %2162 = vmatpush1.msra.mxu0 0.0
    %2163 = vmatprep.subr.mxu0 0.0
    %2164 = vmatpush1.msra.mxu0 0.0
    %2165 = vmatprep.subr.mxu0 0.0
    %2166 = vmatpush1.msra.mxu0 0.0
    %2167 = vmatprep.subr.mxu0 0.0
    %2168 = vmatpush1.msra.mxu0 0.0
    %2169 = vmatprep.subr.mxu0 0.0
    %2170 = vmatpush1.msra.mxu0 0.0
    %2171 = vmatprep.subr.mxu0 0.0
    %2172 = vmatpush1.msra.mxu0 0.0
    %2173 = vmatprep.subr.mxu0 0.0
    %2174 = vmatpush1.msra.mxu0 0.0
    %2175 = vmatprep.mubr.f32.mxu0 0.0
    %2176 = vmatmul.mubr.f32.gmra.mrb[0].mxu0 %v2047
    %v2177 = vpop.f32.mrb[0].mxu0
    %v2178 = vadd.f32 0.0, %v2177
    %v2179 = vpop.f32.mrb[0].mxu0
    %2180 = vmatprep.mubr.f32.mxu0 0.0
    %2181 = vmatmul.mubr.f32.gmra.mrb[0].mxu0 %v2048
    %v2182 = vpop.f32.mrb[0].mxu0
    %v2183 = vadd.f32 0.0, %v2182
    %v2184 = vpop.f32.mrb[0].mxu0
    %2185 = vmatprep.mubr.f32.mxu0 0.0
    %2186 = vmatmul.mubr.f32.gmra.mrb[0].mxu0 %v2049
    %v2187 = vpop.f32.mrb[0].mxu0
    %v2188 = vadd.f32 0.0, %v2187
    %v2189 = vpop.f32.mrb[0].mxu0
    %2190 = vmatprep.mubr.f32.mxu0 0.0
    %2191 = vmatmul.mubr.f32.gmra.mrb[0].mxu0 %v2050
    %v2192 = vpop.f32.mrb[0].mxu0
    %v2193 = vadd.f32 0.0, %v2192
    %v2194 = vpop.f32.mrb[0].mxu0
    %2195 = vmatprep.mubr.f32.mxu0 0.0
    %2196 = vmatmul.mubr.f32.gmra.mrb[0].mxu0 %v2051
    %v2197 = vpop.f32.mrb[0].mxu0
    %v2198 = vadd.f32 0.0, %v2197
    %v2199 = vpop.f32.mrb[0].mxu0
    %2200 = vmatprep.mubr.f32.mxu0 0.0
    %2201 = vmatmul.mubr.f32.gmra.mrb[0].mxu0 %v2052
    %v2202 = vpop.f32.mrb[0].mxu0
    %v2203 = vadd.f32 0.0, %v2202
    %v2204 = vpop.f32.mrb[0].mxu0
    %2205 = vmatprep.mubr.f32.mxu0 0.0
    %2206 = vmatmul.mubr.f32.gmra.mrb[0].mxu0 %v2053
    %v2207 = vpop.f32.mrb[0].mxu0
    %v2208 = vadd.f32 0.0, %v2207
    %v2209 = vpop.f32.mrb[0].mxu0
    %2210 = vmatprep.mubr.f32.mxu0 0.0
    %2211 = vmatmul.mubr.f32.gmra.mrb[0].mxu0 %v2054
    %v2212 = vpop.f32.mrb[0].mxu0
    %v2213 = vadd.f32 0.0, %v2212
    %v2214 = vpop.f32.mrb[0].mxu0
    %2215 = vmatprep.mubr.f32.mxu0 0.0
    %2216 = vmatmul.mubr.f32.gmra.mrb[0].mxu0 %v2055
    %v2217 = vpop.f32.mrb[0].mxu0
    %v2218 = vadd.f32 0.0, %v2217
    %v2219 = vpop.f32.mrb[0].mxu0
    %2220 = vmatprep.mubr.f32.mxu0 0.0
    %2221 = vmatmul.mubr.f32.gmra.mrb[0].mxu0 %v2056
    %v2222 = vpop.f32.mrb[0].mxu0
    %v2223 = vadd.f32 0.0, %v2222
    %v2224 = vpop.f32.mrb[0].mxu0
    %2225 = vmatprep.mubr.f32.mxu0 0.0
    %2226 = vmatmul.mubr.f32.gmra.mrb[0].mxu0 %v2057
    %v2227 = vpop.f32.mrb[0].mxu0
    %v2228 = vadd.f32 0.0, %v2227
    %v2229 = vpop.f32.mrb[0].mxu0
    %2230 = vmatprep.mubr.f32.mxu0 0.0
    %2231 = vmatmul.mubr.f32.gmra.mrb[0].mxu0 %v2058
    %v2232 = vpop.f32.mrb[0].mxu0
    %v2233 = vadd.f32 0.0, %v2232
    %v2234 = vpop.f32.mrb[0].mxu0
    %2235 = vmatprep.mubr.f32.mxu0 0.0
    %2236 = vmatmul.mubr.f32.gmra.mrb[0].mxu0 %v2059
    %v2237 = vpop.f32.mrb[0].mxu0
    %v2238 = vadd.f32 0.0, %v2237
    %v2239 = vpop.f32.mrb[0].mxu0
    %2240 = vmatprep.mubr.f32.mxu0 0.0
    %2241 = vmatmul.mubr.f32.gmra.mrb[0].mxu0 %v2060
    %v2242 = vpop.f32.mrb[0].mxu0
    %v2243 = vadd.f32 0.0, %v2242
    %v2244 = vpop.f32.mrb[0].mxu0
    %2245 = vmatprep.mubr.f32.mxu0 0.0
    %2246 = vmatmul.mubr.f32.gmra.mrb[0].mxu0 %v2061
    %v2247 = vpop.f32.mrb[0].mxu0
    %v2248 = vadd.f32 0.0, %v2247
    %v2249 = vpop.f32.mrb[0].mxu0
    %2250 = vmatprep.mubr.f32.mxu0 0.0
    %2251 = vmatmul.mubr.f32.gmra.mrb[0].mxu0 %v2062
    %v2252 = vpop.f32.mrb[0].mxu0
    %v2253 = vadd.f32 0.0, %v2252
    %v2254 = vpop.f32.mrb[0].mxu0
    %2255 = vdwg.mxu0
    %2256 = vset.pattern.permute.xlu0 7
    %2257 = vperm.xlu0 %2256, %v659
    %v2258 = vpop.permute.xlu0 %2257
    %2260 = vset.pattern.permute.xlu0 7
    %2261 = vperm.xlu0 %2260, %v664
    %v2262 = vpop.permute.xlu0 %2261
    %2264 = vset.pattern.permute.xlu0 7
    %2265 = vperm.xlu0 %2264, %v669
    %v2266 = vpop.permute.xlu0 %2265
    %2268 = vset.pattern.permute.xlu0 7
    %2269 = vperm.xlu0 %2268, %v674
    %v2270 = vpop.permute.xlu0 %2269
    %2272 = vset.pattern.permute.xlu0 7
    %2273 = vperm.xlu0 %2272, %v679
    %v2274 = vpop.permute.xlu0 %2273
    %2276 = vset.pattern.permute.xlu0 7
    %2277 = vperm.xlu0 %2276, %v684
    %v2278 = vpop.permute.xlu0 %2277
    %2280 = vset.pattern.permute.xlu0 7
    %2281 = vperm.xlu0 %2280, %v689
    %v2282 = vpop.permute.xlu0 %2281
    %2284 = vset.pattern.permute.xlu0 7
    %2285 = vperm.xlu0 %2284, %v694
    %v2286 = vpop.permute.xlu0 %2285
    %2288 = vset.pattern.permute.xlu0 7
    %2289 = vperm.xlu0 %2288, %v699
    %v2290 = vpop.permute.xlu0 %2289
    %2292 = vset.pattern.permute.xlu0 7
    %2293 = vperm.xlu0 %2292, %v704
    %v2294 = vpop.permute.xlu0 %2293
    %2296 = vset.pattern.permute.xlu0 7
    %2297 = vperm.xlu0 %2296, %v709
    %v2298 = vpop.permute.xlu0 %2297
    %2300 = vset.pattern.permute.xlu0 7
    %2301 = vperm.xlu0 %2300, %v714
    %v2302 = vpop.permute.xlu0 %2301
    %2304 = vset.pattern.permute.xlu0 7
    %2305 = vperm.xlu0 %2304, %v719
    %v2306 = vpop.permute.xlu0 %2305
    %2308 = vset.pattern.permute.xlu0 7
    %2309 = vperm.xlu0 %2308, %v724
    %v2310 = vpop.permute.xlu0 %2309
    %2312 = vset.pattern.permute.xlu0 7
    %2313 = vperm.xlu0 %2312, %v729
    %v2314 = vpop.permute.xlu0 %2313
    %2316 = vset.pattern.permute.xlu0 7
    %2317 = vperm.xlu0 %2316, %v734
    %v2318 = vpop.permute.xlu0 %2317
    %v2320 = vlaneseq
    %v2321 = vshrl.u32 %v2320, 7
    %v2322 = vsub.s32 3, %v2321
    %v2323 = vrot.slane %v753, %v2322
    %v2324 = vadd.f32 %v2258, %v2323
    %v2325 = vadd.f32 %v2262, %v2323
    %v2326 = vadd.f32 %v2266, %v2323
    %v2327 = vadd.f32 %v2270, %v2323
    %v2328 = vadd.f32 %v2274, %v2323
    %v2329 = vadd.f32 %v2278, %v2323
    %v2330 = vadd.f32 %v2282, %v2323
    %v2331 = vadd.f32 %v2286, %v2323
    %v2332 = vadd.f32 %v2290, %v2323
    %v2333 = vadd.f32 %v2294, %v2323
    %v2334 = vadd.f32 %v2298, %v2323
    %v2335 = vadd.f32 %v2302, %v2323
    %v2336 = vadd.f32 %v2306, %v2323
    %v2337 = vadd.f32 %v2310, %v2323
    %v2338 = vadd.f32 %v2314, %v2323
    %v2339 = vadd.f32 %v2318, %v2323
    %vm2340 = vcmp.gt.f32.partialorder %v2324, 0.0
    %vm2341 = vcmp.gt.f32.partialorder %v2325, 0.0
    %vm2342 = vcmp.gt.f32.partialorder %v2326, 0.0
    %vm2343 = vcmp.gt.f32.partialorder %v2327, 0.0
    %vm2344 = vcmp.gt.f32.partialorder %v2328, 0.0
    %vm2345 = vcmp.gt.f32.partialorder %v2329, 0.0
    %vm2346 = vcmp.gt.f32.partialorder %v2330, 0.0
    %vm2347 = vcmp.gt.f32.partialorder %v2331, 0.0
    %vm2348 = vcmp.gt.f32.partialorder %v2332, 0.0
    %vm2349 = vcmp.gt.f32.partialorder %v2333, 0.0
    %vm2350 = vcmp.gt.f32.partialorder %v2334, 0.0
    %vm2351 = vcmp.gt.f32.partialorder %v2335, 0.0
    %vm2352 = vcmp.gt.f32.partialorder %v2336, 0.0
    %vm2353 = vcmp.gt.f32.partialorder %v2337, 0.0
    %vm2354 = vcmp.gt.f32.partialorder %v2338, 0.0
    %vm2355 = vcmp.gt.f32.partialorder %v2339, 0.0
    %v2356 = vmul.f32 %v2324, 0.2
    %v2357 = vmul.f32 %v2325, 0.2
    %v2358 = vmul.f32 %v2326, 0.2
    %v2359 = vmul.f32 %v2327, 0.2
    %v2360 = vmul.f32 %v2328, 0.2
    %v2361 = vmul.f32 %v2329, 0.2
    %v2362 = vmul.f32 %v2330, 0.2
    %v2363 = vmul.f32 %v2331, 0.2
    %v2364 = vmul.f32 %v2332, 0.2
    %v2365 = vmul.f32 %v2333, 0.2
    %v2366 = vmul.f32 %v2334, 0.2
    %v2367 = vmul.f32 %v2335, 0.2
    %v2368 = vmul.f32 %v2336, 0.2
    %v2369 = vmul.f32 %v2337, 0.2
    %v2370 = vmul.f32 %v2338, 0.2
    %v2371 = vmul.f32 %v2339, 0.2
    %v2372 = vsel %vm2340, %v2324, %v2356
    %v2373 = vsel %vm2341, %v2325, %v2357
    %v2374 = vsel %vm2342, %v2326, %v2358
    %v2375 = vsel %vm2343, %v2327, %v2359
    %v2376 = vsel %vm2344, %v2328, %v2360
    %v2377 = vsel %vm2345, %v2329, %v2361
    %v2378 = vsel %vm2346, %v2330, %v2362
    %v2379 = vsel %vm2347, %v2331, %v2363
    %v2380 = vsel %vm2348, %v2332, %v2364
    %v2381 = vsel %vm2349, %v2333, %v2365
    %v2382 = vsel %vm2350, %v2334, %v2366
    %v2383 = vsel %vm2351, %v2335, %v2367
    %v2384 = vsel %vm2352, %v2336, %v2368
    %v2385 = vsel %vm2353, %v2337, %v2369
    %v2386 = vsel %vm2354, %v2338, %v2370
    %v2387 = vsel %vm2355, %v2339, %v2371
    %v2388 = vsel %vm399, %v2372, -1e+30
    %v2389 = vsel %vm400, %v2373, -1e+30
    %v2390 = vsel %vm401, %v2374, -1e+30
    %v2391 = vsel %vm402, %v2375, -1e+30
    %v2392 = vsel %vm403, %v2376, -1e+30
    %v2393 = vsel %vm404, %v2377, -1e+30
    %v2394 = vsel %vm405, %v2378, -1e+30
    %v2395 = vsel %vm406, %v2379, -1e+30
    %v2396 = vsel %vm407, %v2380, -1e+30
    %v2397 = vsel %vm408, %v2381, -1e+30
    %v2398 = vsel %vm409, %v2382, -1e+30
    %v2399 = vsel %vm410, %v2383, -1e+30
    %v2400 = vsel %vm411, %v2384, -1e+30
    %v2401 = vsel %vm412, %v2385, -1e+30
    %v2402 = vsel %vm413, %v2386, -1e+30
    %v2403 = vsel %vm414, %v2387, -1e+30
    %2404 = vmax.xlane.f32.xlu0 %v2388
    %v2405 = vpop.xlane.xlu0 %2404
    %2406 = vmax.xlane.f32.xlu0 %v2389
    %v2407 = vpop.xlane.xlu0 %2406
    %2408 = vmax.xlane.f32.xlu0 %v2390
    %v2409 = vpop.xlane.xlu0 %2408
    %2410 = vmax.xlane.f32.xlu0 %v2391
    %v2411 = vpop.xlane.xlu0 %2410
    %2412 = vmax.xlane.f32.xlu0 %v2392
    %v2413 = vpop.xlane.xlu0 %2412
    %2414 = vmax.xlane.f32.xlu0 %v2393
    %v2415 = vpop.xlane.xlu0 %2414
    %2416 = vmax.xlane.f32.xlu0 %v2394
    %v2417 = vpop.xlane.xlu0 %2416
    %2418 = vmax.xlane.f32.xlu0 %v2395
    %v2419 = vpop.xlane.xlu0 %2418
    %2420 = vmax.xlane.f32.xlu0 %v2396
    %v2421 = vpop.xlane.xlu0 %2420
    %2422 = vmax.xlane.f32.xlu0 %v2397
    %v2423 = vpop.xlane.xlu0 %2422
    %2424 = vmax.xlane.f32.xlu0 %v2398
    %v2425 = vpop.xlane.xlu0 %2424
    %2426 = vmax.xlane.f32.xlu0 %v2399
    %v2427 = vpop.xlane.xlu0 %2426
    %2428 = vmax.xlane.f32.xlu0 %v2400
    %v2429 = vpop.xlane.xlu0 %2428
    %2430 = vmax.xlane.f32.xlu0 %v2401
    %v2431 = vpop.xlane.xlu0 %2430
    %2432 = vmax.xlane.f32.xlu0 %v2402
    %v2433 = vpop.xlane.xlu0 %2432
    %2434 = vmax.xlane.f32.xlu0 %v2403
    %v2435 = vpop.xlane.xlu0 %2434
    %v2436 = vsub.f32 %v2388, %v2405
    %v2437 = vsub.f32 %v2389, %v2407
    %v2438 = vsub.f32 %v2390, %v2409
    %v2439 = vsub.f32 %v2391, %v2411
    %v2440 = vsub.f32 %v2392, %v2413
    %v2441 = vsub.f32 %v2393, %v2415
    %v2442 = vsub.f32 %v2394, %v2417
    %v2443 = vsub.f32 %v2395, %v2419
    %v2444 = vsub.f32 %v2396, %v2421
    %v2445 = vsub.f32 %v2397, %v2423
    %v2446 = vsub.f32 %v2398, %v2425
    %v2447 = vsub.f32 %v2399, %v2427
    %v2448 = vsub.f32 %v2400, %v2429
    %v2449 = vsub.f32 %v2401, %v2431
    %v2450 = vsub.f32 %v2402, %v2433
    %v2451 = vsub.f32 %v2403, %v2435
    %v2452 = vmul.f32 %v2436, 1.442695
    %v2453 = vpow.pop %v2452
    %v2454 = vmul.f32 %v2437, 1.442695
    %v2455 = vpow.pop %v2454
    %v2456 = vmul.f32 %v2438, 1.442695
    %v2457 = vpow.pop %v2456
    %v2458 = vmul.f32 %v2439, 1.442695
    %v2459 = vpow.pop %v2458
    %v2460 = vmul.f32 %v2440, 1.442695
    %v2461 = vpow.pop %v2460
    %v2462 = vmul.f32 %v2441, 1.442695
    %v2463 = vpow.pop %v2462
    %v2464 = vmul.f32 %v2442, 1.442695
    %v2465 = vpow.pop %v2464
    %v2466 = vmul.f32 %v2443, 1.442695
    %v2467 = vpow.pop %v2466
    %v2468 = vmul.f32 %v2444, 1.442695
    %v2469 = vpow.pop %v2468
    %v2470 = vmul.f32 %v2445, 1.442695
    %v2471 = vpow.pop %v2470
    %v2472 = vmul.f32 %v2446, 1.442695
    %v2473 = vpow.pop %v2472
    %v2474 = vmul.f32 %v2447, 1.442695
    %v2475 = vpow.pop %v2474
    %v2476 = vmul.f32 %v2448, 1.442695
    %v2477 = vpow.pop %v2476
    %v2478 = vmul.f32 %v2449, 1.442695
    %v2479 = vpow.pop %v2478
    %v2480 = vmul.f32 %v2450, 1.442695
    %v2481 = vpow.pop %v2480
    %v2482 = vmul.f32 %v2451, 1.442695
    %v2483 = vpow.pop %v2482
    %v2484 = vmul.f32 %v2453, %v383
    %v2485 = vmul.f32 %v2455, %v384
    %v2486 = vmul.f32 %v2457, %v385
    %v2487 = vmul.f32 %v2459, %v386
    %v2488 = vmul.f32 %v2461, %v387
    %v2489 = vmul.f32 %v2463, %v388
    %v2490 = vmul.f32 %v2465, %v389
    %v2491 = vmul.f32 %v2467, %v390
    %v2492 = vmul.f32 %v2469, %v391
    %v2493 = vmul.f32 %v2471, %v392
    %v2494 = vmul.f32 %v2473, %v393
    %v2495 = vmul.f32 %v2475, %v394
    %v2496 = vmul.f32 %v2477, %v395
    %v2497 = vmul.f32 %v2479, %v396
    %v2498 = vmul.f32 %v2481, %v397
    %v2499 = vmul.f32 %v2483, %v398
    %2500 = vadd.xlane.f32.xlu0 %v2484
    %v2501 = vpop.xlane.xlu0 %2500
    %2502 = vadd.xlane.f32.xlu0 %v2485
    %v2503 = vpop.xlane.xlu0 %2502
    %2504 = vadd.xlane.f32.xlu0 %v2486
    %v2505 = vpop.xlane.xlu0 %2504
    %2506 = vadd.xlane.f32.xlu0 %v2487
    %v2507 = vpop.xlane.xlu0 %2506
    %2508 = vadd.xlane.f32.xlu0 %v2488
    %v2509 = vpop.xlane.xlu0 %2508
    %2510 = vadd.xlane.f32.xlu0 %v2489
    %v2511 = vpop.xlane.xlu0 %2510
    %2512 = vadd.xlane.f32.xlu0 %v2490
    %v2513 = vpop.xlane.xlu0 %2512
    %2514 = vadd.xlane.f32.xlu0 %v2491
    %v2515 = vpop.xlane.xlu0 %2514
    %2516 = vadd.xlane.f32.xlu0 %v2492
    %v2517 = vpop.xlane.xlu0 %2516
    %2518 = vadd.xlane.f32.xlu0 %v2493
    %v2519 = vpop.xlane.xlu0 %2518
    %2520 = vadd.xlane.f32.xlu0 %v2494
    %v2521 = vpop.xlane.xlu0 %2520
    %2522 = vadd.xlane.f32.xlu0 %v2495
    %v2523 = vpop.xlane.xlu0 %2522
    %2524 = vadd.xlane.f32.xlu0 %v2496
    %v2525 = vpop.xlane.xlu0 %2524
    %2526 = vadd.xlane.f32.xlu0 %v2497
    %v2527 = vpop.xlane.xlu0 %2526
    %2528 = vadd.xlane.f32.xlu0 %v2498
    %v2529 = vpop.xlane.xlu0 %2528
    %2530 = vadd.xlane.f32.xlu0 %v2499
    %v2531 = vpop.xlane.xlu0 %2530
    %v2532 = vrcp.pop %v2501
    %v2533 = vrcp.pop %v2503
    %v2534 = vrcp.pop %v2505
    %v2535 = vrcp.pop %v2507
    %v2536 = vrcp.pop %v2509
    %v2537 = vrcp.pop %v2511
    %v2538 = vrcp.pop %v2513
    %v2539 = vrcp.pop %v2515
    %v2540 = vrcp.pop %v2517
    %v2541 = vrcp.pop %v2519
    %v2542 = vrcp.pop %v2521
    %v2543 = vrcp.pop %v2523
    %v2544 = vrcp.pop %v2525
    %v2545 = vrcp.pop %v2527
    %v2546 = vrcp.pop %v2529
    %v2547 = vrcp.pop %v2531
    %v2548 = vmul.f32 %v2484, %v2532
    %v2549 = vmul.f32 %v2485, %v2533
    %v2550 = vmul.f32 %v2486, %v2534
    %v2551 = vmul.f32 %v2487, %v2535
    %v2552 = vmul.f32 %v2488, %v2536
    %v2553 = vmul.f32 %v2489, %v2537
    %v2554 = vmul.f32 %v2490, %v2538
    %v2555 = vmul.f32 %v2491, %v2539
    %v2556 = vmul.f32 %v2492, %v2540
    %v2557 = vmul.f32 %v2493, %v2541
    %v2558 = vmul.f32 %v2494, %v2542
    %v2559 = vmul.f32 %v2495, %v2543
    %v2560 = vmul.f32 %v2496, %v2544
    %v2561 = vmul.f32 %v2497, %v2545
    %v2562 = vmul.f32 %v2498, %v2546
    %v2563 = vmul.f32 %v2499, %v2547
    %2564 = vrot.lane.b32.xlu0 %v498, 32
    %v2565 = vpop.permute.xlu0 %2564
    %2566 = vrot.lane.b32.xlu0 %v503, 32
    %v2567 = vpop.permute.xlu0 %2566
    %2568 = vrot.lane.b32.xlu0 %v508, 32
    %v2569 = vpop.permute.xlu0 %2568
    %2570 = vrot.lane.b32.xlu0 %v513, 32
    %v2571 = vpop.permute.xlu0 %2570
    %2572 = vrot.lane.b32.xlu0 %v518, 32
    %v2573 = vpop.permute.xlu0 %2572
    %2574 = vrot.lane.b32.xlu0 %v523, 32
    %v2575 = vpop.permute.xlu0 %2574
    %2576 = vrot.lane.b32.xlu0 %v528, 32
    %v2577 = vpop.permute.xlu0 %2576
    %2578 = vrot.lane.b32.xlu0 %v533, 32
    %v2579 = vpop.permute.xlu0 %2578
    %2580 = vrot.lane.b32.xlu0 %v538, 32
    %v2581 = vpop.permute.xlu0 %2580
    %2582 = vrot.lane.b32.xlu0 %v543, 32
    %v2583 = vpop.permute.xlu0 %2582
    %2584 = vrot.lane.b32.xlu0 %v548, 32
    %v2585 = vpop.permute.xlu0 %2584
    %2586 = vrot.lane.b32.xlu0 %v553, 32
    %v2587 = vpop.permute.xlu0 %2586
    %2588 = vrot.lane.b32.xlu0 %v558, 32
    %v2589 = vpop.permute.xlu0 %2588
    %2590 = vrot.lane.b32.xlu0 %v563, 32
    %v2591 = vpop.permute.xlu0 %2590
    %2592 = vrot.lane.b32.xlu0 %v568, 32
    %v2593 = vpop.permute.xlu0 %2592
    %2594 = vrot.lane.b32.xlu0 %v573, 32
    %v2595 = vpop.permute.xlu0 %2594
    %2612 = vmatprep.subr.mxu0 0.0
    %2613 = vmatpush1.msra.mxu0 %v2565
    %2614 = vmatprep.subr.mxu0 0.0
    %2615 = vmatpush1.msra.mxu0 %v2567
    %2616 = vmatprep.subr.mxu0 0.0
    %2617 = vmatpush1.msra.mxu0 %v2569
    %2618 = vmatprep.subr.mxu0 0.0
    %2619 = vmatpush1.msra.mxu0 %v2571
    %2620 = vmatprep.subr.mxu0 0.0
    %2621 = vmatpush1.msra.mxu0 %v2573
    %2622 = vmatprep.subr.mxu0 0.0
    %2623 = vmatpush1.msra.mxu0 %v2575
    %2624 = vmatprep.subr.mxu0 0.0
    %2625 = vmatpush1.msra.mxu0 %v2577
    %2626 = vmatprep.subr.mxu0 0.0
    %2627 = vmatpush1.msra.mxu0 %v2579
    %2628 = vmatprep.subr.mxu0 0.0
    %2629 = vmatpush1.msra.mxu0 %v2581
    %2630 = vmatprep.subr.mxu0 0.0
    %2631 = vmatpush1.msra.mxu0 %v2583
    %2632 = vmatprep.subr.mxu0 0.0
    %2633 = vmatpush1.msra.mxu0 %v2585
    %2634 = vmatprep.subr.mxu0 0.0
    %2635 = vmatpush1.msra.mxu0 %v2587
    %2636 = vmatprep.subr.mxu0 0.0
    %2637 = vmatpush1.msra.mxu0 %v2589
    %2638 = vmatprep.subr.mxu0 0.0
    %2639 = vmatpush1.msra.mxu0 %v2591
    %2640 = vmatprep.subr.mxu0 0.0
    %2641 = vmatpush1.msra.mxu0 %v2593
    %2642 = vmatprep.subr.mxu0 0.0
    %2643 = vmatpush1.msra.mxu0 %v2595
    %2644 = vmatprep.subr.mxu0 0.0
    %2645 = vmatpush1.msra.mxu0 0.0
    %2646 = vmatprep.subr.mxu0 0.0
    %2647 = vmatpush1.msra.mxu0 0.0
    %2648 = vmatprep.subr.mxu0 0.0
    %2649 = vmatpush1.msra.mxu0 0.0
    %2650 = vmatprep.subr.mxu0 0.0
    %2651 = vmatpush1.msra.mxu0 0.0
    %2652 = vmatprep.subr.mxu0 0.0
    %2653 = vmatpush1.msra.mxu0 0.0
    %2654 = vmatprep.subr.mxu0 0.0
    %2655 = vmatpush1.msra.mxu0 0.0
    %2656 = vmatprep.subr.mxu0 0.0
    %2657 = vmatpush1.msra.mxu0 0.0
    %2658 = vmatprep.subr.mxu0 0.0
    %2659 = vmatpush1.msra.mxu0 0.0
    %2660 = vmatprep.subr.mxu0 0.0
    %2661 = vmatpush1.msra.mxu0 0.0
    %2662 = vmatprep.subr.mxu0 0.0
    %2663 = vmatpush1.msra.mxu0 0.0
    %2664 = vmatprep.subr.mxu0 0.0
    %2665 = vmatpush1.msra.mxu0 0.0
    %2666 = vmatprep.subr.mxu0 0.0
    %2667 = vmatpush1.msra.mxu0 0.0
    %2668 = vmatprep.subr.mxu0 0.0
    %2669 = vmatpush1.msra.mxu0 0.0
    %2670 = vmatprep.subr.mxu0 0.0
    %2671 = vmatpush1.msra.mxu0 0.0
    %2672 = vmatprep.subr.mxu0 0.0
    %2673 = vmatpush1.msra.mxu0 0.0
    %2674 = vmatprep.subr.mxu0 0.0
    %2675 = vmatpush1.msra.mxu0 0.0
    %2676 = vmatprep.mubr.f32.mxu0 0.0
    %2677 = vmatmul.mubr.f32.gmra.mrb[0].mxu0 %v2548
    %v2678 = vpop.f32.mrb[0].mxu0
    %v2679 = vadd.f32 0.0, %v2678
    %v2680 = vpop.f32.mrb[0].mxu0
    %2681 = vmatprep.mubr.f32.mxu0 0.0
    %2682 = vmatmul.mubr.f32.gmra.mrb[0].mxu0 %v2549
    %v2683 = vpop.f32.mrb[0].mxu0
    %v2684 = vadd.f32 0.0, %v2683
    %v2685 = vpop.f32.mrb[0].mxu0
    %2686 = vmatprep.mubr.f32.mxu0 0.0
    %2687 = vmatmul.mubr.f32.gmra.mrb[0].mxu0 %v2550
    %v2688 = vpop.f32.mrb[0].mxu0
    %v2689 = vadd.f32 0.0, %v2688
    %v2690 = vpop.f32.mrb[0].mxu0
    %2691 = vmatprep.mubr.f32.mxu0 0.0
    %2692 = vmatmul.mubr.f32.gmra.mrb[0].mxu0 %v2551
    %v2693 = vpop.f32.mrb[0].mxu0
    %v2694 = vadd.f32 0.0, %v2693
    %v2695 = vpop.f32.mrb[0].mxu0
    %2696 = vmatprep.mubr.f32.mxu0 0.0
    %2697 = vmatmul.mubr.f32.gmra.mrb[0].mxu0 %v2552
    %v2698 = vpop.f32.mrb[0].mxu0
    %v2699 = vadd.f32 0.0, %v2698
    %v2700 = vpop.f32.mrb[0].mxu0
    %2701 = vmatprep.mubr.f32.mxu0 0.0
    %2702 = vmatmul.mubr.f32.gmra.mrb[0].mxu0 %v2553
    %v2703 = vpop.f32.mrb[0].mxu0
    %v2704 = vadd.f32 0.0, %v2703
    %v2705 = vpop.f32.mrb[0].mxu0
    %2706 = vmatprep.mubr.f32.mxu0 0.0
    %2707 = vmatmul.mubr.f32.gmra.mrb[0].mxu0 %v2554
    %v2708 = vpop.f32.mrb[0].mxu0
    %v2709 = vadd.f32 0.0, %v2708
    %v2710 = vpop.f32.mrb[0].mxu0
    %2711 = vmatprep.mubr.f32.mxu0 0.0
    %2712 = vmatmul.mubr.f32.gmra.mrb[0].mxu0 %v2555
    %v2713 = vpop.f32.mrb[0].mxu0
    %v2714 = vadd.f32 0.0, %v2713
    %v2715 = vpop.f32.mrb[0].mxu0
    %2716 = vmatprep.mubr.f32.mxu0 0.0
    %2717 = vmatmul.mubr.f32.gmra.mrb[0].mxu0 %v2556
    %v2718 = vpop.f32.mrb[0].mxu0
    %v2719 = vadd.f32 0.0, %v2718
    %v2720 = vpop.f32.mrb[0].mxu0
    %2721 = vmatprep.mubr.f32.mxu0 0.0
    %2722 = vmatmul.mubr.f32.gmra.mrb[0].mxu0 %v2557
    %v2723 = vpop.f32.mrb[0].mxu0
    %v2724 = vadd.f32 0.0, %v2723
    %v2725 = vpop.f32.mrb[0].mxu0
    %2726 = vmatprep.mubr.f32.mxu0 0.0
    %2727 = vmatmul.mubr.f32.gmra.mrb[0].mxu0 %v2558
    %v2728 = vpop.f32.mrb[0].mxu0
    %v2729 = vadd.f32 0.0, %v2728
    %v2730 = vpop.f32.mrb[0].mxu0
    %2731 = vmatprep.mubr.f32.mxu0 0.0
    %2732 = vmatmul.mubr.f32.gmra.mrb[0].mxu0 %v2559
    %v2733 = vpop.f32.mrb[0].mxu0
    %v2734 = vadd.f32 0.0, %v2733
    %v2735 = vpop.f32.mrb[0].mxu0
    %2736 = vmatprep.mubr.f32.mxu0 0.0
    %2737 = vmatmul.mubr.f32.gmra.mrb[0].mxu0 %v2560
    %v2738 = vpop.f32.mrb[0].mxu0
    %v2739 = vadd.f32 0.0, %v2738
    %v2740 = vpop.f32.mrb[0].mxu0
    %2741 = vmatprep.mubr.f32.mxu0 0.0
    %2742 = vmatmul.mubr.f32.gmra.mrb[0].mxu0 %v2561
    %v2743 = vpop.f32.mrb[0].mxu0
    %v2744 = vadd.f32 0.0, %v2743
    %v2745 = vpop.f32.mrb[0].mxu0
    %2746 = vmatprep.mubr.f32.mxu0 0.0
    %2747 = vmatmul.mubr.f32.gmra.mrb[0].mxu0 %v2562
    %v2748 = vpop.f32.mrb[0].mxu0
    %v2749 = vadd.f32 0.0, %v2748
    %v2750 = vpop.f32.mrb[0].mxu0
    %2751 = vmatprep.mubr.f32.mxu0 0.0
    %2752 = vmatmul.mubr.f32.gmra.mrb[0].mxu0 %v2563
    %v2753 = vpop.f32.mrb[0].mxu0
    %v2754 = vadd.f32 0.0, %v2753
    %v2755 = vpop.f32.mrb[0].mxu0
    %2756 = vdwg.mxu0
    %2773 = vrot.lane.b32.xlu0 %v1677, 32
    %v2774 = vpop.permute.xlu0 %2773
    %2775 = vrot.lane.b32.xlu0 %v1682, 32
    %v2776 = vpop.permute.xlu0 %2775
    %2777 = vrot.lane.b32.xlu0 %v1687, 32
    %v2778 = vpop.permute.xlu0 %2777
    %2779 = vrot.lane.b32.xlu0 %v1692, 32
    %v2780 = vpop.permute.xlu0 %2779
    %2781 = vrot.lane.b32.xlu0 %v1697, 32
    %v2782 = vpop.permute.xlu0 %2781
    %2783 = vrot.lane.b32.xlu0 %v1702, 32
    %v2784 = vpop.permute.xlu0 %2783
    %2785 = vrot.lane.b32.xlu0 %v1707, 32
    %v2786 = vpop.permute.xlu0 %2785
    %2787 = vrot.lane.b32.xlu0 %v1712, 32
    %v2788 = vpop.permute.xlu0 %2787
    %2789 = vrot.lane.b32.xlu0 %v1717, 32
    %v2790 = vpop.permute.xlu0 %2789
    %2791 = vrot.lane.b32.xlu0 %v1722, 32
    %v2792 = vpop.permute.xlu0 %2791
    %2793 = vrot.lane.b32.xlu0 %v1727, 32
    %v2794 = vpop.permute.xlu0 %2793
    %2795 = vrot.lane.b32.xlu0 %v1732, 32
    %v2796 = vpop.permute.xlu0 %2795
    %2797 = vrot.lane.b32.xlu0 %v1737, 32
    %v2798 = vpop.permute.xlu0 %2797
    %2799 = vrot.lane.b32.xlu0 %v1742, 32
    %v2800 = vpop.permute.xlu0 %2799
    %2801 = vrot.lane.b32.xlu0 %v1747, 32
    %v2802 = vpop.permute.xlu0 %2801
    %2803 = vrot.lane.b32.xlu0 %v1752, 32
    %v2804 = vpop.permute.xlu0 %2803
    %2837 = vrot.lane.b32.xlu0 %v2178, 64
    %v2838 = vpop.permute.xlu0 %2837
    %2839 = vrot.lane.b32.xlu0 %v2183, 64
    %v2840 = vpop.permute.xlu0 %2839
    %2841 = vrot.lane.b32.xlu0 %v2188, 64
    %v2842 = vpop.permute.xlu0 %2841
    %2843 = vrot.lane.b32.xlu0 %v2193, 64
    %v2844 = vpop.permute.xlu0 %2843
    %2845 = vrot.lane.b32.xlu0 %v2198, 64
    %v2846 = vpop.permute.xlu0 %2845
    %2847 = vrot.lane.b32.xlu0 %v2203, 64
    %v2848 = vpop.permute.xlu0 %2847
    %2849 = vrot.lane.b32.xlu0 %v2208, 64
    %v2850 = vpop.permute.xlu0 %2849
    %2851 = vrot.lane.b32.xlu0 %v2213, 64
    %v2852 = vpop.permute.xlu0 %2851
    %2853 = vrot.lane.b32.xlu0 %v2218, 64
    %v2854 = vpop.permute.xlu0 %2853
    %2855 = vrot.lane.b32.xlu0 %v2223, 64
    %v2856 = vpop.permute.xlu0 %2855
    %2857 = vrot.lane.b32.xlu0 %v2228, 64
    %v2858 = vpop.permute.xlu0 %2857
    %2859 = vrot.lane.b32.xlu0 %v2233, 64
    %v2860 = vpop.permute.xlu0 %2859
    %2861 = vrot.lane.b32.xlu0 %v2238, 64
    %v2862 = vpop.permute.xlu0 %2861
    %2863 = vrot.lane.b32.xlu0 %v2243, 64
    %v2864 = vpop.permute.xlu0 %2863
    %2865 = vrot.lane.b32.xlu0 %v2248, 64
    %v2866 = vpop.permute.xlu0 %2865
    %2867 = vrot.lane.b32.xlu0 %v2253, 64
    %v2868 = vpop.permute.xlu0 %2867
    %2901 = vrot.lane.b32.xlu0 %v2679, 96
    %v2902 = vpop.permute.xlu0 %2901
    %2903 = vrot.lane.b32.xlu0 %v2684, 96
    %v2904 = vpop.permute.xlu0 %2903
    %2905 = vrot.lane.b32.xlu0 %v2689, 96
    %v2906 = vpop.permute.xlu0 %2905
    %2907 = vrot.lane.b32.xlu0 %v2694, 96
    %v2908 = vpop.permute.xlu0 %2907
    %2909 = vrot.lane.b32.xlu0 %v2699, 96
    %v2910 = vpop.permute.xlu0 %2909
    %2911 = vrot.lane.b32.xlu0 %v2704, 96
    %v2912 = vpop.permute.xlu0 %2911
    %2913 = vrot.lane.b32.xlu0 %v2709, 96
    %v2914 = vpop.permute.xlu0 %2913
    %2915 = vrot.lane.b32.xlu0 %v2714, 96
    %v2916 = vpop.permute.xlu0 %2915
    %2917 = vrot.lane.b32.xlu0 %v2719, 96
    %v2918 = vpop.permute.xlu0 %2917
    %2919 = vrot.lane.b32.xlu0 %v2724, 96
    %v2920 = vpop.permute.xlu0 %2919
    %2921 = vrot.lane.b32.xlu0 %v2729, 96
    %v2922 = vpop.permute.xlu0 %2921
    %2923 = vrot.lane.b32.xlu0 %v2734, 96
    %v2924 = vpop.permute.xlu0 %2923
    %2925 = vrot.lane.b32.xlu0 %v2739, 96
    %v2926 = vpop.permute.xlu0 %2925
    %2927 = vrot.lane.b32.xlu0 %v2744, 96
    %v2928 = vpop.permute.xlu0 %2927
    %2929 = vrot.lane.b32.xlu0 %v2749, 96
    %v2930 = vpop.permute.xlu0 %2929
    %2931 = vrot.lane.b32.xlu0 %v2754, 96
    %v2932 = vpop.permute.xlu0 %2931
    %vm2949 = vcmask 261120
    %v2950 = vsel %vm2949, %v1160, %v2774
    %v2951 = vsel %vm2949, %v1165, %v2776
    %v2952 = vsel %vm2949, %v1170, %v2778
    %v2953 = vsel %vm2949, %v1175, %v2780
    %v2954 = vsel %vm2949, %v1180, %v2782
    %v2955 = vsel %vm2949, %v1185, %v2784
    %v2956 = vsel %vm2949, %v1190, %v2786
    %v2957 = vsel %vm2949, %v1195, %v2788
    %v2958 = vsel %vm2949, %v1200, %v2790
    %v2959 = vsel %vm2949, %v1205, %v2792
    %v2960 = vsel %vm2949, %v1210, %v2794
    %v2961 = vsel %vm2949, %v1215, %v2796
    %v2962 = vsel %vm2949, %v1220, %v2798
    %v2963 = vsel %vm2949, %v1225, %v2800
    %v2964 = vsel %vm2949, %v1230, %v2802
    %v2965 = vsel %vm2949, %v1235, %v2804
    %vm2966 = vcmask 523264
    %v2967 = vsel %vm2966, %v2950, %v2838
    %v2968 = vsel %vm2966, %v2951, %v2840
    %v2969 = vsel %vm2966, %v2952, %v2842
    %v2970 = vsel %vm2966, %v2953, %v2844
    %v2971 = vsel %vm2966, %v2954, %v2846
    %v2972 = vsel %vm2966, %v2955, %v2848
    %v2973 = vsel %vm2966, %v2956, %v2850
    %v2974 = vsel %vm2966, %v2957, %v2852
    %v2975 = vsel %vm2966, %v2958, %v2854
    %v2976 = vsel %vm2966, %v2959, %v2856
    %v2977 = vsel %vm2966, %v2960, %v2858
    %v2978 = vsel %vm2966, %v2961, %v2860
    %v2979 = vsel %vm2966, %v2962, %v2862
    %v2980 = vsel %vm2966, %v2963, %v2864
    %v2981 = vsel %vm2966, %v2964, %v2866
    %v2982 = vsel %vm2966, %v2965, %v2868
    %vm2983 = vcmask 785408
    %v2984 = vsel %vm2983, %v2967, %v2902
    %v2985 = vsel %vm2983, %v2968, %v2904
    %v2986 = vsel %vm2983, %v2969, %v2906
    %v2987 = vsel %vm2983, %v2970, %v2908
    %v2988 = vsel %vm2983, %v2971, %v2910
    %v2989 = vsel %vm2983, %v2972, %v2912
    %v2990 = vsel %vm2983, %v2973, %v2914
    %v2991 = vsel %vm2983, %v2974, %v2916
    %v2992 = vsel %vm2983, %v2975, %v2918
    %v2993 = vsel %vm2983, %v2976, %v2920
    %v2994 = vsel %vm2983, %v2977, %v2922
    %v2995 = vsel %vm2983, %v2978, %v2924
    %v2996 = vsel %vm2983, %v2979, %v2926
    %v2997 = vsel %vm2983, %v2980, %v2928
    %v2998 = vsel %vm2983, %v2981, %v2930
    %v2999 = vsel %vm2983, %v2982, %v2932
    %v3000 = vld [vmem:[%s6] sm:$0x1]
    %v3002 = vlaneseq
    %v3003 = vshrl.u32 %v3002, 7
    %v3004 = vsub.s32 0, %v3003
    %v3005 = vrot.slane %v3000, %v3004
    %v3007 = vadd.f32 %v2984, %v3005
    %v3008 = vadd.f32 %v2985, %v3005
    %v3009 = vadd.f32 %v2986, %v3005
    %v3010 = vadd.f32 %v2987, %v3005
    %v3011 = vadd.f32 %v2988, %v3005
    %v3012 = vadd.f32 %v2989, %v3005
    %v3013 = vadd.f32 %v2990, %v3005
    %v3014 = vadd.f32 %v2991, %v3005
    %v3015 = vadd.f32 %v2992, %v3005
    %v3016 = vadd.f32 %v2993, %v3005
    %v3017 = vadd.f32 %v2994, %v3005
    %v3018 = vadd.f32 %v2995, %v3005
    %v3019 = vadd.f32 %v2996, %v3005
    %v3020 = vadd.f32 %v2997, %v3005
    %v3021 = vadd.f32 %v2998, %v3005
    %v3022 = vadd.f32 %v2999, %v3005
    %v3023 = vld [vmem:[#allocation11] sm:$0xff]
    %v3024 = vld [vmem:[#allocation11 + $0x8] sm:$0xff]
    %v3025 = vld [vmem:[#allocation11 + $0x10] sm:$0xff]
    %v3026 = vld [vmem:[#allocation11 + $0x18] sm:$0xff]
    %v3027 = vld [vmem:[#allocation11 + $0x20] sm:$0xff]
    %v3028 = vld [vmem:[#allocation11 + $0x28] sm:$0xff]
    %v3029 = vld [vmem:[#allocation11 + $0x30] sm:$0xff]
    %v3030 = vld [vmem:[#allocation11 + $0x38] sm:$0xff]
    %v3031 = vld [vmem:[#allocation11 + $0x40] sm:$0xff]
    %v3032 = vld [vmem:[#allocation11 + $0x48] sm:$0xff]
    %v3033 = vld [vmem:[#allocation11 + $0x50] sm:$0xff]
    %v3034 = vld [vmem:[#allocation11 + $0x58] sm:$0xff]
    %v3035 = vld [vmem:[#allocation11 + $0x60] sm:$0xff]
    %v3036 = vld [vmem:[#allocation11 + $0x68] sm:$0xff]
    %v3037 = vld [vmem:[#allocation11 + $0x70] sm:$0xff]
    %v3038 = vld [vmem:[#allocation11 + $0x78] sm:$0xff]
    %3039 = vmatprep.subr.mxu0 0.0
    %3040 = vmatpush1.msra.mxu0 %v3023
    %3041 = vmatprep.subr.mxu0 0.0
    %3042 = vmatpush1.msra.mxu0 %v3024
    %3043 = vmatprep.subr.mxu0 0.0
    %3044 = vmatpush1.msra.mxu0 %v3025
    %3045 = vmatprep.subr.mxu0 0.0
    %3046 = vmatpush1.msra.mxu0 %v3026
    %3047 = vmatprep.subr.mxu0 0.0
    %3048 = vmatpush1.msra.mxu0 %v3027
    %3049 = vmatprep.subr.mxu0 0.0
    %3050 = vmatpush1.msra.mxu0 %v3028
    %3051 = vmatprep.subr.mxu0 0.0
    %3052 = vmatpush1.msra.mxu0 %v3029
    %3053 = vmatprep.subr.mxu0 0.0
    %3054 = vmatpush1.msra.mxu0 %v3030
    %3055 = vmatprep.subr.mxu0 0.0
    %3056 = vmatpush1.msra.mxu0 %v3031
    %3057 = vmatprep.subr.mxu0 0.0
    %3058 = vmatpush1.msra.mxu0 %v3032
    %3059 = vmatprep.subr.mxu0 0.0
    %3060 = vmatpush1.msra.mxu0 %v3033
    %3061 = vmatprep.subr.mxu0 0.0
    %3062 = vmatpush1.msra.mxu0 %v3034
    %3063 = vmatprep.subr.mxu0 0.0
    %3064 = vmatpush1.msra.mxu0 %v3035
    %3065 = vmatprep.subr.mxu0 0.0
    %3066 = vmatpush1.msra.mxu0 %v3036
    %3067 = vmatprep.subr.mxu0 0.0
    %3068 = vmatpush1.msra.mxu0 %v3037
    %3069 = vmatprep.subr.mxu0 0.0
    %3070 = vmatpush1.msra.mxu0 %v3038
    %3071 = vmatprep.subr.mxu0 0.0
    %3072 = vmatpush1.msra.mxu0 0.0
    %3073 = vmatprep.subr.mxu0 0.0
    %3074 = vmatpush1.msra.mxu0 0.0
    %3075 = vmatprep.subr.mxu0 0.0
    %3076 = vmatpush1.msra.mxu0 0.0
    %3077 = vmatprep.subr.mxu0 0.0
    %3078 = vmatpush1.msra.mxu0 0.0
    %3079 = vmatprep.subr.mxu0 0.0
    %3080 = vmatpush1.msra.mxu0 0.0
    %3081 = vmatprep.subr.mxu0 0.0
    %3082 = vmatpush1.msra.mxu0 0.0
    %3083 = vmatprep.subr.mxu0 0.0
    %3084 = vmatpush1.msra.mxu0 0.0
    %3085 = vmatprep.subr.mxu0 0.0
    %3086 = vmatpush1.msra.mxu0 0.0
    %3087 = vmatprep.subr.mxu0 0.0
    %3088 = vmatpush1.msra.mxu0 0.0
    %3089 = vmatprep.subr.mxu0 0.0
    %3090 = vmatpush1.msra.mxu0 0.0
    %3091 = vmatprep.subr.mxu0 0.0
    %3092 = vmatpush1.msra.mxu0 0.0
    %3093 = vmatprep.subr.mxu0 0.0
    %3094 = vmatpush1.msra.mxu0 0.0
    %3095 = vmatprep.subr.mxu0 0.0
    %3096 = vmatpush1.msra.mxu0 0.0
    %3097 = vmatprep.subr.mxu0 0.0
    %3098 = vmatpush1.msra.mxu0 0.0
    %3099 = vmatprep.subr.mxu0 0.0
    %3100 = vmatpush1.msra.mxu0 0.0
    %3101 = vmatprep.subr.mxu0 0.0
    %3102 = vmatpush1.msra.mxu0 0.0
    %3103 = vmatprep.mubr.f32.mxu0 0.0
    %3104 = vmatmul.mubr.f32.gmra.mrb[0].mxu0 %v3007
    %v3105 = vpop.f32.mrb[0].mxu0
    %v3106 = vadd.f32 0.0, %v3105
    %v3107 = vpop.f32.mrb[0].mxu0
    %3108 = vmatprep.mubr.f32.mxu0 0.0
    %3109 = vmatmul.mubr.f32.gmra.mrb[0].mxu0 %v3008
    %v3110 = vpop.f32.mrb[0].mxu0
    %v3111 = vadd.f32 0.0, %v3110
    %v3112 = vpop.f32.mrb[0].mxu0
    %3113 = vmatprep.mubr.f32.mxu0 0.0
    %3114 = vmatmul.mubr.f32.gmra.mrb[0].mxu0 %v3009
    %v3115 = vpop.f32.mrb[0].mxu0
    %v3116 = vadd.f32 0.0, %v3115
    %v3117 = vpop.f32.mrb[0].mxu0
    %3118 = vmatprep.mubr.f32.mxu0 0.0
    %3119 = vmatmul.mubr.f32.gmra.mrb[0].mxu0 %v3010
    %v3120 = vpop.f32.mrb[0].mxu0
    %v3121 = vadd.f32 0.0, %v3120
    %v3122 = vpop.f32.mrb[0].mxu0
    %3123 = vmatprep.mubr.f32.mxu0 0.0
    %3124 = vmatmul.mubr.f32.gmra.mrb[0].mxu0 %v3011
    %v3125 = vpop.f32.mrb[0].mxu0
    %v3126 = vadd.f32 0.0, %v3125
    %v3127 = vpop.f32.mrb[0].mxu0
    %3128 = vmatprep.mubr.f32.mxu0 0.0
    %3129 = vmatmul.mubr.f32.gmra.mrb[0].mxu0 %v3012
    %v3130 = vpop.f32.mrb[0].mxu0
    %v3131 = vadd.f32 0.0, %v3130
    %v3132 = vpop.f32.mrb[0].mxu0
    %3133 = vmatprep.mubr.f32.mxu0 0.0
    %3134 = vmatmul.mubr.f32.gmra.mrb[0].mxu0 %v3013
    %v3135 = vpop.f32.mrb[0].mxu0
    %v3136 = vadd.f32 0.0, %v3135
    %v3137 = vpop.f32.mrb[0].mxu0
    %3138 = vmatprep.mubr.f32.mxu0 0.0
    %3139 = vmatmul.mubr.f32.gmra.mrb[0].mxu0 %v3014
    %v3140 = vpop.f32.mrb[0].mxu0
    %v3141 = vadd.f32 0.0, %v3140
    %v3142 = vpop.f32.mrb[0].mxu0
    %3143 = vmatprep.mubr.f32.mxu0 0.0
    %3144 = vmatmul.mubr.f32.gmra.mrb[0].mxu0 %v3015
    %v3145 = vpop.f32.mrb[0].mxu0
    %v3146 = vadd.f32 0.0, %v3145
    %v3147 = vpop.f32.mrb[0].mxu0
    %3148 = vmatprep.mubr.f32.mxu0 0.0
    %3149 = vmatmul.mubr.f32.gmra.mrb[0].mxu0 %v3016
    %v3150 = vpop.f32.mrb[0].mxu0
    %v3151 = vadd.f32 0.0, %v3150
    %v3152 = vpop.f32.mrb[0].mxu0
    %3153 = vmatprep.mubr.f32.mxu0 0.0
    %3154 = vmatmul.mubr.f32.gmra.mrb[0].mxu0 %v3017
    %v3155 = vpop.f32.mrb[0].mxu0
    %v3156 = vadd.f32 0.0, %v3155
    %v3157 = vpop.f32.mrb[0].mxu0
    %3158 = vmatprep.mubr.f32.mxu0 0.0
    %3159 = vmatmul.mubr.f32.gmra.mrb[0].mxu0 %v3018
    %v3160 = vpop.f32.mrb[0].mxu0
    %v3161 = vadd.f32 0.0, %v3160
    %v3162 = vpop.f32.mrb[0].mxu0
    %3163 = vmatprep.mubr.f32.mxu0 0.0
    %3164 = vmatmul.mubr.f32.gmra.mrb[0].mxu0 %v3019
    %v3165 = vpop.f32.mrb[0].mxu0
    %v3166 = vadd.f32 0.0, %v3165
    %v3167 = vpop.f32.mrb[0].mxu0
    %3168 = vmatprep.mubr.f32.mxu0 0.0
    %3169 = vmatmul.mubr.f32.gmra.mrb[0].mxu0 %v3020
    %v3170 = vpop.f32.mrb[0].mxu0
    %v3171 = vadd.f32 0.0, %v3170
    %v3172 = vpop.f32.mrb[0].mxu0
    %3173 = vmatprep.mubr.f32.mxu0 0.0
    %3174 = vmatmul.mubr.f32.gmra.mrb[0].mxu0 %v3021
    %v3175 = vpop.f32.mrb[0].mxu0
    %v3176 = vadd.f32 0.0, %v3175
    %v3177 = vpop.f32.mrb[0].mxu0
    %3178 = vmatprep.mubr.f32.mxu0 0.0
    %3179 = vmatmul.mubr.f32.gmra.mrb[0].mxu0 %v3022
    %v3180 = vpop.f32.mrb[0].mxu0
    %v3181 = vadd.f32 0.0, %v3180
    %v3182 = vpop.f32.mrb[0].mxu0
    %3183 = vdwg.mxu0
    %v3184 = vld [vmem:[#allocation13] sm:$0xff]
    %v3185 = vld [vmem:[#allocation13 + $0x8] sm:$0xff]
    %v3186 = vld [vmem:[#allocation13 + $0x10] sm:$0xff]
    %v3187 = vld [vmem:[#allocation13 + $0x18] sm:$0xff]
    %v3188 = vld [vmem:[#allocation13 + $0x20] sm:$0xff]
    %v3189 = vld [vmem:[#allocation13 + $0x28] sm:$0xff]
    %v3190 = vld [vmem:[#allocation13 + $0x30] sm:$0xff]
    %v3191 = vld [vmem:[#allocation13 + $0x38] sm:$0xff]
    %v3192 = vld [vmem:[#allocation13 + $0x40] sm:$0xff]
    %v3193 = vld [vmem:[#allocation13 + $0x48] sm:$0xff]
    %v3194 = vld [vmem:[#allocation13 + $0x50] sm:$0xff]
    %v3195 = vld [vmem:[#allocation13 + $0x58] sm:$0xff]
    %v3196 = vld [vmem:[#allocation13 + $0x60] sm:$0xff]
    %v3197 = vld [vmem:[#allocation13 + $0x68] sm:$0xff]
    %v3198 = vld [vmem:[#allocation13 + $0x70] sm:$0xff]
    %v3199 = vld [vmem:[#allocation13 + $0x78] sm:$0xff]
    %3200 = vmatprep.subr.mxu0 0.0
    %3201 = vmatpush1.msra.mxu0 %v3184
    %3202 = vmatprep.subr.mxu0 0.0
    %3203 = vmatpush1.msra.mxu0 %v3185
    %3204 = vmatprep.subr.mxu0 0.0
    %3205 = vmatpush1.msra.mxu0 %v3186
    %3206 = vmatprep.subr.mxu0 0.0
    %3207 = vmatpush1.msra.mxu0 %v3187
    %3208 = vmatprep.subr.mxu0 0.0
    %3209 = vmatpush1.msra.mxu0 %v3188
    %3210 = vmatprep.subr.mxu0 0.0
    %3211 = vmatpush1.msra.mxu0 %v3189
    %3212 = vmatprep.subr.mxu0 0.0
    %3213 = vmatpush1.msra.mxu0 %v3190
    %3214 = vmatprep.subr.mxu0 0.0
    %3215 = vmatpush1.msra.mxu0 %v3191
    %3216 = vmatprep.subr.mxu0 0.0
    %3217 = vmatpush1.msra.mxu0 %v3192
    %3218 = vmatprep.subr.mxu0 0.0
    %3219 = vmatpush1.msra.mxu0 %v3193
    %3220 = vmatprep.subr.mxu0 0.0
    %3221 = vmatpush1.msra.mxu0 %v3194
    %3222 = vmatprep.subr.mxu0 0.0
    %3223 = vmatpush1.msra.mxu0 %v3195
    %3224 = vmatprep.subr.mxu0 0.0
    %3225 = vmatpush1.msra.mxu0 %v3196
    %3226 = vmatprep.subr.mxu0 0.0
    %3227 = vmatpush1.msra.mxu0 %v3197
    %3228 = vmatprep.subr.mxu0 0.0
    %3229 = vmatpush1.msra.mxu0 %v3198
    %3230 = vmatprep.subr.mxu0 0.0
    %3231 = vmatpush1.msra.mxu0 %v3199
    %3232 = vmatprep.subr.mxu0 0.0
    %3233 = vmatpush1.msra.mxu0 0.0
    %3234 = vmatprep.subr.mxu0 0.0
    %3235 = vmatpush1.msra.mxu0 0.0
    %3236 = vmatprep.subr.mxu0 0.0
    %3237 = vmatpush1.msra.mxu0 0.0
    %3238 = vmatprep.subr.mxu0 0.0
    %3239 = vmatpush1.msra.mxu0 0.0
    %3240 = vmatprep.subr.mxu0 0.0
    %3241 = vmatpush1.msra.mxu0 0.0
    %3242 = vmatprep.subr.mxu0 0.0
    %3243 = vmatpush1.msra.mxu0 0.0
    %3244 = vmatprep.subr.mxu0 0.0
    %3245 = vmatpush1.msra.mxu0 0.0
    %3246 = vmatprep.subr.mxu0 0.0
    %3247 = vmatpush1.msra.mxu0 0.0
    %3248 = vmatprep.subr.mxu0 0.0
    %3249 = vmatpush1.msra.mxu0 0.0
    %3250 = vmatprep.subr.mxu0 0.0
    %3251 = vmatpush1.msra.mxu0 0.0
    %3252 = vmatprep.subr.mxu0 0.0
    %3253 = vmatpush1.msra.mxu0 0.0
    %3254 = vmatprep.subr.mxu0 0.0
    %3255 = vmatpush1.msra.mxu0 0.0
    %3256 = vmatprep.subr.mxu0 0.0
    %3257 = vmatpush1.msra.mxu0 0.0
    %3258 = vmatprep.subr.mxu0 0.0
    %3259 = vmatpush1.msra.mxu0 0.0
    %3260 = vmatprep.subr.mxu0 0.0
    %3261 = vmatpush1.msra.mxu0 0.0
    %3262 = vmatprep.subr.mxu0 0.0
    %3263 = vmatpush1.msra.mxu0 0.0
    %3264 = vmatprep.mubr.f32.mxu0 0.0
    %3265 = vmatmul.mubr.f32.gmra.mrb[0].mxu0 %v3106
    %v3266 = vpop.f32.mrb[0].mxu0
    %v3267 = vadd.f32 0.0, %v3266
    %v3268 = vpop.f32.mrb[0].mxu0
    %3269 = vmatprep.mubr.f32.mxu0 0.0
    %3270 = vmatmul.mubr.f32.gmra.mrb[0].mxu0 %v3111
    %v3271 = vpop.f32.mrb[0].mxu0
    %v3272 = vadd.f32 0.0, %v3271
    %v3273 = vpop.f32.mrb[0].mxu0
    %3274 = vmatprep.mubr.f32.mxu0 0.0
    %3275 = vmatmul.mubr.f32.gmra.mrb[0].mxu0 %v3116
    %v3276 = vpop.f32.mrb[0].mxu0
    %v3277 = vadd.f32 0.0, %v3276
    %v3278 = vpop.f32.mrb[0].mxu0
    %3279 = vmatprep.mubr.f32.mxu0 0.0
    %3280 = vmatmul.mubr.f32.gmra.mrb[0].mxu0 %v3121
    %v3281 = vpop.f32.mrb[0].mxu0
    %v3282 = vadd.f32 0.0, %v3281
    %v3283 = vpop.f32.mrb[0].mxu0
    %3284 = vmatprep.mubr.f32.mxu0 0.0
    %3285 = vmatmul.mubr.f32.gmra.mrb[0].mxu0 %v3126
    %v3286 = vpop.f32.mrb[0].mxu0
    %v3287 = vadd.f32 0.0, %v3286
    %v3288 = vpop.f32.mrb[0].mxu0
    %3289 = vmatprep.mubr.f32.mxu0 0.0
    %3290 = vmatmul.mubr.f32.gmra.mrb[0].mxu0 %v3131
    %v3291 = vpop.f32.mrb[0].mxu0
    %v3292 = vadd.f32 0.0, %v3291
    %v3293 = vpop.f32.mrb[0].mxu0
    %3294 = vmatprep.mubr.f32.mxu0 0.0
    %3295 = vmatmul.mubr.f32.gmra.mrb[0].mxu0 %v3136
    %v3296 = vpop.f32.mrb[0].mxu0
    %v3297 = vadd.f32 0.0, %v3296
    %v3298 = vpop.f32.mrb[0].mxu0
    %3299 = vmatprep.mubr.f32.mxu0 0.0
    %3300 = vmatmul.mubr.f32.gmra.mrb[0].mxu0 %v3141
    %v3301 = vpop.f32.mrb[0].mxu0
    %v3302 = vadd.f32 0.0, %v3301
    %v3303 = vpop.f32.mrb[0].mxu0
    %3304 = vmatprep.mubr.f32.mxu0 0.0
    %3305 = vmatmul.mubr.f32.gmra.mrb[0].mxu0 %v3146
    %v3306 = vpop.f32.mrb[0].mxu0
    %v3307 = vadd.f32 0.0, %v3306
    %v3308 = vpop.f32.mrb[0].mxu0
    %3309 = vmatprep.mubr.f32.mxu0 0.0
    %3310 = vmatmul.mubr.f32.gmra.mrb[0].mxu0 %v3151
    %v3311 = vpop.f32.mrb[0].mxu0
    %v3312 = vadd.f32 0.0, %v3311
    %v3313 = vpop.f32.mrb[0].mxu0
    %3314 = vmatprep.mubr.f32.mxu0 0.0
    %3315 = vmatmul.mubr.f32.gmra.mrb[0].mxu0 %v3156
    %v3316 = vpop.f32.mrb[0].mxu0
    %v3317 = vadd.f32 0.0, %v3316
    %v3318 = vpop.f32.mrb[0].mxu0
    %3319 = vmatprep.mubr.f32.mxu0 0.0
    %3320 = vmatmul.mubr.f32.gmra.mrb[0].mxu0 %v3161
    %v3321 = vpop.f32.mrb[0].mxu0
    %v3322 = vadd.f32 0.0, %v3321
    %v3323 = vpop.f32.mrb[0].mxu0
    %3324 = vmatprep.mubr.f32.mxu0 0.0
    %3325 = vmatmul.mubr.f32.gmra.mrb[0].mxu0 %v3166
    %v3326 = vpop.f32.mrb[0].mxu0
    %v3327 = vadd.f32 0.0, %v3326
    %v3328 = vpop.f32.mrb[0].mxu0
    %3329 = vmatprep.mubr.f32.mxu0 0.0
    %3330 = vmatmul.mubr.f32.gmra.mrb[0].mxu0 %v3171
    %v3331 = vpop.f32.mrb[0].mxu0
    %v3332 = vadd.f32 0.0, %v3331
    %v3333 = vpop.f32.mrb[0].mxu0
    %3334 = vmatprep.mubr.f32.mxu0 0.0
    %3335 = vmatmul.mubr.f32.gmra.mrb[0].mxu0 %v3176
    %v3336 = vpop.f32.mrb[0].mxu0
    %v3337 = vadd.f32 0.0, %v3336
    %v3338 = vpop.f32.mrb[0].mxu0
    %3339 = vmatprep.mubr.f32.mxu0 0.0
    %3340 = vmatmul.mubr.f32.gmra.mrb[0].mxu0 %v3181
    %v3341 = vpop.f32.mrb[0].mxu0
    %v3342 = vadd.f32 0.0, %v3341
    %v3343 = vpop.f32.mrb[0].mxu0
    %3344 = vdwg.mxu0
    %3345 = vxpose.xlu0.b32.start [1/16] %v3267, 128
    %3346 = vxpose.xlu0.b32.cont [2/16] %v3272, 128
    %3347 = vxpose.xlu0.b32.cont [3/16] %v3277, 128
    %3348 = vxpose.xlu0.b32.cont [4/16] %v3282, 128
    %3349 = vxpose.xlu0.b32.cont [5/16] %v3287, 128
    %3350 = vxpose.xlu0.b32.cont [6/16] %v3292, 128
    %3351 = vxpose.xlu0.b32.cont [7/16] %v3297, 128
    %3352 = vxpose.xlu0.b32.cont [8/16] %v3302, 128
    %3353 = vxpose.xlu0.b32.cont [9/16] %v3307, 128
    %3354 = vxpose.xlu0.b32.cont [10/16] %v3312, 128
    %3355 = vxpose.xlu0.b32.cont [11/16] %v3317, 128
    %3356 = vxpose.xlu0.b32.cont [12/16] %v3322, 128
    %3357 = vxpose.xlu0.b32.cont [13/16] %v3327, 128
    %3358 = vxpose.xlu0.b32.cont [14/16] %v3332, 128
    %3359 = vxpose.xlu0.b32.cont [15/16] %v3337, 128
    %3360 = vxpose.xlu0.b32.end [16/16] %v3342, 128
    %v3361 = vpop.trf.xlu0
    %v3362 = vpop.trf.xlu0
    %v3363 = vpop.trf.xlu0
    %v3364 = vpop.trf.xlu0
    %v3365 = vpop.trf.xlu0
    %v3366 = vpop.trf.xlu0
    %v3367 = vpop.trf.xlu0
    %v3368 = vpop.trf.xlu0
    %v3369 = vpop.trf.xlu0
    %v3370 = vpop.trf.xlu0
    %v3371 = vpop.trf.xlu0
    %v3372 = vpop.trf.xlu0
    %v3373 = vpop.trf.xlu0
    %v3374 = vpop.trf.xlu0
    %v3375 = vpop.trf.xlu0
    %v3376 = vpop.trf.xlu0
    %3378 = vset.pattern.permute.xlu0 1
    %3379 = vperm.xlu0 %3378, %v3267
    %v3380 = vpop.permute.xlu0 %3379
    %3383 = vset.pattern.permute.xlu0 1
    %3384 = vperm.xlu0 %3383, %v3272
    %v3385 = vpop.permute.xlu0 %3384
    %3388 = vset.pattern.permute.xlu0 1
    %3389 = vperm.xlu0 %3388, %v3277
    %v3390 = vpop.permute.xlu0 %3389
    %3393 = vset.pattern.permute.xlu0 1
    %3394 = vperm.xlu0 %3393, %v3282
    %v3395 = vpop.permute.xlu0 %3394
    %3398 = vset.pattern.permute.xlu0 1
    %3399 = vperm.xlu0 %3398, %v3287
    %v3400 = vpop.permute.xlu0 %3399
    %3403 = vset.pattern.permute.xlu0 1
    %3404 = vperm.xlu0 %3403, %v3292
    %v3405 = vpop.permute.xlu0 %3404
    %3408 = vset.pattern.permute.xlu0 1
    %3409 = vperm.xlu0 %3408, %v3297
    %v3410 = vpop.permute.xlu0 %3409
    %3413 = vset.pattern.permute.xlu0 1
    %3414 = vperm.xlu0 %3413, %v3302
    %v3415 = vpop.permute.xlu0 %3414
    %3418 = vset.pattern.permute.xlu0 1
    %3419 = vperm.xlu0 %3418, %v3307
    %v3420 = vpop.permute.xlu0 %3419
    %3423 = vset.pattern.permute.xlu0 1
    %3424 = vperm.xlu0 %3423, %v3312
    %v3425 = vpop.permute.xlu0 %3424
    %3428 = vset.pattern.permute.xlu0 1
    %3429 = vperm.xlu0 %3428, %v3317
    %v3430 = vpop.permute.xlu0 %3429
    %3433 = vset.pattern.permute.xlu0 1
    %3434 = vperm.xlu0 %3433, %v3322
    %v3435 = vpop.permute.xlu0 %3434
    %3438 = vset.pattern.permute.xlu0 1
    %3439 = vperm.xlu0 %3438, %v3327
    %v3440 = vpop.permute.xlu0 %3439
    %3443 = vset.pattern.permute.xlu0 1
    %3444 = vperm.xlu0 %3443, %v3332
    %v3445 = vpop.permute.xlu0 %3444
    %3448 = vset.pattern.permute.xlu0 1
    %3449 = vperm.xlu0 %3448, %v3337
    %v3450 = vpop.permute.xlu0 %3449
    %3453 = vset.pattern.permute.xlu0 1
    %3454 = vperm.xlu0 %3453, %v3342
    %v3455 = vpop.permute.xlu0 %3454
    %v3457 = vlaneseq
    %v3458 = vshrl.u32 %v3457, 7
    %v3459 = vsub.s32 0, %v3458
    %v3460 = vrot.slane %v3361, %v3459
    %v3461 = vadd.f32 %v3380, %v3460
    %v3462 = vadd.f32 %v3385, %v3460
    %v3463 = vadd.f32 %v3390, %v3460
    %v3464 = vadd.f32 %v3395, %v3460
    %v3465 = vadd.f32 %v3400, %v3460
    %v3466 = vadd.f32 %v3405, %v3460
    %v3467 = vadd.f32 %v3410, %v3460
    %v3468 = vadd.f32 %v3415, %v3460
    %v3469 = vadd.f32 %v3420, %v3460
    %v3470 = vadd.f32 %v3425, %v3460
    %v3471 = vadd.f32 %v3430, %v3460
    %v3472 = vadd.f32 %v3435, %v3460
    %v3473 = vadd.f32 %v3440, %v3460
    %v3474 = vadd.f32 %v3445, %v3460
    %v3475 = vadd.f32 %v3450, %v3460
    %v3476 = vadd.f32 %v3455, %v3460
    %vm3477 = vcmp.gt.f32.partialorder %v3461, 0.0
    %vm3478 = vcmp.gt.f32.partialorder %v3462, 0.0
    %vm3479 = vcmp.gt.f32.partialorder %v3463, 0.0
    %vm3480 = vcmp.gt.f32.partialorder %v3464, 0.0
    %vm3481 = vcmp.gt.f32.partialorder %v3465, 0.0
    %vm3482 = vcmp.gt.f32.partialorder %v3466, 0.0
    %vm3483 = vcmp.gt.f32.partialorder %v3467, 0.0
    %vm3484 = vcmp.gt.f32.partialorder %v3468, 0.0
    %vm3485 = vcmp.gt.f32.partialorder %v3469, 0.0
    %vm3486 = vcmp.gt.f32.partialorder %v3470, 0.0
    %vm3487 = vcmp.gt.f32.partialorder %v3471, 0.0
    %vm3488 = vcmp.gt.f32.partialorder %v3472, 0.0
    %vm3489 = vcmp.gt.f32.partialorder %v3473, 0.0
    %vm3490 = vcmp.gt.f32.partialorder %v3474, 0.0
    %vm3491 = vcmp.gt.f32.partialorder %v3475, 0.0
    %vm3492 = vcmp.gt.f32.partialorder %v3476, 0.0
    %v3493 = vmul.f32 %v3461, 0.2
    %v3494 = vmul.f32 %v3462, 0.2
    %v3495 = vmul.f32 %v3463, 0.2
    %v3496 = vmul.f32 %v3464, 0.2
    %v3497 = vmul.f32 %v3465, 0.2
    %v3498 = vmul.f32 %v3466, 0.2
    %v3499 = vmul.f32 %v3467, 0.2
    %v3500 = vmul.f32 %v3468, 0.2
    %v3501 = vmul.f32 %v3469, 0.2
    %v3502 = vmul.f32 %v3470, 0.2
    %v3503 = vmul.f32 %v3471, 0.2
    %v3504 = vmul.f32 %v3472, 0.2
    %v3505 = vmul.f32 %v3473, 0.2
    %v3506 = vmul.f32 %v3474, 0.2
    %v3507 = vmul.f32 %v3475, 0.2
    %v3508 = vmul.f32 %v3476, 0.2
    %v3509 = vsel %vm3477, %v3461, %v3493
    %v3510 = vsel %vm3478, %v3462, %v3494
    %v3511 = vsel %vm3479, %v3463, %v3495
    %v3512 = vsel %vm3480, %v3464, %v3496
    %v3513 = vsel %vm3481, %v3465, %v3497
    %v3514 = vsel %vm3482, %v3466, %v3498
    %v3515 = vsel %vm3483, %v3467, %v3499
    %v3516 = vsel %vm3484, %v3468, %v3500
    %v3517 = vsel %vm3485, %v3469, %v3501
    %v3518 = vsel %vm3486, %v3470, %v3502
    %v3519 = vsel %vm3487, %v3471, %v3503
    %v3520 = vsel %vm3488, %v3472, %v3504
    %v3521 = vsel %vm3489, %v3473, %v3505
    %v3522 = vsel %vm3490, %v3474, %v3506
    %v3523 = vsel %vm3491, %v3475, %v3507
    %v3524 = vsel %vm3492, %v3476, %v3508
    %v3525 = vsel %vm399, %v3509, -1e+30
    %v3526 = vsel %vm400, %v3510, -1e+30
    %v3527 = vsel %vm401, %v3511, -1e+30
    %v3528 = vsel %vm402, %v3512, -1e+30
    %v3529 = vsel %vm403, %v3513, -1e+30
    %v3530 = vsel %vm404, %v3514, -1e+30
    %v3531 = vsel %vm405, %v3515, -1e+30
    %v3532 = vsel %vm406, %v3516, -1e+30
    %v3533 = vsel %vm407, %v3517, -1e+30
    %v3534 = vsel %vm408, %v3518, -1e+30
    %v3535 = vsel %vm409, %v3519, -1e+30
    %v3536 = vsel %vm410, %v3520, -1e+30
    %v3537 = vsel %vm411, %v3521, -1e+30
    %v3538 = vsel %vm412, %v3522, -1e+30
    %v3539 = vsel %vm413, %v3523, -1e+30
    %v3540 = vsel %vm414, %v3524, -1e+30
    %3541 = vmax.xlane.f32.xlu0 %v3525
    %v3542 = vpop.xlane.xlu0 %3541
    %3543 = vmax.xlane.f32.xlu0 %v3526
    %v3544 = vpop.xlane.xlu0 %3543
    %3545 = vmax.xlane.f32.xlu0 %v3527
    %v3546 = vpop.xlane.xlu0 %3545
    %3547 = vmax.xlane.f32.xlu0 %v3528
    %v3548 = vpop.xlane.xlu0 %3547
    %3549 = vmax.xlane.f32.xlu0 %v3529
    %v3550 = vpop.xlane.xlu0 %3549
    %3551 = vmax.xlane.f32.xlu0 %v3530
    %v3552 = vpop.xlane.xlu0 %3551
    %3553 = vmax.xlane.f32.xlu0 %v3531
    %v3554 = vpop.xlane.xlu0 %3553
    %3555 = vmax.xlane.f32.xlu0 %v3532
    %v3556 = vpop.xlane.xlu0 %3555
    %3557 = vmax.xlane.f32.xlu0 %v3533
    %v3558 = vpop.xlane.xlu0 %3557
    %3559 = vmax.xlane.f32.xlu0 %v3534
    %v3560 = vpop.xlane.xlu0 %3559
    %3561 = vmax.xlane.f32.xlu0 %v3535
    %v3562 = vpop.xlane.xlu0 %3561
    %3563 = vmax.xlane.f32.xlu0 %v3536
    %v3564 = vpop.xlane.xlu0 %3563
    %3565 = vmax.xlane.f32.xlu0 %v3537
    %v3566 = vpop.xlane.xlu0 %3565
    %3567 = vmax.xlane.f32.xlu0 %v3538
    %v3568 = vpop.xlane.xlu0 %3567
    %3569 = vmax.xlane.f32.xlu0 %v3539
    %v3570 = vpop.xlane.xlu0 %3569
    %3571 = vmax.xlane.f32.xlu0 %v3540
    %v3572 = vpop.xlane.xlu0 %3571
    %v3573 = vsub.f32 %v3525, %v3542
    %v3574 = vsub.f32 %v3526, %v3544
    %v3575 = vsub.f32 %v3527, %v3546
    %v3576 = vsub.f32 %v3528, %v3548
    %v3577 = vsub.f32 %v3529, %v3550
    %v3578 = vsub.f32 %v3530, %v3552
    %v3579 = vsub.f32 %v3531, %v3554
    %v3580 = vsub.f32 %v3532, %v3556
    %v3581 = vsub.f32 %v3533, %v3558
    %v3582 = vsub.f32 %v3534, %v3560
    %v3583 = vsub.f32 %v3535, %v3562
    %v3584 = vsub.f32 %v3536, %v3564
    %v3585 = vsub.f32 %v3537, %v3566
    %v3586 = vsub.f32 %v3538, %v3568
    %v3587 = vsub.f32 %v3539, %v3570
    %v3588 = vsub.f32 %v3540, %v3572
    %v3589 = vmul.f32 %v3573, 1.442695
    %v3590 = vpow.pop %v3589
    %v3591 = vmul.f32 %v3574, 1.442695
    %v3592 = vpow.pop %v3591
    %v3593 = vmul.f32 %v3575, 1.442695
    %v3594 = vpow.pop %v3593
    %v3595 = vmul.f32 %v3576, 1.442695
    %v3596 = vpow.pop %v3595
    %v3597 = vmul.f32 %v3577, 1.442695
    %v3598 = vpow.pop %v3597
    %v3599 = vmul.f32 %v3578, 1.442695
    %v3600 = vpow.pop %v3599
    %v3601 = vmul.f32 %v3579, 1.442695
    %v3602 = vpow.pop %v3601
    %v3603 = vmul.f32 %v3580, 1.442695
    %v3604 = vpow.pop %v3603
    %v3605 = vmul.f32 %v3581, 1.442695
    %v3606 = vpow.pop %v3605
    %v3607 = vmul.f32 %v3582, 1.442695
    %v3608 = vpow.pop %v3607
    %v3609 = vmul.f32 %v3583, 1.442695
    %v3610 = vpow.pop %v3609
    %v3611 = vmul.f32 %v3584, 1.442695
    %v3612 = vpow.pop %v3611
    %v3613 = vmul.f32 %v3585, 1.442695
    %v3614 = vpow.pop %v3613
    %v3615 = vmul.f32 %v3586, 1.442695
    %v3616 = vpow.pop %v3615
    %v3617 = vmul.f32 %v3587, 1.442695
    %v3618 = vpow.pop %v3617
    %v3619 = vmul.f32 %v3588, 1.442695
    %v3620 = vpow.pop %v3619
    %v3621 = vmul.f32 %v3590, %v383
    %v3622 = vmul.f32 %v3592, %v384
    %v3623 = vmul.f32 %v3594, %v385
    %v3624 = vmul.f32 %v3596, %v386
    %v3625 = vmul.f32 %v3598, %v387
    %v3626 = vmul.f32 %v3600, %v388
    %v3627 = vmul.f32 %v3602, %v389
    %v3628 = vmul.f32 %v3604, %v390
    %v3629 = vmul.f32 %v3606, %v391
    %v3630 = vmul.f32 %v3608, %v392
    %v3631 = vmul.f32 %v3610, %v393
    %v3632 = vmul.f32 %v3612, %v394
    %v3633 = vmul.f32 %v3614, %v395
    %v3634 = vmul.f32 %v3616, %v396
    %v3635 = vmul.f32 %v3618, %v397
    %v3636 = vmul.f32 %v3620, %v398
    %3637 = vadd.xlane.f32.xlu0 %v3621
    %v3638 = vpop.xlane.xlu0 %3637
    %3639 = vadd.xlane.f32.xlu0 %v3622
    %v3640 = vpop.xlane.xlu0 %3639
    %3641 = vadd.xlane.f32.xlu0 %v3623
    %v3642 = vpop.xlane.xlu0 %3641
    %3643 = vadd.xlane.f32.xlu0 %v3624
    %v3644 = vpop.xlane.xlu0 %3643
    %3645 = vadd.xlane.f32.xlu0 %v3625
    %v3646 = vpop.xlane.xlu0 %3645
    %3647 = vadd.xlane.f32.xlu0 %v3626
    %v3648 = vpop.xlane.xlu0 %3647
    %3649 = vadd.xlane.f32.xlu0 %v3627
    %v3650 = vpop.xlane.xlu0 %3649
    %3651 = vadd.xlane.f32.xlu0 %v3628
    %v3652 = vpop.xlane.xlu0 %3651
    %3653 = vadd.xlane.f32.xlu0 %v3629
    %v3654 = vpop.xlane.xlu0 %3653
    %3655 = vadd.xlane.f32.xlu0 %v3630
    %v3656 = vpop.xlane.xlu0 %3655
    %3657 = vadd.xlane.f32.xlu0 %v3631
    %v3658 = vpop.xlane.xlu0 %3657
    %3659 = vadd.xlane.f32.xlu0 %v3632
    %v3660 = vpop.xlane.xlu0 %3659
    %3661 = vadd.xlane.f32.xlu0 %v3633
    %v3662 = vpop.xlane.xlu0 %3661
    %3663 = vadd.xlane.f32.xlu0 %v3634
    %v3664 = vpop.xlane.xlu0 %3663
    %3665 = vadd.xlane.f32.xlu0 %v3635
    %v3666 = vpop.xlane.xlu0 %3665
    %3667 = vadd.xlane.f32.xlu0 %v3636
    %v3668 = vpop.xlane.xlu0 %3667
    %v3669 = vrcp.pop %v3638
    %v3670 = vrcp.pop %v3640
    %v3671 = vrcp.pop %v3642
    %v3672 = vrcp.pop %v3644
    %v3673 = vrcp.pop %v3646
    %v3674 = vrcp.pop %v3648
    %v3675 = vrcp.pop %v3650
    %v3676 = vrcp.pop %v3652
    %v3677 = vrcp.pop %v3654
    %v3678 = vrcp.pop %v3656
    %v3679 = vrcp.pop %v3658
    %v3680 = vrcp.pop %v3660
    %v3681 = vrcp.pop %v3662
    %v3682 = vrcp.pop %v3664
    %v3683 = vrcp.pop %v3666
    %v3684 = vrcp.pop %v3668
    %v3685 = vmul.f32 %v3621, %v3669
    %v3686 = vmul.f32 %v3622, %v3670
    %v3687 = vmul.f32 %v3623, %v3671
    %v3688 = vmul.f32 %v3624, %v3672
    %v3689 = vmul.f32 %v3625, %v3673
    %v3690 = vmul.f32 %v3626, %v3674
    %v3691 = vmul.f32 %v3627, %v3675
    %v3692 = vmul.f32 %v3628, %v3676
    %v3693 = vmul.f32 %v3629, %v3677
    %v3694 = vmul.f32 %v3630, %v3678
    %v3695 = vmul.f32 %v3631, %v3679
    %v3696 = vmul.f32 %v3632, %v3680
    %v3697 = vmul.f32 %v3633, %v3681
    %v3698 = vmul.f32 %v3634, %v3682
    %v3699 = vmul.f32 %v3635, %v3683
    %v3700 = vmul.f32 %v3636, %v3684
    %v3701 = vld [vmem:[%s9] sm:$0x1]
    %v3703 = vlaneseq
    %v3704 = vshrl.u32 %v3703, 7
    %v3705 = vsub.s32 0, %v3704
    %v3706 = vrot.slane %v3701, %v3705
    %3708 = vmatprep.subr.mxu0 0.0
    %3709 = vmatpush1.msra.mxu0 %v3106
    %3710 = vmatprep.subr.mxu0 0.0
    %3711 = vmatpush1.msra.mxu0 %v3111
    %3712 = vmatprep.subr.mxu0 0.0
    %3713 = vmatpush1.msra.mxu0 %v3116
    %3714 = vmatprep.subr.mxu0 0.0
    %3715 = vmatpush1.msra.mxu0 %v3121
    %3716 = vmatprep.subr.mxu0 0.0
    %3717 = vmatpush1.msra.mxu0 %v3126
    %3718 = vmatprep.subr.mxu0 0.0
    %3719 = vmatpush1.msra.mxu0 %v3131
    %3720 = vmatprep.subr.mxu0 0.0
    %3721 = vmatpush1.msra.mxu0 %v3136
    %3722 = vmatprep.subr.mxu0 0.0
    %3723 = vmatpush1.msra.mxu0 %v3141
    %3724 = vmatprep.subr.mxu0 0.0
    %3725 = vmatpush1.msra.mxu0 %v3146
    %3726 = vmatprep.subr.mxu0 0.0
    %3727 = vmatpush1.msra.mxu0 %v3151
    %3728 = vmatprep.subr.mxu0 0.0
    %3729 = vmatpush1.msra.mxu0 %v3156
    %3730 = vmatprep.subr.mxu0 0.0
    %3731 = vmatpush1.msra.mxu0 %v3161
    %3732 = vmatprep.subr.mxu0 0.0
    %3733 = vmatpush1.msra.mxu0 %v3166
    %3734 = vmatprep.subr.mxu0 0.0
    %3735 = vmatpush1.msra.mxu0 %v3171
    %3736 = vmatprep.subr.mxu0 0.0
    %3737 = vmatpush1.msra.mxu0 %v3176
    %3738 = vmatprep.subr.mxu0 0.0
    %3739 = vmatpush1.msra.mxu0 %v3181
    %3740 = vmatprep.subr.mxu0 0.0
    %3741 = vmatpush1.msra.mxu0 0.0
    %3742 = vmatprep.subr.mxu0 0.0
    %3743 = vmatpush1.msra.mxu0 0.0
    %3744 = vmatprep.subr.mxu0 0.0
    %3745 = vmatpush1.msra.mxu0 0.0
    %3746 = vmatprep.subr.mxu0 0.0
    %3747 = vmatpush1.msra.mxu0 0.0
    %3748 = vmatprep.subr.mxu0 0.0
    %3749 = vmatpush1.msra.mxu0 0.0
    %3750 = vmatprep.subr.mxu0 0.0
    %3751 = vmatpush1.msra.mxu0 0.0
    %3752 = vmatprep.subr.mxu0 0.0
    %3753 = vmatpush1.msra.mxu0 0.0
    %3754 = vmatprep.subr.mxu0 0.0
    %3755 = vmatpush1.msra.mxu0 0.0
    %3756 = vmatprep.subr.mxu0 0.0
    %3757 = vmatpush1.msra.mxu0 0.0
    %3758 = vmatprep.subr.mxu0 0.0
    %3759 = vmatpush1.msra.mxu0 0.0
    %3760 = vmatprep.subr.mxu0 0.0
    %3761 = vmatpush1.msra.mxu0 0.0
    %3762 = vmatprep.subr.mxu0 0.0
    %3763 = vmatpush1.msra.mxu0 0.0
    %3764 = vmatprep.subr.mxu0 0.0
    %3765 = vmatpush1.msra.mxu0 0.0
    %3766 = vmatprep.subr.mxu0 0.0
    %3767 = vmatpush1.msra.mxu0 0.0
    %3768 = vmatprep.subr.mxu0 0.0
    %3769 = vmatpush1.msra.mxu0 0.0
    %3770 = vmatprep.subr.mxu0 0.0
    %3771 = vmatpush1.msra.mxu0 0.0
    %3772 = vmatprep.mubr.f32.mxu0 0.0
    %3773 = vmatmul.mubr.f32.gmra.mrb[0].mxu0 %v3685
    %v3774 = vpop.f32.mrb[0].mxu0
    %v3775 = vadd.f32 %v3706, %v3774
    %v3776 = vpop.f32.mrb[0].mxu0
    %3777 = vmatprep.mubr.f32.mxu0 0.0
    %3778 = vmatmul.mubr.f32.gmra.mrb[0].mxu0 %v3686
    %v3779 = vpop.f32.mrb[0].mxu0
    %v3780 = vadd.f32 %v3706, %v3779
    %v3781 = vpop.f32.mrb[0].mxu0
    %3782 = vmatprep.mubr.f32.mxu0 0.0
    %3783 = vmatmul.mubr.f32.gmra.mrb[0].mxu0 %v3687
    %v3784 = vpop.f32.mrb[0].mxu0
    %v3785 = vadd.f32 %v3706, %v3784
    %v3786 = vpop.f32.mrb[0].mxu0
    %3787 = vmatprep.mubr.f32.mxu0 0.0
    %3788 = vmatmul.mubr.f32.gmra.mrb[0].mxu0 %v3688
    %v3789 = vpop.f32.mrb[0].mxu0
    %v3790 = vadd.f32 %v3706, %v3789
    %v3791 = vpop.f32.mrb[0].mxu0
    %3792 = vmatprep.mubr.f32.mxu0 0.0
    %3793 = vmatmul.mubr.f32.gmra.mrb[0].mxu0 %v3689
    %v3794 = vpop.f32.mrb[0].mxu0
    %v3795 = vadd.f32 %v3706, %v3794
    %v3796 = vpop.f32.mrb[0].mxu0
    %3797 = vmatprep.mubr.f32.mxu0 0.0
    %3798 = vmatmul.mubr.f32.gmra.mrb[0].mxu0 %v3690
    %v3799 = vpop.f32.mrb[0].mxu0
    %v3800 = vadd.f32 %v3706, %v3799
    %v3801 = vpop.f32.mrb[0].mxu0
    %3802 = vmatprep.mubr.f32.mxu0 0.0
    %3803 = vmatmul.mubr.f32.gmra.mrb[0].mxu0 %v3691
    %v3804 = vpop.f32.mrb[0].mxu0
    %v3805 = vadd.f32 %v3706, %v3804
    %v3806 = vpop.f32.mrb[0].mxu0
    %3807 = vmatprep.mubr.f32.mxu0 0.0
    %3808 = vmatmul.mubr.f32.gmra.mrb[0].mxu0 %v3692
    %v3809 = vpop.f32.mrb[0].mxu0
    %v3810 = vadd.f32 %v3706, %v3809
    %v3811 = vpop.f32.mrb[0].mxu0
    %3812 = vmatprep.mubr.f32.mxu0 0.0
    %3813 = vmatmul.mubr.f32.gmra.mrb[0].mxu0 %v3693
    %v3814 = vpop.f32.mrb[0].mxu0
    %v3815 = vadd.f32 %v3706, %v3814
    %v3816 = vpop.f32.mrb[0].mxu0
    %3817 = vmatprep.mubr.f32.mxu0 0.0
    %3818 = vmatmul.mubr.f32.gmra.mrb[0].mxu0 %v3694
    %v3819 = vpop.f32.mrb[0].mxu0
    %v3820 = vadd.f32 %v3706, %v3819
    %v3821 = vpop.f32.mrb[0].mxu0
    %3822 = vmatprep.mubr.f32.mxu0 0.0
    %3823 = vmatmul.mubr.f32.gmra.mrb[0].mxu0 %v3695
    %v3824 = vpop.f32.mrb[0].mxu0
    %v3825 = vadd.f32 %v3706, %v3824
    %v3826 = vpop.f32.mrb[0].mxu0
    %3827 = vmatprep.mubr.f32.mxu0 0.0
    %3828 = vmatmul.mubr.f32.gmra.mrb[0].mxu0 %v3696
    %v3829 = vpop.f32.mrb[0].mxu0
    %v3830 = vadd.f32 %v3706, %v3829
    %v3831 = vpop.f32.mrb[0].mxu0
    %3832 = vmatprep.mubr.f32.mxu0 0.0
    %3833 = vmatmul.mubr.f32.gmra.mrb[0].mxu0 %v3697
    %v3834 = vpop.f32.mrb[0].mxu0
    %v3835 = vadd.f32 %v3706, %v3834
    %v3836 = vpop.f32.mrb[0].mxu0
    %3837 = vmatprep.mubr.f32.mxu0 0.0
    %3838 = vmatmul.mubr.f32.gmra.mrb[0].mxu0 %v3698
    %v3839 = vpop.f32.mrb[0].mxu0
    %v3840 = vadd.f32 %v3706, %v3839
    %v3841 = vpop.f32.mrb[0].mxu0
    %3842 = vmatprep.mubr.f32.mxu0 0.0
    %3843 = vmatmul.mubr.f32.gmra.mrb[0].mxu0 %v3699
    %v3844 = vpop.f32.mrb[0].mxu0
    %v3845 = vadd.f32 %v3706, %v3844
    %v3846 = vpop.f32.mrb[0].mxu0
    %3847 = vmatprep.mubr.f32.mxu0 0.0
    %3848 = vmatmul.mubr.f32.gmra.mrb[0].mxu0 %v3700
    %v3849 = vpop.f32.mrb[0].mxu0
    %v3850 = vadd.f32 %v3706, %v3849
    %v3851 = vpop.f32.mrb[0].mxu0
    %3852 = vdwg.mxu0
    %v3853 = vld [vmem:[#allocation14] sm:$0xff]
    %v3854 = vld [vmem:[#allocation14 + $0x8] sm:$0xff]
    %v3855 = vld [vmem:[#allocation14 + $0x10] sm:$0xff]
    %v3856 = vld [vmem:[#allocation14 + $0x18] sm:$0xff]
    %v3857 = vld [vmem:[#allocation14 + $0x20] sm:$0xff]
    %v3858 = vld [vmem:[#allocation14 + $0x28] sm:$0xff]
    %v3859 = vld [vmem:[#allocation14 + $0x30] sm:$0xff]
    %v3860 = vld [vmem:[#allocation14 + $0x38] sm:$0xff]
    %v3861 = vld [vmem:[#allocation14 + $0x40] sm:$0xff]
    %v3862 = vld [vmem:[#allocation14 + $0x48] sm:$0xff]
    %v3863 = vld [vmem:[#allocation14 + $0x50] sm:$0xff]
    %v3864 = vld [vmem:[#allocation14 + $0x58] sm:$0xff]
    %v3865 = vld [vmem:[#allocation14 + $0x60] sm:$0xff]
    %v3866 = vld [vmem:[#allocation14 + $0x68] sm:$0xff]
    %v3867 = vld [vmem:[#allocation14 + $0x70] sm:$0xff]
    %v3868 = vld [vmem:[#allocation14 + $0x78] sm:$0xff]
    %v3869 = vld [vmem:[%s11] sm:$0x1]
    %v3871 = vlaneseq
    %v3872 = vshrl.u32 %v3871, 7
    %v3873 = vsub.s32 0, %v3872
    %v3874 = vrot.slane %v3869, %v3873
    %3876 = vmatprep.subr.mxu0 0.0
    %3877 = vmatpush1.msra.mxu0 %v3853
    %3878 = vmatprep.subr.mxu0 0.0
    %3879 = vmatpush1.msra.mxu0 %v3854
    %3880 = vmatprep.subr.mxu0 0.0
    %3881 = vmatpush1.msra.mxu0 %v3855
    %3882 = vmatprep.subr.mxu0 0.0
    %3883 = vmatpush1.msra.mxu0 %v3856
    %3884 = vmatprep.subr.mxu0 0.0
    %3885 = vmatpush1.msra.mxu0 %v3857
    %3886 = vmatprep.subr.mxu0 0.0
    %3887 = vmatpush1.msra.mxu0 %v3858
    %3888 = vmatprep.subr.mxu0 0.0
    %3889 = vmatpush1.msra.mxu0 %v3859
    %3890 = vmatprep.subr.mxu0 0.0
    %3891 = vmatpush1.msra.mxu0 %v3860
    %3892 = vmatprep.subr.mxu0 0.0
    %3893 = vmatpush1.msra.mxu0 %v3861
    %3894 = vmatprep.subr.mxu0 0.0
    %3895 = vmatpush1.msra.mxu0 %v3862
    %3896 = vmatprep.subr.mxu0 0.0
    %3897 = vmatpush1.msra.mxu0 %v3863
    %3898 = vmatprep.subr.mxu0 0.0
    %3899 = vmatpush1.msra.mxu0 %v3864
    %3900 = vmatprep.subr.mxu0 0.0
    %3901 = vmatpush1.msra.mxu0 %v3865
    %3902 = vmatprep.subr.mxu0 0.0
    %3903 = vmatpush1.msra.mxu0 %v3866
    %3904 = vmatprep.subr.mxu0 0.0
    %3905 = vmatpush1.msra.mxu0 %v3867
    %3906 = vmatprep.subr.mxu0 0.0
    %3907 = vmatpush1.msra.mxu0 %v3868
    %3908 = vmatprep.subr.mxu0 0.0
    %3909 = vmatpush1.msra.mxu0 0.0
    %3910 = vmatprep.subr.mxu0 0.0
    %3911 = vmatpush1.msra.mxu0 0.0
    %3912 = vmatprep.subr.mxu0 0.0
    %3913 = vmatpush1.msra.mxu0 0.0
    %3914 = vmatprep.subr.mxu0 0.0
    %3915 = vmatpush1.msra.mxu0 0.0
    %3916 = vmatprep.subr.mxu0 0.0
    %3917 = vmatpush1.msra.mxu0 0.0
    %3918 = vmatprep.subr.mxu0 0.0
    %3919 = vmatpush1.msra.mxu0 0.0
    %3920 = vmatprep.subr.mxu0 0.0
    %3921 = vmatpush1.msra.mxu0 0.0
    %3922 = vmatprep.subr.mxu0 0.0
    %3923 = vmatpush1.msra.mxu0 0.0
    %3924 = vmatprep.subr.mxu0 0.0
    %3925 = vmatpush1.msra.mxu0 0.0
    %3926 = vmatprep.subr.mxu0 0.0
    %3927 = vmatpush1.msra.mxu0 0.0
    %3928 = vmatprep.subr.mxu0 0.0
    %3929 = vmatpush1.msra.mxu0 0.0
    %3930 = vmatprep.subr.mxu0 0.0
    %3931 = vmatpush1.msra.mxu0 0.0
    %3932 = vmatprep.subr.mxu0 0.0
    %3933 = vmatpush1.msra.mxu0 0.0
    %3934 = vmatprep.subr.mxu0 0.0
    %3935 = vmatpush1.msra.mxu0 0.0
    %3936 = vmatprep.subr.mxu0 0.0
    %3937 = vmatpush1.msra.mxu0 0.0
    %3938 = vmatprep.subr.mxu0 0.0
    %3939 = vmatpush1.msra.mxu0 0.0
    %3940 = vmatprep.mubr.f32.mxu0 0.0
    %3941 = vmatmul.mubr.f32.gmra.mrb[0].mxu0 %v3775
    %v3942 = vpop.f32.mrb[0].mxu0
    %v3943 = vadd.f32 %v3874, %v3942
    %v3944 = vpop.f32.mrb[0].mxu0
    %3945 = vmatprep.mubr.f32.mxu0 0.0
    %3946 = vmatmul.mubr.f32.gmra.mrb[0].mxu0 %v3780
    %v3947 = vpop.f32.mrb[0].mxu0
    %v3948 = vadd.f32 %v3874, %v3947
    %v3949 = vpop.f32.mrb[0].mxu0
    %3950 = vmatprep.mubr.f32.mxu0 0.0
    %3951 = vmatmul.mubr.f32.gmra.mrb[0].mxu0 %v3785
    %v3952 = vpop.f32.mrb[0].mxu0
    %v3953 = vadd.f32 %v3874, %v3952
    %v3954 = vpop.f32.mrb[0].mxu0
    %3955 = vmatprep.mubr.f32.mxu0 0.0
    %3956 = vmatmul.mubr.f32.gmra.mrb[0].mxu0 %v3790
    %v3957 = vpop.f32.mrb[0].mxu0
    %v3958 = vadd.f32 %v3874, %v3957
    %v3959 = vpop.f32.mrb[0].mxu0
    %3960 = vmatprep.mubr.f32.mxu0 0.0
    %3961 = vmatmul.mubr.f32.gmra.mrb[0].mxu0 %v3795
    %v3962 = vpop.f32.mrb[0].mxu0
    %v3963 = vadd.f32 %v3874, %v3962
    %v3964 = vpop.f32.mrb[0].mxu0
    %3965 = vmatprep.mubr.f32.mxu0 0.0
    %3966 = vmatmul.mubr.f32.gmra.mrb[0].mxu0 %v3800
    %v3967 = vpop.f32.mrb[0].mxu0
    %v3968 = vadd.f32 %v3874, %v3967
    %v3969 = vpop.f32.mrb[0].mxu0
    %3970 = vmatprep.mubr.f32.mxu0 0.0
    %3971 = vmatmul.mubr.f32.gmra.mrb[0].mxu0 %v3805
    %v3972 = vpop.f32.mrb[0].mxu0
    %v3973 = vadd.f32 %v3874, %v3972
    %v3974 = vpop.f32.mrb[0].mxu0
    %3975 = vmatprep.mubr.f32.mxu0 0.0
    %3976 = vmatmul.mubr.f32.gmra.mrb[0].mxu0 %v3810
    %v3977 = vpop.f32.mrb[0].mxu0
    %v3978 = vadd.f32 %v3874, %v3977
    %v3979 = vpop.f32.mrb[0].mxu0
    %3980 = vmatprep.mubr.f32.mxu0 0.0
    %3981 = vmatmul.mubr.f32.gmra.mrb[0].mxu0 %v3815
    %v3982 = vpop.f32.mrb[0].mxu0
    %v3983 = vadd.f32 %v3874, %v3982
    %v3984 = vpop.f32.mrb[0].mxu0
    %3985 = vmatprep.mubr.f32.mxu0 0.0
    %3986 = vmatmul.mubr.f32.gmra.mrb[0].mxu0 %v3820
    %v3987 = vpop.f32.mrb[0].mxu0
    %v3988 = vadd.f32 %v3874, %v3987
    %v3989 = vpop.f32.mrb[0].mxu0
    %3990 = vmatprep.mubr.f32.mxu0 0.0
    %3991 = vmatmul.mubr.f32.gmra.mrb[0].mxu0 %v3825
    %v3992 = vpop.f32.mrb[0].mxu0
    %v3993 = vadd.f32 %v3874, %v3992
    %v3994 = vpop.f32.mrb[0].mxu0
    %3995 = vmatprep.mubr.f32.mxu0 0.0
    %3996 = vmatmul.mubr.f32.gmra.mrb[0].mxu0 %v3830
    %v3997 = vpop.f32.mrb[0].mxu0
    %v3998 = vadd.f32 %v3874, %v3997
    %v3999 = vpop.f32.mrb[0].mxu0
    %4000 = vmatprep.mubr.f32.mxu0 0.0
    %4001 = vmatmul.mubr.f32.gmra.mrb[0].mxu0 %v3835
    %v4002 = vpop.f32.mrb[0].mxu0
    %v4003 = vadd.f32 %v3874, %v4002
    %v4004 = vpop.f32.mrb[0].mxu0
    %4005 = vmatprep.mubr.f32.mxu0 0.0
    %4006 = vmatmul.mubr.f32.gmra.mrb[0].mxu0 %v3840
    %v4007 = vpop.f32.mrb[0].mxu0
    %v4008 = vadd.f32 %v3874, %v4007
    %v4009 = vpop.f32.mrb[0].mxu0
    %4010 = vmatprep.mubr.f32.mxu0 0.0
    %4011 = vmatmul.mubr.f32.gmra.mrb[0].mxu0 %v3845
    %v4012 = vpop.f32.mrb[0].mxu0
    %v4013 = vadd.f32 %v3874, %v4012
    %v4014 = vpop.f32.mrb[0].mxu0
    %4015 = vmatprep.mubr.f32.mxu0 0.0
    %4016 = vmatmul.mubr.f32.gmra.mrb[0].mxu0 %v3850
    %v4017 = vpop.f32.mrb[0].mxu0
    %v4018 = vadd.f32 %v3874, %v4017
    %v4019 = vpop.f32.mrb[0].mxu0
    %4020 = vdwg.mxu0
    %4021 = vst [vmem:[#allocation16] sm:$0xff] %v3943
    %4022 = vst [vmem:[#allocation16 + $0x8] sm:$0xff] %v3948
    %4023 = vst [vmem:[#allocation16 + $0x10] sm:$0xff] %v3953
    %4024 = vst [vmem:[#allocation16 + $0x18] sm:$0xff] %v3958
    %4025 = vst [vmem:[#allocation16 + $0x20] sm:$0xff] %v3963
    %4026 = vst [vmem:[#allocation16 + $0x28] sm:$0xff] %v3968
    %4027 = vst [vmem:[#allocation16 + $0x30] sm:$0xff] %v3973
    %4028 = vst [vmem:[#allocation16 + $0x38] sm:$0xff] %v3978
    %4029 = vst [vmem:[#allocation16 + $0x40] sm:$0xff] %v3983
    %4030 = vst [vmem:[#allocation16 + $0x48] sm:$0xff] %v3988
    %4031 = vst [vmem:[#allocation16 + $0x50] sm:$0xff] %v3993
    %4032 = vst [vmem:[#allocation16 + $0x58] sm:$0xff] %v3998
    %4033 = vst [vmem:[#allocation16 + $0x60] sm:$0xff] %v4003
    %4034 = vst [vmem:[#allocation16 + $0x68] sm:$0xff] %v4008
    %4035 = vst [vmem:[#allocation16 + $0x70] sm:$0xff] %v4013
    %4036 = vst [vmem:[#allocation16 + $0x78] sm:$0xff] %v4018
    // Predicated region
    $region82: #{tpu_custom_call.1} parent=1 // pred_check
      _
    $region83: #{tpu_custom_call.1} parent=1 // pred_check_branch
      %4038 = sbr.rel (0) target = $region85
    $region84: #{tpu_custom_call.1} parent=1 // pred_region
      %s4040 = ssub.s32 2048, 2048
      %4041 = vsyncadd [#allocation4], %s4040
      %s4042 = sshll.u32 [#allocation16], 4
      %s4043 = int_to_ptr.vmem [resolvable:$true] %s4042
      %4048 = dma.vmem_to_hbm [thread:$0]  %s4043, 2048, %s12, [#allocation4], 128, 128, 8
    $region85: #{tpu_custom_call.1} parent=1 // pred_fallthru
      _
    // Predicated region
    $region86: #{tpu_custom_call.1} parent=1 // pred_check
      _
    $region87: #{tpu_custom_call.1} parent=1 // pred_check_branch
      %4050 = sbr.rel (0) target = $region89
    $region88: #{tpu_custom_call.1} parent=1 // pred_region
      %4051 = dma.done [#allocation4], 2048
    $region89: #{tpu_custom_call.1} parent=1 // pred_fallthru
      _
    %4052 = vsyncpa [#allocation3], 1
    %4053 = vsyncpa [#allocation6], 1
    %4054 = vsyncpa [#allocation9], 1
    %4055 = vsyncpa [#allocation12], 1
    %4056 = vsyncpa [#allocation15], 1
    %4057 = vsyncpa [#allocation4], 1

</llo_original>
